<compile_context>
chip_gen: v6e
topology: v6e:2x2x1
jax: 0.10.0
libtpu: 0.0.40
codegen_flags: <defaults>
</compile_context>

<pallas_src>
import functools

import jax
import jax.numpy as jnp
from jax.experimental import pallas as pl
from jax.experimental.pallas import tpu as pltpu

POPCNT_WIDTH = 128
LN_EPS = 1e-12


# --------------------------- activation ---------------------------

def _sigmoid_kernel(x):
    # EUP exp + approx reciprocal: both live in slots the mem-bound kernel has free.
    return pl.reciprocal(1.0 + jnp.exp(-x), approx=True)


def _resilu_kernel(x, hardness):
    # TODO(synk): exact ReSiLU definition not provided in the source; implemented as a
    # hardness interpolation between sigmoid (soft) and Heaviside step (hard).
    if hardness == 0.0:           # trace-time specialization: don't emit dead branches
        return _sigmoid_kernel(x)
    if hardness == 1.0:
        return (x > 0.0).astype(x.dtype)
    return ((1.0 - hardness) * _sigmoid_kernel(x)
            + hardness * (x > 0.0).astype(x.dtype))


def _resilu_host(x, hardness):
    # Plain-JAX version used only at parameter-setup time (weight_activation).
    soft = jax.nn.sigmoid(x)
    hard = (x > 0.0).astype(x.dtype)
    return (1.0 - hardness) * soft + hardness * hard


# --------------------------- Pallas kernel ---------------------------

def _popcnt_layer_kernel(*refs, hardness, ln_eps, fuse_ln, group_size):
    if fuse_ln:
        x_ref, w_ref, s_ref, b_ref, g_ref, bt_ref, o_ref = refs
    else:
        x_ref, w_ref, s_ref, b_ref, o_ref = refs

    x = x_ref[...]                                   # (B, K) f32, resident
    if fuse_ln:
        # Fused LayerNorm of the resident activations (recomputed per grid step;
        # tiny VPU/XLU work that hides under the weight-tile DMA).
        mean = jnp.mean(x, axis=-1, keepdims=True)
        d = x - mean
        var = jnp.mean(d * d, axis=-1, keepdims=True)  # biased variance, like torch LN
        x = d * jax.lax.rsqrt(var + ln_eps) * g_ref[...] + bt_ref[...]

    xb = x.astype(jnp.bfloat16)
    w = w_ref[0].astype(jnp.bfloat16)                # int8 -> bf16 dequant (scale folded below)
    acc = jnp.dot(xb, w, preferred_element_type=jnp.float32)
    z = acc * s_ref[...] - b_ref[...]                # per-column dequant scale + bias
    act = _resilu_kernel(z, hardness)

    if group_size is None:
        o_ref[...] = act                             # (B, tn)
    else:
        # Fused final grouped reduction: tn is a multiple of group_size, so every
        # 16-wide group is tile-local.  Lane-dense 0/1 selector matmul built in-kernel.
        tn = act.shape[-1]
        g = tn // group_size
        rows = jax.lax.broadcasted_iota(jnp.int32, (tn, g), 0) // group_size
        cols = jax.lax.broadcasted_iota(jnp.int32, (tn, g), 1)
        sel = (rows == cols).astype(jnp.float32)
        grouped = jnp.dot(act, sel, preferred_element_type=jnp.float32) - 8.0
        o_ref[...] = grouped[None]                   # (1, B, tn // group_size)


def popcnt_layer(x, w_tiled, scale, bias, *, hardness, gamma=None, beta=None,
                 ln_eps=LN_EPS, group_size=None, tn=512):
    B, K = x.shape
    n_tiles, k_w, tn_w = w_tiled.shape
    assert k_w == K and tn_w == tn
    N = n_tiles * tn
    fuse_ln = gamma is not None

    in_specs = [
        pl.BlockSpec((B, K), lambda j: (0, 0)),          # full-K activations, resident
        pl.BlockSpec((1, K, tn), lambda j: (j, 0, 0)),   # contiguous pre-tiled int8 weights
        pl.BlockSpec((1, tn), lambda j: (0, j)),         # per-column dequant scale
        pl.BlockSpec((1, tn), lambda j: (0, j)),         # bias
    ]
    args = [x, w_tiled, scale, bias]
    if fuse_ln:
        in_specs += [pl.BlockSpec((1, K), lambda j: (0, 0)),
                     pl.BlockSpec((1, K), lambda j: (0, 0))]
        args += [gamma, beta]

    if group_size is None:
        out_shape = jax.ShapeDtypeStruct((B, N), jnp.float32)
        out_specs = pl.BlockSpec((B, tn), lambda j: (0, j))
    else:
        g = tn // group_size
        # (n_tiles, B, g) layout keeps the output block's last two dims full-extent.
        out_shape = jax.ShapeDtypeStruct((n_tiles, B, g), jnp.float32)
        out_specs = pl.BlockSpec((1, B, g), lambda j: (j, 0, 0))

    # Actual VMEM need: double-buffered int8 weight tiles + in-kernel bf16 dequant
    # temporary + resident activations + gamma/beta + small scale/bias/output tiles,
    # plus headroom for compiler scratch.
    vmem_bytes = int(
        2 * K * tn * w_tiled.dtype.itemsize        # weight tiles (double-buffered)
        + K * tn * 2                               # dequantized bf16 weight temporary
        + 2 * B * K * 4                            # resident activations
        + (4 * K * 4 if fuse_ln else 0)            # gamma/beta
        + 2 * 2 * tn * 4                           # scale + bias tiles
        + 2 * B * tn * 4                           # output tiles
        + (8 << 20)                                # headroom / compiler scratch
    )

    kernel = functools.partial(_popcnt_layer_kernel, hardness=hardness, ln_eps=ln_eps,
                               fuse_ln=fuse_ln, group_size=group_size)
    out = pl.pallas_call(
        kernel,
        out_shape=out_shape,
        grid=(n_tiles,),
        in_specs=in_specs,
        out_specs=out_specs,
        compiler_params=pltpu.CompilerParams(
            dimension_semantics=("parallel",),     # output-column axis -> both v7x TCs
            vmem_limit_bytes=vmem_bytes,
        ),
    )(*args)

    if group_size is None:
        return out
    # (n_tiles, B, g) -> (B, n_tiles * g); tiny XLA reshape on a few KB.
    return jnp.transpose(out, (1, 0, 2)).reshape(B, N // group_size)


# --------------------------- Parameter setup (plain JAX glue) ---------------------------

def _init_popcnt_layer(key, input_width, output_width, hardness, tn):
    k_sel, k_w, k_b = jax.random.split(key, 3)
    sel = jax.random.randint(
        k_sel, (output_width, POPCNT_WIDTH), 0, input_width, dtype=jnp.int32)
    w = jax.random.normal(k_w, (output_width, POPCNT_WIDTH), jnp.float32)
    b = (jax.random.normal(k_b, (output_width,), jnp.float32)
         * (POPCNT_WIDTH / 3.0) + POPCNT_WIDTH / 4.0)
    # weight_activation is applied to parameters only (not data), so bake it in.
    wa = _resilu_host(w, hardness)
    # Fold the fixed gather into a dense (input_width, output_width) matrix:
    #   M[sel[o, p], o] += wa[o, p]  =>  sum_p x[b, sel[o,p]] * wa[o,p] == (x @ M)[b, o]
    rows = sel.reshape(-1)
    cols = jnp.repeat(jnp.arange(output_width, dtype=jnp.int32), POPCNT_WIDTH)
    dense = jnp.zeros((input_width, output_width), jnp.float32)
    dense = dense.at[rows, cols].add(wa.reshape(-1))

    # Per-column int8 quantization (all values are >= 0 sums of sigmoids).
    col_max = jnp.maximum(jnp.max(dense, axis=0), 1e-6)
    scale = (col_max / 127.0).reshape(1, output_width).astype(jnp.float32)
    q = jnp.clip(jnp.round(dense / scale), 0.0, 127.0).astype(jnp.int8)

    # Pre-tile to (N//tn, K, tn): each grid step's weight tile is one contiguous DMA.
    n_tiles = output_width // tn
    q_tiled = q.reshape(input_width, n_tiles, tn).transpose(1, 0, 2)

    return {"w": q_tiled, "scale": scale, "bias": b.reshape(1, output_width)}


def init_popcnt_params(key, hardness, tn=512):
    dims = [(128 * 5 * 5, 128 * 64), (128 * 64, 128 * 64), (128 * 64, 64 * 64)]
    keys = jax.random.split(key, len(dims))
    params = {
        "layers": [_init_popcnt_layer(k, i, o, hardness, tn)
                   for k, (i, o) in zip(keys, dims)]
    }
    n_ln = 128 * 64
    params["ln"] = [
        {"gamma": jnp.ones((1, n_ln), jnp.float32),
         "beta": jnp.zeros((1, n_ln), jnp.float32)}
        for _ in range(2)
    ]
    return params


def popcnt_forward(x, params, *, hardness, tn=512):
    l = params["layers"]
    ln = params["ln"]
    # Layer 1 (no preceding LayerNorm).
    x = popcnt_layer(x, l[0]["w"], l[0]["scale"], l[0]["bias"],
                     hardness=hardness, tn=tn)
    # LayerNorm fused into layer 2.
    x = popcnt_layer(x, l[1]["w"], l[1]["scale"], l[1]["bias"],
                     hardness=hardness, gamma=ln[0]["gamma"], beta=ln[0]["beta"], tn=tn)
    # LayerNorm fused into layer 3; final view(B, 256, 16).sum(-1) - 8 fused as epilogue.
    x = popcnt_layer(x, l[2]["w"], l[2]["scale"], l[2]["bias"],
                     hardness=hardness, gamma=ln[1]["gamma"], beta=ln[1]["beta"],
                     group_size=16, tn=tn)
    return x


if __name__ == "__main__":
    key = jax.random.PRNGKey(0)
    k_x, k_p = jax.random.split(key)
    hardness = 0.0

    # Module hardcodes first layer input width 128*5*5 = 3200; use batch=2.
    x = jax.random.normal(k_x, (2, 128 * 5 * 5), jnp.float32)
    params = init_popcnt_params(k_p, hardness)

    out = popcnt_forward(x, params, hardness=hardness)
    out = jax.block_until_ready(out)
    assert out.shape == (2, 4 * 64), out.shape
    assert out.dtype == jnp.float32
    print("KERNEL_OK")
</pallas_src>

<mosaic_0001>
module attributes {stable_mosaic.version = 11 : i64} {
  func.func @_popcnt_layer_kernel(%arg0: i32, %arg1: memref<2x3200xf32, #tpu.memory_space<vmem>>, %arg2: memref<1x3200x512xi8, #tpu.memory_space<vmem>>, %arg3: memref<1x512xf32, #tpu.memory_space<vmem>>, %arg4: memref<1x512xf32, #tpu.memory_space<vmem>>, %arg5: memref<2x512xf32, #tpu.memory_space<vmem>>) attributes {dimension_semantics = [#tpu.dimension_semantics<parallel>], iteration_bounds = array<i64: 16>, scalar_prefetch = 0 : i64, scratch_operands = 0 : i64, tpu.core_type = #tpu.core_type<tc>, window_params = [{pipeline_mode = #tpu.pipeline_mode<synchronous>, transform_indices = @transform_0, window_bounds = array<i64: 2, 3200>}, {transform_indices = @transform_1, window_bounds = array<i64: 1, 3200, 512>}, {transform_indices = @transform_2, window_bounds = array<i64: 1, 512>}, {transform_indices = @transform_3, window_bounds = array<i64: 1, 512>}, {transform_indices = @transform_4, window_bounds = array<i64: 2, 512>}]} {
    %c0 = arith.constant 0 : index
    %c0_0 = arith.constant 0 : index
    %0 = vector.load %arg1[%c0, %c0_0] : memref<2x3200xf32, #tpu.memory_space<vmem>>, vector<2x3200xf32>
    %1 = arith.truncf %0 : vector<2x3200xf32> to vector<2x3200xbf16>
    %c0_1 = arith.constant 0 : index
    %c0_2 = arith.constant 0 : index
    %c0_3 = arith.constant 0 : index
    %2 = vector.load %arg2[%c0_1, %c0_2, %c0_3] : memref<1x3200x512xi8, #tpu.memory_space<vmem>>, vector<1x3200x512xi8>
    %3 = vector.shape_cast %2 : vector<1x3200x512xi8> to vector<3200x512xi8>
    %4 = arith.sitofp %3 : vector<3200x512xi8> to vector<3200x512xbf16>
    %cst = arith.constant dense<0.000000e+00> : vector<2x512xf32>
    %5 = tpu.matmul %1, %4, %cst {dimension_numbers = #tpu.dot_dimension_numbers<[1], [0], [0], [1], [0, 0, 1, 1], [], []>} : vector<2x3200xbf16>, vector<3200x512xbf16>, vector<2x512xf32> -> vector<2x512xf32>
    %c0_4 = arith.constant 0 : index
    %c0_5 = arith.constant 0 : index
    %6 = vector.load %arg3[%c0_4, %c0_5] : memref<1x512xf32, #tpu.memory_space<vmem>>, vector<1x512xf32>
    %7 = vector.broadcast %6 : vector<1x512xf32> to vector<2x512xf32>
    %8 = arith.mulf %5, %7 : vector<2x512xf32>
    %c0_6 = arith.constant 0 : index
    %c0_7 = arith.constant 0 : index
    %9 = vector.load %arg4[%c0_6, %c0_7] : memref<1x512xf32, #tpu.memory_space<vmem>>, vector<1x512xf32>
    %10 = vector.broadcast %9 : vector<1x512xf32> to vector<2x512xf32>
    %11 = arith.subf %8, %10 : vector<2x512xf32>
    %cst_8 = arith.constant 0.000000e+00 : f32
    %12 = vector.broadcast %cst_8 : f32 to vector<2x512xf32>
    %13 = arith.subf %12, %11 : vector<2x512xf32>
    %14 = math.exp %13 : vector<2x512xf32>
    %cst_9 = arith.constant 1.000000e+00 : f32
    %15 = vector.broadcast %cst_9 : f32 to vector<2x512xf32>
    %16 = arith.addf %15, %14 : vector<2x512xf32>
    %17 = tpu.reciprocal %16 {approx = true} : vector<2x512xf32> -> vector<2x512xf32>
    %c0_10 = arith.constant 0 : index
    %c0_11 = arith.constant 0 : index
    %18 = vector.load %arg5[%c0_10, %c0_11] : memref<2x512xf32, #tpu.memory_space<vmem>>, vector<2x512xf32>
    tpu.vector_store %arg5[%c0_10, %c0_11], %17 {strides = array<i32>} : memref<2x512xf32, #tpu.memory_space<vmem>>, vector<2x512xf32>,
    return
  }
  func.func @transform_0(%arg0: i32) -> (i32, i32) {
    %c0_i32 = arith.constant 0 : i32
    %c0_i32_0 = arith.constant 0 : i32
    %c0_i32_1 = arith.constant 0 : i32
    return %c0_i32, %c0_i32_0 : i32, i32
  }
  func.func @transform_1(%arg0: i32) -> (i32, i32, i32) {
    %c0_i32 = arith.constant 0 : i32
    %c0_i32_0 = arith.constant 0 : i32
    %c0_i32_1 = arith.constant 0 : i32
    return %arg0, %c0_i32, %c0_i32_0 : i32, i32, i32
  }
  func.func @transform_2(%arg0: i32) -> (i32, i32) {
    %c0_i32 = arith.constant 0 : i32
    %c0_i32_0 = arith.constant 0 : i32
    return %c0_i32, %arg0 : i32, i32
  }
  func.func @transform_3(%arg0: i32) -> (i32, i32) {
    %c0_i32 = arith.constant 0 : i32
    %c0_i32_0 = arith.constant 0 : i32
    return %c0_i32, %arg0 : i32, i32
  }
  func.func @transform_4(%arg0: i32) -> (i32, i32) {
    %c0_i32 = arith.constant 0 : i32
    %c0_i32_0 = arith.constant 0 : i32
    return %c0_i32, %arg0 : i32, i32
  }
}

</mosaic_0001>

<llo_original>
// kernel: tpu_custom_call.1
$region0: #{tpu_custom_call.1}
  #allocation0 [shape = 'u32[]', space=smem, size = 0x4, offset = 0x4, fixed_abs, tag = 'smem constant byte address 0x4 - core index']
  #allocation1 [shape = 'u32[144,128]{1,0:T(1,128)}', space=vmem, size = 0x12000, scoped, tag = 'internal scratch']
  %s0 = inlined_call_operand.hbm [shape: f32[2,3200], index: 0, kind: input, shape index: {}]
  %s1 = inlined_call_operand.hbm [shape: s8[16,3200,512], index: 1, kind: input, shape index: {}]
  %s2 = inlined_call_operand.hbm [shape: f32[1,8192], index: 2, kind: input, shape index: {}]
  %s3 = inlined_call_operand.hbm [shape: f32[1,8192], index: 3, kind: input, shape index: {}]
  %s4 = inlined_call_operand.hbm [shape: f32[2,8192], index: 4, kind: output, shape index: {}]
  %s5 = sld [smem:[#allocation0]]
  $region65: #{tpu_custom_call.1} parent=0
    _
  %s7 = ssub.s32 1, %s5
  %s8 = scalar_select 0, %s7, %s5
  $region1: #{tpu_custom_call.1} parent=0
    #allocation2 [shape = 'u8[25600]{0}', space=vmem, size = 0x6400, scoped, tag = 'input window, operand 0, single buffered']
    #allocation3 [shape = 's32[2]{0}', space=sflag, size = 0x8, scoped, tag = 'scoped memory for tpu_custom_call.1']
    #allocation4 [shape = 's32[2]{0}', space=sflag, size = 0x8, scoped, tag = 'scoped memory for tpu_custom_call.1']
    #allocation5 [shape = 'u8[3276800]{0}', space=vmem, size = 0x320000, scoped, tag = 'input window, operand 1']
    #allocation6 [shape = 's32[2]{0}', space=sflag, size = 0x8, scoped, tag = 'scoped memory for tpu_custom_call.1']
    #allocation7 [shape = 'u8[4096]{0}', space=vmem, size = 0x1000, scoped, tag = 'input window, operand 2']
    #allocation8 [shape = 'u8[4096]{0}', space=vmem, size = 0x1000, scoped, tag = 'input window, operand 3']
    #allocation9 [shape = 's32[2]{0}', space=sflag, size = 0x8, scoped, tag = 'scoped memory for tpu_custom_call.1']
    #allocation10 [shape = 'u8[8192]{0}', space=vmem, size = 0x2000, scoped, tag = 'output window, operand 0']
    %9 = vsyncpa [#allocation3], 0
    %10 = vsyncpa [#allocation6], 0
    %s11 = scalar_lea.sflag [#allocation6], 1
    %12 = vsyncpa %s11, 0
    %13 = vsyncpa [#allocation9], 0
    %s14 = scalar_lea.sflag [#allocation9], 1
    %15 = vsyncpa %s14, 0
    %16 = vsyncpa [#allocation4], 0
    %s17 = scalar_lea.sflag [#allocation4], 1
    %18 = vsyncpa %s17, 0
    loop: start=0, step=1, limit=18
    $region2: #{tpu_custom_call.1} parent=1 // loop_pre_header
      _
    $region3: #{tpu_custom_call.1} parent=1 // loop_header
      %s20 = sphi 0, %s24
      %p21 = scmp.ge.s32.totalorder %s20, 18
      %s28 = sphi 0, %s28
      %s30 = sphi 0, %s28
      %s31 = sphi 0, %s30
      %s45 = sphi 0, %s31
      %s51 = sphi 0, %s53
      %s54 = sphi 0, %s51
      %s55 = sphi 0, %s54
      %s71 = sphi 0, %s55
      %s77 = sphi 0, %s79
      %s80 = sphi 0, %s77
      %s81 = sphi 0, %s80
      %s97 = sphi 0, %s81
      %s103 = sphi 0, %s105
      %s106 = sphi 0, %s103
      %s107 = sphi 0, %s106
      %s123 = sphi 0, %s107
      %s129 = sphi 0, %s131
      %s132 = sphi 0, %s129
      %s133 = sphi 0, %s132
      %s149 = sphi 0, %s133
    $region4: #{tpu_custom_call.1} parent=1 // loop_header_branch
      %23 = sbr.rel (%p21) target = $region8
    $region5: #{tpu_custom_call.1} parent=1 // loop_body
      %s25 = ssub.s32 %s20, 1
      %s26 = ssub.s32 %s20, 2
      %s27 = sadd.s32 %s20, 1
      %s29 = sadd.s32 %s28, 1
      %p32 = scmp.eq.s32.totalorder %s20, 15
      %p33 = scmp.ne.s32.totalorder %s28, %s30
      %p34 = scmp.eq.s32.totalorder %s20, 0
      %p35 = por %p33, %p34
      %p36 = scmp.ne.s32.totalorder %s28, %s30
      %p37 = scmp.eq.s32.totalorder %s25, 15
      %p38 = por %p36, %p37
      %p39 = scmp.ne.s32.totalorder %s30, %s31
      %p40 = scmp.eq.s32.totalorder %s25, 0
      %p41 = por %p39, %p40
      %p42 = scmp.ne.s32.totalorder %s30, %s31
      %p43 = scmp.eq.s32.totalorder %s26, 15
      %p44 = por %p42, %p43
      %p46 = scmp.ne.s32.totalorder %s31, %s45
      %p47 = scmp.eq.s32.totalorder %s26, 0
      %p48 = por %p46, %p47
      %s49 = ssub.s32 %s20, %s27
      %p50 = scmp.eq.s32.totalorder %s49, 0
      %s52 = sadd.s32 %s51, 1
      %s53 = scalar_select %p50, %s51, %s52
      %p56 = pneg %p50
      %p57 = scmp.eq.s32.totalorder %s20, 15
      %p58 = por %p56, %p57
      %p59 = scmp.ne.s32.totalorder %s51, %s54
      %p60 = scmp.eq.s32.totalorder %s20, 0
      %p61 = por %p59, %p60
      %p62 = scmp.ne.s32.totalorder %s51, %s54
      %p63 = scmp.eq.s32.totalorder %s25, 15
      %p64 = por %p62, %p63
      %p65 = scmp.ne.s32.totalorder %s54, %s55
      %p66 = scmp.eq.s32.totalorder %s25, 0
      %p67 = por %p65, %p66
      %p68 = scmp.ne.s32.totalorder %s54, %s55
      %p69 = scmp.eq.s32.totalorder %s26, 15
      %p70 = por %p68, %p69
      %p72 = scmp.ne.s32.totalorder %s55, %s71
      %p73 = scmp.eq.s32.totalorder %s26, 0
      %p74 = por %p72, %p73
      %s75 = ssub.s32 %s20, %s27
      %p76 = scmp.eq.s32.totalorder %s75, 0
      %s78 = sadd.s32 %s77, 1
      %s79 = scalar_select %p76, %s77, %s78
      %p82 = pneg %p76
      %p83 = scmp.eq.s32.totalorder %s20, 15
      %p84 = por %p82, %p83
      %p85 = scmp.ne.s32.totalorder %s77, %s80
      %p86 = scmp.eq.s32.totalorder %s20, 0
      %p87 = por %p85, %p86
      %p88 = scmp.ne.s32.totalorder %s77, %s80
      %p89 = scmp.eq.s32.totalorder %s25, 15
      %p90 = por %p88, %p89
      %p91 = scmp.ne.s32.totalorder %s80, %s81
      %p92 = scmp.eq.s32.totalorder %s25, 0
      %p93 = por %p91, %p92
      %p94 = scmp.ne.s32.totalorder %s80, %s81
      %p95 = scmp.eq.s32.totalorder %s26, 15
      %p96 = por %p94, %p95
      %p98 = scmp.ne.s32.totalorder %s81, %s97
      %p99 = scmp.eq.s32.totalorder %s26, 0
      %p100 = por %p98, %p99
      %s101 = ssub.s32 %s20, %s27
      %p102 = scmp.eq.s32.totalorder %s101, 0
      %s104 = sadd.s32 %s103, 1
      %s105 = scalar_select %p102, %s103, %s104
      %p108 = pneg %p102
      %p109 = scmp.eq.s32.totalorder %s20, 15
      %p110 = por %p108, %p109
      %p111 = scmp.ne.s32.totalorder %s103, %s106
      %p112 = scmp.eq.s32.totalorder %s20, 0
      %p113 = por %p111, %p112
      %p114 = scmp.ne.s32.totalorder %s103, %s106
      %p115 = scmp.eq.s32.totalorder %s25, 15
      %p116 = por %p114, %p115
      %p117 = scmp.ne.s32.totalorder %s106, %s107
      %p118 = scmp.eq.s32.totalorder %s25, 0
      %p119 = por %p117, %p118
      %p120 = scmp.ne.s32.totalorder %s106, %s107
      %p121 = scmp.eq.s32.totalorder %s26, 15
      %p122 = por %p120, %p121
      %p124 = scmp.ne.s32.totalorder %s107, %s123
      %p125 = scmp.eq.s32.totalorder %s26, 0
      %p126 = por %p124, %p125
      %s127 = ssub.s32 %s20, %s27
      %p128 = scmp.eq.s32.totalorder %s127, 0
      %s130 = sadd.s32 %s129, 1
      %s131 = scalar_select %p128, %s129, %s130
      %p134 = pneg %p128
      %p135 = scmp.eq.s32.totalorder %s20, 15
      %p136 = por %p134, %p135
      %p137 = scmp.ne.s32.totalorder %s129, %s132
      %p138 = scmp.eq.s32.totalorder %s20, 0
      %p139 = por %p137, %p138
      %p140 = scmp.ne.s32.totalorder %s129, %s132
      %p141 = scmp.eq.s32.totalorder %s25, 15
      %p142 = por %p140, %p141
      %p143 = scmp.ne.s32.totalorder %s132, %s133
      %p144 = scmp.eq.s32.totalorder %s25, 0
      %p145 = por %p143, %p144
      %p146 = scmp.ne.s32.totalorder %s132, %s133
      %p147 = scmp.eq.s32.totalorder %s26, 15
      %p148 = por %p146, %p147
      %p150 = scmp.ne.s32.totalorder %s133, %s149
      %p151 = scmp.eq.s32.totalorder %s26, 0
      %p152 = por %p150, %p151
      %p153 = scmp.le.s32.totalorder 1, %s20
      %p154 = scmp.lt.s32.totalorder %s20, 17
      %p155 = pnand %p153, %p154
      %p156 = pneg %p155
      // Predicated region
      $region9: #{tpu_custom_call.1} parent=5 // pred_check
        _
      $region10: #{tpu_custom_call.1} parent=5 // pred_check_branch
        %158 = sbr.rel (%p155) target = $region12
      $region11: #{tpu_custom_call.1} parent=5 // pred_region
        %s159 = ssub.s32 %s20, 1
        // Predicated region
        $region13: #{tpu_custom_call.1} parent=11 // pred_check
          %p160 = pneg %p41
        $region14: #{tpu_custom_call.1} parent=11 // pred_check_branch
          %162 = sbr.rel (%p160) target = $region16
        $region15: #{tpu_custom_call.1} parent=11 // pred_region
          %s164 = ssub.s32 800, 800
          %165 = vsyncadd [#allocation3], %s164
          %s167 = sshll.u32 [#allocation2], 4
          %s168 = int_to_ptr.vmem [resolvable:$true] %s167
          %170 = dma.hbm_to_vmem [thread:$0]  %s0, 800, %s168, [#allocation3]
        $region16: #{tpu_custom_call.1} parent=11 // pred_fallthru
          _
      $region12: #{tpu_custom_call.1} parent=5 // pred_fallthru
        _
      %p171 = scmp.lt.s32.totalorder %s20, 16
      // Predicated region
      $region17: #{tpu_custom_call.1} parent=5 // pred_check
        %p172 = pneg %p171
      $region18: #{tpu_custom_call.1} parent=5 // pred_check_branch
        %174 = sbr.rel (%p172) target = $region20
      $region19: #{tpu_custom_call.1} parent=5 // pred_region
        // Predicated region
        $region21: #{tpu_custom_call.1} parent=19 // pred_check
          %p175 = pneg %p61
        $region22: #{tpu_custom_call.1} parent=19 // pred_check_branch
          %177 = sbr.rel (%p175) target = $region24
        $region23: #{tpu_custom_call.1} parent=19 // pred_region
          %s178 = sand.u32 %s20, 1
          %s179 = scalar_lea.sflag [#allocation6], %s178
          %s180 = sand.u32 %s51, 1
          %s181 = smul.addr %s180, 3200
          %s182 = scalar_lea.vmem [#allocation5], %s181
          %s184 = ssub.s32 51200, 51200
          %185 = vsyncadd %s179, %s184
          %s186 = smul.addr %s20, 400
          %s187 = smul.addr %s186, 128
          %s188 = scalar_lea.hbm %s1, %s187
          %s189 = sshll.u32 %s182, 4
          %s190 = int_to_ptr.vmem [resolvable:$true] %s189
          %195 = dma.hbm_to_vmem [thread:$0]  %s188, 51200, %s190, %s179, 512, 512, 32
        $region24: #{tpu_custom_call.1} parent=19 // pred_fallthru
          _
        // Predicated region
        $region25: #{tpu_custom_call.1} parent=19 // pred_check
          %p196 = pneg %p87
        $region26: #{tpu_custom_call.1} parent=19 // pred_check_branch
          %198 = sbr.rel (%p196) target = $region28
        $region27: #{tpu_custom_call.1} parent=19 // pred_region
          %s199 = sand.u32 %s20, 1
          %s200 = scalar_lea.sflag [#allocation6], %s199
          %s201 = sand.u32 %s77, 1
          %s202 = smul.addr %s201, 4
          %s203 = scalar_lea.vmem [#allocation7], %s202
          %s204 = smul.u32 4, %s20
          %s206 = ssub.s32 64, 64
          %207 = vsyncadd %s200, %s206
          %s208 = smul.addr %s204, 16
          %s209 = scalar_lea.hbm %s2, %s208
          %s211 = sshll.u32 %s203, 4
          %s212 = int_to_ptr.vmem [resolvable:$true] %s211
          %214 = dma.hbm_to_vmem [thread:$0]  %s209, 64, %s212, %s200
        $region28: #{tpu_custom_call.1} parent=19 // pred_fallthru
          _
        // Predicated region
        $region29: #{tpu_custom_call.1} parent=19 // pred_check
          %p215 = pneg %p113
        $region30: #{tpu_custom_call.1} parent=19 // pred_check_branch
          %217 = sbr.rel (%p215) target = $region32
        $region31: #{tpu_custom_call.1} parent=19 // pred_region
          %s218 = sand.u32 %s103, 1
          %s219 = scalar_lea.sflag [#allocation9], %s218
          %s220 = sand.u32 %s103, 1
          %s221 = smul.addr %s220, 4
          %s222 = scalar_lea.vmem [#allocation8], %s221
          %s223 = smul.u32 4, %s20
          %s225 = ssub.s32 64, 64
          %226 = vsyncadd %s219, %s225
          %s227 = smul.addr %s223, 16
          %s228 = scalar_lea.hbm %s3, %s227
          %s230 = sshll.u32 %s222, 4
          %s231 = int_to_ptr.vmem [resolvable:$true] %s230
          %233 = dma.hbm_to_vmem [thread:$0]  %s228, 64, %s231, %s219
        $region32: #{tpu_custom_call.1} parent=19 // pred_fallthru
          _
      $region20: #{tpu_custom_call.1} parent=5 // pred_fallthru
        _
      %p234 = scmp.le.s32.totalorder 1, %s20
      %p235 = scmp.lt.s32.totalorder %s20, 17
      %p236 = pnand %p234, %p235
      %p237 = pneg %p236
      // Predicated region
      $region33: #{tpu_custom_call.1} parent=5 // pred_check
        _
      $region34: #{tpu_custom_call.1} parent=5 // pred_check_branch
        %239 = sbr.rel (%p236) target = $region36
      $region35: #{tpu_custom_call.1} parent=5 // pred_region
        %s240 = ssub.s32 %s20, 1
        // Predicated region
        $region37: #{tpu_custom_call.1} parent=35 // pred_check
          %p241 = pneg %p41
        $region38: #{tpu_custom_call.1} parent=35 // pred_check_branch
          %243 = sbr.rel (%p241) target = $region40
        $region39: #{tpu_custom_call.1} parent=35 // pred_region
          %244 = dma.done [#allocation3], 800
        $region40: #{tpu_custom_call.1} parent=35 // pred_fallthru
          _
        %s245 = sand.u32 %s25, 1
        %s246 = scalar_lea.sflag [#allocation6], %s245
        %s247 = sand.u32 %s54, 1
        %s248 = smul.addr %s247, 3200
        %s249 = scalar_lea.vmem [#allocation5], %s248
        // Predicated region
        $region41: #{tpu_custom_call.1} parent=35 // pred_check
          %p250 = pneg %p67
        $region42: #{tpu_custom_call.1} parent=35 // pred_check_branch
          %252 = sbr.rel (%p250) target = $region44
        $region43: #{tpu_custom_call.1} parent=35 // pred_region
          %253 = dma.done %s246, 51200
        $region44: #{tpu_custom_call.1} parent=35 // pred_fallthru
          _
        %s254 = sand.u32 %s25, 1
        %s255 = scalar_lea.sflag [#allocation6], %s254
        %s256 = sand.u32 %s80, 1
        %s257 = smul.addr %s256, 4
        %s258 = scalar_lea.vmem [#allocation7], %s257
        // Predicated region
        $region45: #{tpu_custom_call.1} parent=35 // pred_check
          %p259 = pneg %p93
        $region46: #{tpu_custom_call.1} parent=35 // pred_check_branch
          %261 = sbr.rel (%p259) target = $region48
        $region47: #{tpu_custom_call.1} parent=35 // pred_region
          %262 = dma.done %s255, 64
        $region48: #{tpu_custom_call.1} parent=35 // pred_fallthru
          _
        %s263 = sand.u32 %s106, 1
        %s264 = scalar_lea.sflag [#allocation9], %s263
        %s265 = sand.u32 %s106, 1
        %s266 = smul.addr %s265, 4
        %s267 = scalar_lea.vmem [#allocation8], %s266
        // Predicated region
        $region49: #{tpu_custom_call.1} parent=35 // pred_check
          %p268 = pneg %p119
        $region50: #{tpu_custom_call.1} parent=35 // pred_check_branch
          %270 = sbr.rel (%p268) target = $region52
        $region51: #{tpu_custom_call.1} parent=35 // pred_region
          %271 = dma.done %s264, 64
        $region52: #{tpu_custom_call.1} parent=35 // pred_fallthru
          _
        %p272 = pneg %p41
        %p273 = pneg %p38
        %s274 = sand.u32 %s25, 1
        %s275 = scalar_lea.sflag [#allocation6], %s274
        %s276 = sand.u32 %s54, 1
        %s277 = smul.addr %s276, 3200
        %s278 = scalar_lea.vmem [#allocation5], %s277
        %p279 = pneg %p67
        %p280 = pneg %p64
        %s281 = sand.u32 %s25, 1
        %s282 = scalar_lea.sflag [#allocation6], %s281
        %s283 = sand.u32 %s80, 1
        %s284 = smul.addr %s283, 4
        %s285 = scalar_lea.vmem [#allocation7], %s284
        %p286 = pneg %p93
        %p287 = pneg %p90
        %s288 = sand.u32 %s106, 1
        %s289 = scalar_lea.sflag [#allocation9], %s288
        %s290 = sand.u32 %s106, 1
        %s291 = smul.addr %s290, 4
        %s292 = scalar_lea.vmem [#allocation8], %s291
        %p293 = pneg %p119
        %p294 = pneg %p116
        %p295 = pneg %p145
        %p296 = pneg %p142
        %s297 = sand.u32 %s132, 1
        %s298 = scalar_lea.sflag [#allocation4], %s297
        %s299 = sand.u32 %s132, 1
        %s300 = smul.addr %s299, 8
        %s301 = scalar_lea.vmem [#allocation10], %s300
        %s302 = smul.u32 4, %s25
        %s303 = smul.u32 4, %s25
        %s304 = smul.u32 4, %s25
        %v306 = vld [vmem:[#allocation2] sm:$0xff]
        %v307 = vld [vmem:[#allocation2 + $0x8] sm:$0xff]
        %v308 = vld [vmem:[#allocation2 + $0x10] sm:$0xff]
        %v309 = vld [vmem:[#allocation2 + $0x18] sm:$0xff]
        %v310 = vld [vmem:[#allocation2 + $0x20] sm:$0xff]
        %v311 = vld [vmem:[#allocation2 + $0x28] sm:$0xff]
        %v312 = vld [vmem:[#allocation2 + $0x30] sm:$0x3]
        %v320 = vcombine.high %v306, %v306
        %v322 = vunpack.c.l.s4 1983009808
        %v323 = vunpack.c.0.s8 %v322
        %v324 = vlaneseq
        %v325 = vshrl.u32 %v324, 7
        %v326 = vsub.s32 %v323, %v325
        %v327 = vrot.slane %v306, %v326
        %v329 = vunpack.c.l.s4 1983009808
        %v330 = vunpack.c.0.s8 %v329
        %v331 = vlaneseq
        %v332 = vshrl.u32 %v331, 7
        %v333 = vsub.s32 %v330, %v332
        %v334 = vrot.slane %v320, %v333
        %v335 = vcombine.high %v327, %v327
        %v336 = vcombine.high %v334, %v334
        %v337 = vcombine.high %v307, %v307
        %v339 = vunpack.c.l.s4 1983009808
        %v340 = vunpack.c.0.s8 %v339
        %v341 = vlaneseq
        %v342 = vshrl.u32 %v341, 7
        %v343 = vsub.s32 %v340, %v342
        %v344 = vrot.slane %v307, %v343
        %v346 = vunpack.c.l.s4 1983009808
        %v347 = vunpack.c.0.s8 %v346
        %v348 = vlaneseq
        %v349 = vshrl.u32 %v348, 7
        %v350 = vsub.s32 %v347, %v349
        %v351 = vrot.slane %v337, %v350
        %v352 = vcombine.high %v344, %v344
        %v353 = vcombine.high %v351, %v351
        %v354 = vcombine.high %v308, %v308
        %v356 = vunpack.c.l.s4 1983009808
        %v357 = vunpack.c.0.s8 %v356
        %v358 = vlaneseq
        %v359 = vshrl.u32 %v358, 7
        %v360 = vsub.s32 %v357, %v359
        %v361 = vrot.slane %v308, %v360
        %v363 = vunpack.c.l.s4 1983009808
        %v364 = vunpack.c.0.s8 %v363
        %v365 = vlaneseq
        %v366 = vshrl.u32 %v365, 7
        %v367 = vsub.s32 %v364, %v366
        %v368 = vrot.slane %v354, %v367
        %v369 = vcombine.high %v361, %v361
        %v370 = vcombine.high %v368, %v368
        %v371 = vcombine.high %v309, %v309
        %v373 = vunpack.c.l.s4 1983009808
        %v374 = vunpack.c.0.s8 %v373
        %v375 = vlaneseq
        %v376 = vshrl.u32 %v375, 7
        %v377 = vsub.s32 %v374, %v376
        %v378 = vrot.slane %v309, %v377
        %v380 = vunpack.c.l.s4 1983009808
        %v381 = vunpack.c.0.s8 %v380
        %v382 = vlaneseq
        %v383 = vshrl.u32 %v382, 7
        %v384 = vsub.s32 %v381, %v383
        %v385 = vrot.slane %v371, %v384
        %v386 = vcombine.high %v378, %v378
        %v387 = vcombine.high %v385, %v385
        %v388 = vcombine.high %v310, %v310
        %v390 = vunpack.c.l.s4 1983009808
        %v391 = vunpack.c.0.s8 %v390
        %v392 = vlaneseq
        %v393 = vshrl.u32 %v392, 7
        %v394 = vsub.s32 %v391, %v393
        %v395 = vrot.slane %v310, %v394
        %v397 = vunpack.c.l.s4 1983009808
        %v398 = vunpack.c.0.s8 %v397
        %v399 = vlaneseq
        %v400 = vshrl.u32 %v399, 7
        %v401 = vsub.s32 %v398, %v400
        %v402 = vrot.slane %v388, %v401
        %v403 = vcombine.high %v395, %v395
        %v404 = vcombine.high %v402, %v402
        %v405 = vcombine.high %v311, %v311
        %v407 = vunpack.c.l.s4 1983009808
        %v408 = vunpack.c.0.s8 %v407
        %v409 = vlaneseq
        %v410 = vshrl.u32 %v409, 7
        %v411 = vsub.s32 %v408, %v410
        %v412 = vrot.slane %v311, %v411
        %v414 = vunpack.c.l.s4 1983009808
        %v415 = vunpack.c.0.s8 %v414
        %v416 = vlaneseq
        %v417 = vshrl.u32 %v416, 7
        %v418 = vsub.s32 %v415, %v417
        %v419 = vrot.slane %v405, %v418
        %v420 = vcombine.high %v412, %v412
        %v421 = vcombine.high %v419, %v419
        %v423 = vunpack.c.l.s4 1983009808
        %v424 = vunpack.c.0.s8 %v423
        %v425 = vlaneseq
        %v426 = vshrl.u32 %v425, 7
        %v427 = vsub.s32 %v424, %v426
        %v428 = vrot.slane %v312, %v427
        %v454 = vpack.c.bf16 %v327, %v327
        %v455 = vpack.c.bf16 %v335, %v335
        %v456 = vpack.c.bf16 %v334, %v334
        %v457 = vpack.c.bf16 %v336, %v336
        %v458 = vpack.c.bf16 %v344, %v344
        %v459 = vpack.c.bf16 %v352, %v352
        %v460 = vpack.c.bf16 %v351, %v351
        %v461 = vpack.c.bf16 %v353, %v353
        %v462 = vpack.c.bf16 %v361, %v361
        %v463 = vpack.c.bf16 %v369, %v369
        %v464 = vpack.c.bf16 %v368, %v368
        %v465 = vpack.c.bf16 %v370, %v370
        %v466 = vpack.c.bf16 %v378, %v378
        %v467 = vpack.c.bf16 %v386, %v386
        %v468 = vpack.c.bf16 %v385, %v385
        %v469 = vpack.c.bf16 %v387, %v387
        %v470 = vpack.c.bf16 %v395, %v395
        %v471 = vpack.c.bf16 %v403, %v403
        %v472 = vpack.c.bf16 %v402, %v402
        %v473 = vpack.c.bf16 %v404, %v404
        %v474 = vpack.c.bf16 %v412, %v412
        %v475 = vpack.c.bf16 %v420, %v420
        %v476 = vpack.c.bf16 %v419, %v419
        %v477 = vpack.c.bf16 %v421, %v421
        %v478 = vpack.c.bf16 %v428, %v428
        %v479 = vld [vmem:[%s249] sm:$0xff]
        %v480 = vld [vmem:[%s249 + $0x8] sm:$0xff]
        %v481 = vld [vmem:[%s249 + $0x10] sm:$0xff]
        %v482 = vld [vmem:[%s249 + $0x18] sm:$0xff]
        %v483 = vld [vmem:[%s249 + $0x20] sm:$0xff]
        %v484 = vld [vmem:[%s249 + $0x28] sm:$0xff]
        %v485 = vld [vmem:[%s249 + $0x30] sm:$0xff]
        %v486 = vld [vmem:[%s249 + $0x38] sm:$0xff]
        %v487 = vld [vmem:[%s249 + $0x40] sm:$0xff]
        %v488 = vld [vmem:[%s249 + $0x48] sm:$0xff]
        %v489 = vld [vmem:[%s249 + $0x50] sm:$0xff]
        %v490 = vld [vmem:[%s249 + $0x58] sm:$0xff]
        %v491 = vld [vmem:[%s249 + $0x60] sm:$0xff]
        %v492 = vld [vmem:[%s249 + $0x68] sm:$0xff]
        %v493 = vld [vmem:[%s249 + $0x70] sm:$0xff]
        %v494 = vld [vmem:[%s249 + $0x78] sm:$0xff]
        %v495 = vld [vmem:[%s249 + $0x80] sm:$0xff]
        %v496 = vld [vmem:[%s249 + $0x88] sm:$0xff]
        %v497 = vld [vmem:[%s249 + $0x90] sm:$0xff]
        %v498 = vld [vmem:[%s249 + $0x98] sm:$0xff]
        %v499 = vld [vmem:[%s249 + $0xa0] sm:$0xff]
        %v500 = vld [vmem:[%s249 + $0xa8] sm:$0xff]
        %v501 = vld [vmem:[%s249 + $0xb0] sm:$0xff]
        %v502 = vld [vmem:[%s249 + $0xb8] sm:$0xff]
        %v503 = vld [vmem:[%s249 + $0xc0] sm:$0xff]
        %v504 = vld [vmem:[%s249 + $0xc8] sm:$0xff]
        %v505 = vld [vmem:[%s249 + $0xd0] sm:$0xff]
        %v506 = vld [vmem:[%s249 + $0xd8] sm:$0xff]
        %v507 = vld [vmem:[%s249 + $0xe0] sm:$0xff]
        %v508 = vld [vmem:[%s249 + $0xe8] sm:$0xff]
        %v509 = vld [vmem:[%s249 + $0xf0] sm:$0xff]
        %v510 = vld [vmem:[%s249 + $0xf8] sm:$0xff]
        %v511 = vld [vmem:[%s249 + $0x100] sm:$0xff]
        %v512 = vld [vmem:[%s249 + $0x108] sm:$0xff]
        %v513 = vld [vmem:[%s249 + $0x110] sm:$0xff]
        %v514 = vld [vmem:[%s249 + $0x118] sm:$0xff]
        %v515 = vld [vmem:[%s249 + $0x120] sm:$0xff]
        %v516 = vld [vmem:[%s249 + $0x128] sm:$0xff]
        %v517 = vld [vmem:[%s249 + $0x130] sm:$0xff]
        %v518 = vld [vmem:[%s249 + $0x138] sm:$0xff]
        %v519 = vld [vmem:[%s249 + $0x140] sm:$0xff]
        %v520 = vld [vmem:[%s249 + $0x148] sm:$0xff]
        %v521 = vld [vmem:[%s249 + $0x150] sm:$0xff]
        %v522 = vld [vmem:[%s249 + $0x158] sm:$0xff]
        %v523 = vld [vmem:[%s249 + $0x160] sm:$0xff]
        %v524 = vld [vmem:[%s249 + $0x168] sm:$0xff]
        %v525 = vld [vmem:[%s249 + $0x170] sm:$0xff]
        %v526 = vld [vmem:[%s249 + $0x178] sm:$0xff]
        %v527 = vld [vmem:[%s249 + $0x180] sm:$0xff]
        %v528 = vld [vmem:[%s249 + $0x188] sm:$0xff]
        %v529 = vld [vmem:[%s249 + $0x190] sm:$0xff]
        %v530 = vld [vmem:[%s249 + $0x198] sm:$0xff]
        %v531 = vld [vmem:[%s249 + $0x1a0] sm:$0xff]
        %v532 = vld [vmem:[%s249 + $0x1a8] sm:$0xff]
        %v533 = vld [vmem:[%s249 + $0x1b0] sm:$0xff]
        %v534 = vld [vmem:[%s249 + $0x1b8] sm:$0xff]
        %v535 = vld [vmem:[%s249 + $0x1c0] sm:$0xff]
        %v536 = vld [vmem:[%s249 + $0x1c8] sm:$0xff]
        %v537 = vld [vmem:[%s249 + $0x1d0] sm:$0xff]
        %v538 = vld [vmem:[%s249 + $0x1d8] sm:$0xff]
        %v539 = vld [vmem:[%s249 + $0x1e0] sm:$0xff]
        %v540 = vld [vmem:[%s249 + $0x1e8] sm:$0xff]
        %v541 = vld [vmem:[%s249 + $0x1f0] sm:$0xff]
        %v542 = vld [vmem:[%s249 + $0x1f8] sm:$0xff]
        %v543 = vld [vmem:[%s249 + $0x200] sm:$0xff]
        %v544 = vld [vmem:[%s249 + $0x208] sm:$0xff]
        %v545 = vld [vmem:[%s249 + $0x210] sm:$0xff]
        %v546 = vld [vmem:[%s249 + $0x218] sm:$0xff]
        %v547 = vld [vmem:[%s249 + $0x220] sm:$0xff]
        %v548 = vld [vmem:[%s249 + $0x228] sm:$0xff]
        %v549 = vld [vmem:[%s249 + $0x230] sm:$0xff]
        %v550 = vld [vmem:[%s249 + $0x238] sm:$0xff]
        %v551 = vld [vmem:[%s249 + $0x240] sm:$0xff]
        %v552 = vld [vmem:[%s249 + $0x248] sm:$0xff]
        %v553 = vld [vmem:[%s249 + $0x250] sm:$0xff]
        %v554 = vld [vmem:[%s249 + $0x258] sm:$0xff]
        %v555 = vld [vmem:[%s249 + $0x260] sm:$0xff]
        %v556 = vld [vmem:[%s249 + $0x268] sm:$0xff]
        %v557 = vld [vmem:[%s249 + $0x270] sm:$0xff]
        %v558 = vld [vmem:[%s249 + $0x278] sm:$0xff]
        %v559 = vld [vmem:[%s249 + $0x280] sm:$0xff]
        %v560 = vld [vmem:[%s249 + $0x288] sm:$0xff]
        %v561 = vld [vmem:[%s249 + $0x290] sm:$0xff]
        %v562 = vld [vmem:[%s249 + $0x298] sm:$0xff]
        %v563 = vld [vmem:[%s249 + $0x2a0] sm:$0xff]
        %v564 = vld [vmem:[%s249 + $0x2a8] sm:$0xff]
        %v565 = vld [vmem:[%s249 + $0x2b0] sm:$0xff]
        %v566 = vld [vmem:[%s249 + $0x2b8] sm:$0xff]
        %v567 = vld [vmem:[%s249 + $0x2c0] sm:$0xff]
        %v568 = vld [vmem:[%s249 + $0x2c8] sm:$0xff]
        %v569 = vld [vmem:[%s249 + $0x2d0] sm:$0xff]
        %v570 = vld [vmem:[%s249 + $0x2d8] sm:$0xff]
        %v571 = vld [vmem:[%s249 + $0x2e0] sm:$0xff]
        %v572 = vld [vmem:[%s249 + $0x2e8] sm:$0xff]
        %v573 = vld [vmem:[%s249 + $0x2f0] sm:$0xff]
        %v574 = vld [vmem:[%s249 + $0x2f8] sm:$0xff]
        %v575 = vld [vmem:[%s249 + $0x300] sm:$0xff]
        %v576 = vld [vmem:[%s249 + $0x308] sm:$0xff]
        %v577 = vld [vmem:[%s249 + $0x310] sm:$0xff]
        %v578 = vld [vmem:[%s249 + $0x318] sm:$0xff]
        %v579 = vld [vmem:[%s249 + $0x320] sm:$0xff]
        %v580 = vld [vmem:[%s249 + $0x328] sm:$0xff]
        %v581 = vld [vmem:[%s249 + $0x330] sm:$0xff]
        %v582 = vld [vmem:[%s249 + $0x338] sm:$0xff]
        %v583 = vld [vmem:[%s249 + $0x340] sm:$0xff]
        %v584 = vld [vmem:[%s249 + $0x348] sm:$0xff]
        %v585 = vld [vmem:[%s249 + $0x350] sm:$0xff]
        %v586 = vld [vmem:[%s249 + $0x358] sm:$0xff]
        %v587 = vld [vmem:[%s249 + $0x360] sm:$0xff]
        %v588 = vld [vmem:[%s249 + $0x368] sm:$0xff]
        %v589 = vld [vmem:[%s249 + $0x370] sm:$0xff]
        %v590 = vld [vmem:[%s249 + $0x378] sm:$0xff]
        %v591 = vld [vmem:[%s249 + $0x380] sm:$0xff]
        %v592 = vld [vmem:[%s249 + $0x388] sm:$0xff]
        %v593 = vld [vmem:[%s249 + $0x390] sm:$0xff]
        %v594 = vld [vmem:[%s249 + $0x398] sm:$0xff]
        %v595 = vld [vmem:[%s249 + $0x3a0] sm:$0xff]
        %v596 = vld [vmem:[%s249 + $0x3a8] sm:$0xff]
        %v597 = vld [vmem:[%s249 + $0x3b0] sm:$0xff]
        %v598 = vld [vmem:[%s249 + $0x3b8] sm:$0xff]
        %v599 = vld [vmem:[%s249 + $0x3c0] sm:$0xff]
        %v600 = vld [vmem:[%s249 + $0x3c8] sm:$0xff]
        %v601 = vld [vmem:[%s249 + $0x3d0] sm:$0xff]
        %v602 = vld [vmem:[%s249 + $0x3d8] sm:$0xff]
        %v603 = vld [vmem:[%s249 + $0x3e0] sm:$0xff]
        %v604 = vld [vmem:[%s249 + $0x3e8] sm:$0xff]
        %v605 = vld [vmem:[%s249 + $0x3f0] sm:$0xff]
        %v606 = vld [vmem:[%s249 + $0x3f8] sm:$0xff]
        %v607 = vld [vmem:[%s249 + $0x400] sm:$0xff]
        %v608 = vld [vmem:[%s249 + $0x408] sm:$0xff]
        %v609 = vld [vmem:[%s249 + $0x410] sm:$0xff]
        %v610 = vld [vmem:[%s249 + $0x418] sm:$0xff]
        %v611 = vld [vmem:[%s249 + $0x420] sm:$0xff]
        %v612 = vld [vmem:[%s249 + $0x428] sm:$0xff]
        %v613 = vld [vmem:[%s249 + $0x430] sm:$0xff]
        %v614 = vld [vmem:[%s249 + $0x438] sm:$0xff]
        %v615 = vld [vmem:[%s249 + $0x440] sm:$0xff]
        %v616 = vld [vmem:[%s249 + $0x448] sm:$0xff]
        %v617 = vld [vmem:[%s249 + $0x450] sm:$0xff]
        %v618 = vld [vmem:[%s249 + $0x458] sm:$0xff]
        %v619 = vld [vmem:[%s249 + $0x460] sm:$0xff]
        %v620 = vld [vmem:[%s249 + $0x468] sm:$0xff]
        %v621 = vld [vmem:[%s249 + $0x470] sm:$0xff]
        %v622 = vld [vmem:[%s249 + $0x478] sm:$0xff]
        %v623 = vld [vmem:[%s249 + $0x480] sm:$0xff]
        %v624 = vld [vmem:[%s249 + $0x488] sm:$0xff]
        %v625 = vld [vmem:[%s249 + $0x490] sm:$0xff]
        %v626 = vld [vmem:[%s249 + $0x498] sm:$0xff]
        %v627 = vld [vmem:[%s249 + $0x4a0] sm:$0xff]
        %v628 = vld [vmem:[%s249 + $0x4a8] sm:$0xff]
        %v629 = vld [vmem:[%s249 + $0x4b0] sm:$0xff]
        %v630 = vld [vmem:[%s249 + $0x4b8] sm:$0xff]
        %v631 = vld [vmem:[%s249 + $0x4c0] sm:$0xff]
        %v632 = vld [vmem:[%s249 + $0x4c8] sm:$0xff]
        %v633 = vld [vmem:[%s249 + $0x4d0] sm:$0xff]
        %v634 = vld [vmem:[%s249 + $0x4d8] sm:$0xff]
        %v635 = vld [vmem:[%s249 + $0x4e0] sm:$0xff]
        %v636 = vld [vmem:[%s249 + $0x4e8] sm:$0xff]
        %v637 = vld [vmem:[%s249 + $0x4f0] sm:$0xff]
        %v638 = vld [vmem:[%s249 + $0x4f8] sm:$0xff]
        %v639 = vld [vmem:[%s249 + $0x500] sm:$0xff]
        %v640 = vld [vmem:[%s249 + $0x508] sm:$0xff]
        %v641 = vld [vmem:[%s249 + $0x510] sm:$0xff]
        %v642 = vld [vmem:[%s249 + $0x518] sm:$0xff]
        %v643 = vld [vmem:[%s249 + $0x520] sm:$0xff]
        %v644 = vld [vmem:[%s249 + $0x528] sm:$0xff]
        %v645 = vld [vmem:[%s249 + $0x530] sm:$0xff]
        %v646 = vld [vmem:[%s249 + $0x538] sm:$0xff]
        %v647 = vld [vmem:[%s249 + $0x540] sm:$0xff]
        %v648 = vld [vmem:[%s249 + $0x548] sm:$0xff]
        %v649 = vld [vmem:[%s249 + $0x550] sm:$0xff]
        %v650 = vld [vmem:[%s249 + $0x558] sm:$0xff]
        %v651 = vld [vmem:[%s249 + $0x560] sm:$0xff]
        %v652 = vld [vmem:[%s249 + $0x568] sm:$0xff]
        %v653 = vld [vmem:[%s249 + $0x570] sm:$0xff]
        %v654 = vld [vmem:[%s249 + $0x578] sm:$0xff]
        %v655 = vld [vmem:[%s249 + $0x580] sm:$0xff]
        %v656 = vld [vmem:[%s249 + $0x588] sm:$0xff]
        %v657 = vld [vmem:[%s249 + $0x590] sm:$0xff]
        %v658 = vld [vmem:[%s249 + $0x598] sm:$0xff]
        %v659 = vld [vmem:[%s249 + $0x5a0] sm:$0xff]
        %v660 = vld [vmem:[%s249 + $0x5a8] sm:$0xff]
        %v661 = vld [vmem:[%s249 + $0x5b0] sm:$0xff]
        %v662 = vld [vmem:[%s249 + $0x5b8] sm:$0xff]
        %v663 = vld [vmem:[%s249 + $0x5c0] sm:$0xff]
        %v664 = vld [vmem:[%s249 + $0x5c8] sm:$0xff]
        %v665 = vld [vmem:[%s249 + $0x5d0] sm:$0xff]
        %v666 = vld [vmem:[%s249 + $0x5d8] sm:$0xff]
        %v667 = vld [vmem:[%s249 + $0x5e0] sm:$0xff]
        %v668 = vld [vmem:[%s249 + $0x5e8] sm:$0xff]
        %v669 = vld [vmem:[%s249 + $0x5f0] sm:$0xff]
        %v670 = vld [vmem:[%s249 + $0x5f8] sm:$0xff]
        %v671 = vld [vmem:[%s249 + $0x600] sm:$0xff]
        %v672 = vld [vmem:[%s249 + $0x608] sm:$0xff]
        %v673 = vld [vmem:[%s249 + $0x610] sm:$0xff]
        %v674 = vld [vmem:[%s249 + $0x618] sm:$0xff]
        %v675 = vld [vmem:[%s249 + $0x620] sm:$0xff]
        %v676 = vld [vmem:[%s249 + $0x628] sm:$0xff]
        %v677 = vld [vmem:[%s249 + $0x630] sm:$0xff]
        %v678 = vld [vmem:[%s249 + $0x638] sm:$0xff]
        %v679 = vld [vmem:[%s249 + $0x640] sm:$0xff]
        %v680 = vld [vmem:[%s249 + $0x648] sm:$0xff]
        %v681 = vld [vmem:[%s249 + $0x650] sm:$0xff]
        %v682 = vld [vmem:[%s249 + $0x658] sm:$0xff]
        %v683 = vld [vmem:[%s249 + $0x660] sm:$0xff]
        %v684 = vld [vmem:[%s249 + $0x668] sm:$0xff]
        %v685 = vld [vmem:[%s249 + $0x670] sm:$0xff]
        %v686 = vld [vmem:[%s249 + $0x678] sm:$0xff]
        %v687 = vld [vmem:[%s249 + $0x680] sm:$0xff]
        %v688 = vld [vmem:[%s249 + $0x688] sm:$0xff]
        %v689 = vld [vmem:[%s249 + $0x690] sm:$0xff]
        %v690 = vld [vmem:[%s249 + $0x698] sm:$0xff]
        %v691 = vld [vmem:[%s249 + $0x6a0] sm:$0xff]
        %v692 = vld [vmem:[%s249 + $0x6a8] sm:$0xff]
        %v693 = vld [vmem:[%s249 + $0x6b0] sm:$0xff]
        %v694 = vld [vmem:[%s249 + $0x6b8] sm:$0xff]
        %v695 = vld [vmem:[%s249 + $0x6c0] sm:$0xff]
        %v696 = vld [vmem:[%s249 + $0x6c8] sm:$0xff]
        %v697 = vld [vmem:[%s249 + $0x6d0] sm:$0xff]
        %v698 = vld [vmem:[%s249 + $0x6d8] sm:$0xff]
        %v699 = vld [vmem:[%s249 + $0x6e0] sm:$0xff]
        %v700 = vld [vmem:[%s249 + $0x6e8] sm:$0xff]
        %v701 = vld [vmem:[%s249 + $0x6f0] sm:$0xff]
        %v702 = vld [vmem:[%s249 + $0x6f8] sm:$0xff]
        %v703 = vld [vmem:[%s249 + $0x700] sm:$0xff]
        %v704 = vld [vmem:[%s249 + $0x708] sm:$0xff]
        %v705 = vld [vmem:[%s249 + $0x710] sm:$0xff]
        %v706 = vld [vmem:[%s249 + $0x718] sm:$0xff]
        %v707 = vld [vmem:[%s249 + $0x720] sm:$0xff]
        %v708 = vld [vmem:[%s249 + $0x728] sm:$0xff]
        %v709 = vld [vmem:[%s249 + $0x730] sm:$0xff]
        %v710 = vld [vmem:[%s249 + $0x738] sm:$0xff]
        %v711 = vld [vmem:[%s249 + $0x740] sm:$0xff]
        %v712 = vld [vmem:[%s249 + $0x748] sm:$0xff]
        %v713 = vld [vmem:[%s249 + $0x750] sm:$0xff]
        %v714 = vld [vmem:[%s249 + $0x758] sm:$0xff]
        %v715 = vld [vmem:[%s249 + $0x760] sm:$0xff]
        %v716 = vld [vmem:[%s249 + $0x768] sm:$0xff]
        %v717 = vld [vmem:[%s249 + $0x770] sm:$0xff]
        %v718 = vld [vmem:[%s249 + $0x778] sm:$0xff]
        %v719 = vld [vmem:[%s249 + $0x780] sm:$0xff]
        %v720 = vld [vmem:[%s249 + $0x788] sm:$0xff]
        %v721 = vld [vmem:[%s249 + $0x790] sm:$0xff]
        %v722 = vld [vmem:[%s249 + $0x798] sm:$0xff]
        %v723 = vld [vmem:[%s249 + $0x7a0] sm:$0xff]
        %v724 = vld [vmem:[%s249 + $0x7a8] sm:$0xff]
        %v725 = vld [vmem:[%s249 + $0x7b0] sm:$0xff]
        %v726 = vld [vmem:[%s249 + $0x7b8] sm:$0xff]
        %v727 = vld [vmem:[%s249 + $0x7c0] sm:$0xff]
        %v728 = vld [vmem:[%s249 + $0x7c8] sm:$0xff]
        %v729 = vld [vmem:[%s249 + $0x7d0] sm:$0xff]
        %v730 = vld [vmem:[%s249 + $0x7d8] sm:$0xff]
        %v731 = vld [vmem:[%s249 + $0x7e0] sm:$0xff]
        %v732 = vld [vmem:[%s249 + $0x7e8] sm:$0xff]
        %v733 = vld [vmem:[%s249 + $0x7f0] sm:$0xff]
        %v734 = vld [vmem:[%s249 + $0x7f8] sm:$0xff]
        %v735 = vld [vmem:[%s249 + $0x800] sm:$0xff]
        %v736 = vld [vmem:[%s249 + $0x808] sm:$0xff]
        %v737 = vld [vmem:[%s249 + $0x810] sm:$0xff]
        %v738 = vld [vmem:[%s249 + $0x818] sm:$0xff]
        %v739 = vld [vmem:[%s249 + $0x820] sm:$0xff]
        %v740 = vld [vmem:[%s249 + $0x828] sm:$0xff]
        %v741 = vld [vmem:[%s249 + $0x830] sm:$0xff]
        %v742 = vld [vmem:[%s249 + $0x838] sm:$0xff]
        %v743 = vld [vmem:[%s249 + $0x840] sm:$0xff]
        %v744 = vld [vmem:[%s249 + $0x848] sm:$0xff]
        %v745 = vld [vmem:[%s249 + $0x850] sm:$0xff]
        %v746 = vld [vmem:[%s249 + $0x858] sm:$0xff]
        %v747 = vld [vmem:[%s249 + $0x860] sm:$0xff]
        %v748 = vld [vmem:[%s249 + $0x868] sm:$0xff]
        %v749 = vld [vmem:[%s249 + $0x870] sm:$0xff]
        %v750 = vld [vmem:[%s249 + $0x878] sm:$0xff]
        %v751 = vld [vmem:[%s249 + $0x880] sm:$0xff]
        %v752 = vld [vmem:[%s249 + $0x888] sm:$0xff]
        %v753 = vld [vmem:[%s249 + $0x890] sm:$0xff]
        %v754 = vld [vmem:[%s249 + $0x898] sm:$0xff]
        %v755 = vld [vmem:[%s249 + $0x8a0] sm:$0xff]
        %v756 = vld [vmem:[%s249 + $0x8a8] sm:$0xff]
        %v757 = vld [vmem:[%s249 + $0x8b0] sm:$0xff]
        %v758 = vld [vmem:[%s249 + $0x8b8] sm:$0xff]
        %v759 = vld [vmem:[%s249 + $0x8c0] sm:$0xff]
        %v760 = vld [vmem:[%s249 + $0x8c8] sm:$0xff]
        %v761 = vld [vmem:[%s249 + $0x8d0] sm:$0xff]
        %v762 = vld [vmem:[%s249 + $0x8d8] sm:$0xff]
        %v763 = vld [vmem:[%s249 + $0x8e0] sm:$0xff]
        %v764 = vld [vmem:[%s249 + $0x8e8] sm:$0xff]
        %v765 = vld [vmem:[%s249 + $0x8f0] sm:$0xff]
        %v766 = vld [vmem:[%s249 + $0x8f8] sm:$0xff]
        %v767 = vld [vmem:[%s249 + $0x900] sm:$0xff]
        %v768 = vld [vmem:[%s249 + $0x908] sm:$0xff]
        %v769 = vld [vmem:[%s249 + $0x910] sm:$0xff]
        %v770 = vld [vmem:[%s249 + $0x918] sm:$0xff]
        %v771 = vld [vmem:[%s249 + $0x920] sm:$0xff]
        %v772 = vld [vmem:[%s249 + $0x928] sm:$0xff]
        %v773 = vld [vmem:[%s249 + $0x930] sm:$0xff]
        %v774 = vld [vmem:[%s249 + $0x938] sm:$0xff]
        %v775 = vld [vmem:[%s249 + $0x940] sm:$0xff]
        %v776 = vld [vmem:[%s249 + $0x948] sm:$0xff]
        %v777 = vld [vmem:[%s249 + $0x950] sm:$0xff]
        %v778 = vld [vmem:[%s249 + $0x958] sm:$0xff]
        %v779 = vld [vmem:[%s249 + $0x960] sm:$0xff]
        %v780 = vld [vmem:[%s249 + $0x968] sm:$0xff]
        %v781 = vld [vmem:[%s249 + $0x970] sm:$0xff]
        %v782 = vld [vmem:[%s249 + $0x978] sm:$0xff]
        %v783 = vld [vmem:[%s249 + $0x980] sm:$0xff]
        %v784 = vld [vmem:[%s249 + $0x988] sm:$0xff]
        %v785 = vld [vmem:[%s249 + $0x990] sm:$0xff]
        %v786 = vld [vmem:[%s249 + $0x998] sm:$0xff]
        %v787 = vld [vmem:[%s249 + $0x9a0] sm:$0xff]
        %v788 = vld [vmem:[%s249 + $0x9a8] sm:$0xff]
        %v789 = vld [vmem:[%s249 + $0x9b0] sm:$0xff]
        %v790 = vld [vmem:[%s249 + $0x9b8] sm:$0xff]
        %v791 = vld [vmem:[%s249 + $0x9c0] sm:$0xff]
        %v792 = vld [vmem:[%s249 + $0x9c8] sm:$0xff]
        %v793 = vld [vmem:[%s249 + $0x9d0] sm:$0xff]
        %v794 = vld [vmem:[%s249 + $0x9d8] sm:$0xff]
        %v795 = vld [vmem:[%s249 + $0x9e0] sm:$0xff]
        %v796 = vld [vmem:[%s249 + $0x9e8] sm:$0xff]
        %v797 = vld [vmem:[%s249 + $0x9f0] sm:$0xff]
        %v798 = vld [vmem:[%s249 + $0x9f8] sm:$0xff]
        %v799 = vld [vmem:[%s249 + $0xa00] sm:$0xff]
        %v800 = vld [vmem:[%s249 + $0xa08] sm:$0xff]
        %v801 = vld [vmem:[%s249 + $0xa10] sm:$0xff]
        %v802 = vld [vmem:[%s249 + $0xa18] sm:$0xff]
        %v803 = vld [vmem:[%s249 + $0xa20] sm:$0xff]
        %v804 = vld [vmem:[%s249 + $0xa28] sm:$0xff]
        %v805 = vld [vmem:[%s249 + $0xa30] sm:$0xff]
        %v806 = vld [vmem:[%s249 + $0xa38] sm:$0xff]
        %v807 = vld [vmem:[%s249 + $0xa40] sm:$0xff]
        %v808 = vld [vmem:[%s249 + $0xa48] sm:$0xff]
        %v809 = vld [vmem:[%s249 + $0xa50] sm:$0xff]
        %v810 = vld [vmem:[%s249 + $0xa58] sm:$0xff]
        %v811 = vld [vmem:[%s249 + $0xa60] sm:$0xff]
        %v812 = vld [vmem:[%s249 + $0xa68] sm:$0xff]
        %v813 = vld [vmem:[%s249 + $0xa70] sm:$0xff]
        %v814 = vld [vmem:[%s249 + $0xa78] sm:$0xff]
        %v815 = vld [vmem:[%s249 + $0xa80] sm:$0xff]
        %v816 = vld [vmem:[%s249 + $0xa88] sm:$0xff]
        %v817 = vld [vmem:[%s249 + $0xa90] sm:$0xff]
        %v818 = vld [vmem:[%s249 + $0xa98] sm:$0xff]
        %v819 = vld [vmem:[%s249 + $0xaa0] sm:$0xff]
        %v820 = vld [vmem:[%s249 + $0xaa8] sm:$0xff]
        %v821 = vld [vmem:[%s249 + $0xab0] sm:$0xff]
        %v822 = vld [vmem:[%s249 + $0xab8] sm:$0xff]
        %v823 = vld [vmem:[%s249 + $0xac0] sm:$0xff]
        %v824 = vld [vmem:[%s249 + $0xac8] sm:$0xff]
        %v825 = vld [vmem:[%s249 + $0xad0] sm:$0xff]
        %v826 = vld [vmem:[%s249 + $0xad8] sm:$0xff]
        %v827 = vld [vmem:[%s249 + $0xae0] sm:$0xff]
        %v828 = vld [vmem:[%s249 + $0xae8] sm:$0xff]
        %v829 = vld [vmem:[%s249 + $0xaf0] sm:$0xff]
        %v830 = vld [vmem:[%s249 + $0xaf8] sm:$0xff]
        %v831 = vld [vmem:[%s249 + $0xb00] sm:$0xff]
        %v832 = vld [vmem:[%s249 + $0xb08] sm:$0xff]
        %v833 = vld [vmem:[%s249 + $0xb10] sm:$0xff]
        %v834 = vld [vmem:[%s249 + $0xb18] sm:$0xff]
        %v835 = vld [vmem:[%s249 + $0xb20] sm:$0xff]
        %v836 = vld [vmem:[%s249 + $0xb28] sm:$0xff]
        %v837 = vld [vmem:[%s249 + $0xb30] sm:$0xff]
        %v838 = vld [vmem:[%s249 + $0xb38] sm:$0xff]
        %v839 = vld [vmem:[%s249 + $0xb40] sm:$0xff]
        %v840 = vld [vmem:[%s249 + $0xb48] sm:$0xff]
        %v841 = vld [vmem:[%s249 + $0xb50] sm:$0xff]
        %v842 = vld [vmem:[%s249 + $0xb58] sm:$0xff]
        %v843 = vld [vmem:[%s249 + $0xb60] sm:$0xff]
        %v844 = vld [vmem:[%s249 + $0xb68] sm:$0xff]
        %v845 = vld [vmem:[%s249 + $0xb70] sm:$0xff]
        %v846 = vld [vmem:[%s249 + $0xb78] sm:$0xff]
        %v847 = vld [vmem:[%s249 + $0xb80] sm:$0xff]
        %v848 = vld [vmem:[%s249 + $0xb88] sm:$0xff]
        %v849 = vld [vmem:[%s249 + $0xb90] sm:$0xff]
        %v850 = vld [vmem:[%s249 + $0xb98] sm:$0xff]
        %v851 = vld [vmem:[%s249 + $0xba0] sm:$0xff]
        %v852 = vld [vmem:[%s249 + $0xba8] sm:$0xff]
        %v853 = vld [vmem:[%s249 + $0xbb0] sm:$0xff]
        %v854 = vld [vmem:[%s249 + $0xbb8] sm:$0xff]
        %v855 = vld [vmem:[%s249 + $0xbc0] sm:$0xff]
        %v856 = vld [vmem:[%s249 + $0xbc8] sm:$0xff]
        %v857 = vld [vmem:[%s249 + $0xbd0] sm:$0xff]
        %v858 = vld [vmem:[%s249 + $0xbd8] sm:$0xff]
        %v859 = vld [vmem:[%s249 + $0xbe0] sm:$0xff]
        %v860 = vld [vmem:[%s249 + $0xbe8] sm:$0xff]
        %v861 = vld [vmem:[%s249 + $0xbf0] sm:$0xff]
        %v862 = vld [vmem:[%s249 + $0xbf8] sm:$0xff]
        %v863 = vld [vmem:[%s249 + $0xc00] sm:$0xff]
        %v864 = vld [vmem:[%s249 + $0xc08] sm:$0xff]
        %v865 = vld [vmem:[%s249 + $0xc10] sm:$0xff]
        %v866 = vld [vmem:[%s249 + $0xc18] sm:$0xff]
        %v867 = vld [vmem:[%s249 + $0xc20] sm:$0xff]
        %v868 = vld [vmem:[%s249 + $0xc28] sm:$0xff]
        %v869 = vld [vmem:[%s249 + $0xc30] sm:$0xff]
        %v870 = vld [vmem:[%s249 + $0xc38] sm:$0xff]
        %v871 = vld [vmem:[%s249 + $0xc40] sm:$0xff]
        %v872 = vld [vmem:[%s249 + $0xc48] sm:$0xff]
        %v873 = vld [vmem:[%s249 + $0xc50] sm:$0xff]
        %v874 = vld [vmem:[%s249 + $0xc58] sm:$0xff]
        %v875 = vld [vmem:[%s249 + $0xc60] sm:$0xff]
        %v876 = vld [vmem:[%s249 + $0xc68] sm:$0xff]
        %v877 = vld [vmem:[%s249 + $0xc70] sm:$0xff]
        %v878 = vld [vmem:[%s249 + $0xc78] sm:$0xff]
        %v879 = vunpack.c.l.s8.bf16 %v479
        %v880 = vunpack.c.l.s8.bf16 %v480
        %v881 = vunpack.c.l.s8.bf16 %v481
        %v882 = vunpack.c.l.s8.bf16 %v482
        %v883 = vunpack.c.h.s8.bf16 %v479
        %v884 = vunpack.c.h.s8.bf16 %v480
        %v885 = vunpack.c.h.s8.bf16 %v481
        %v886 = vunpack.c.h.s8.bf16 %v482
        %v887 = vunpack.c.l.s8.bf16 %v483
        %v888 = vunpack.c.l.s8.bf16 %v484
        %v889 = vunpack.c.l.s8.bf16 %v485
        %v890 = vunpack.c.l.s8.bf16 %v486
        %v891 = vunpack.c.h.s8.bf16 %v483
        %v892 = vunpack.c.h.s8.bf16 %v484
        %v893 = vunpack.c.h.s8.bf16 %v485
        %v894 = vunpack.c.h.s8.bf16 %v486
        %v895 = vunpack.c.l.s8.bf16 %v487
        %v896 = vunpack.c.l.s8.bf16 %v488
        %v897 = vunpack.c.l.s8.bf16 %v489
        %v898 = vunpack.c.l.s8.bf16 %v490
        %v899 = vunpack.c.h.s8.bf16 %v487
        %v900 = vunpack.c.h.s8.bf16 %v488
        %v901 = vunpack.c.h.s8.bf16 %v489
        %v902 = vunpack.c.h.s8.bf16 %v490
        %v903 = vunpack.c.l.s8.bf16 %v491
        %v904 = vunpack.c.l.s8.bf16 %v492
        %v905 = vunpack.c.l.s8.bf16 %v493
        %v906 = vunpack.c.l.s8.bf16 %v494
        %v907 = vunpack.c.h.s8.bf16 %v491
        %v908 = vunpack.c.h.s8.bf16 %v492
        %v909 = vunpack.c.h.s8.bf16 %v493
        %v910 = vunpack.c.h.s8.bf16 %v494
        %v911 = vunpack.c.l.s8.bf16 %v495
        %v912 = vunpack.c.l.s8.bf16 %v496
        %v913 = vunpack.c.l.s8.bf16 %v497
        %v914 = vunpack.c.l.s8.bf16 %v498
        %v915 = vunpack.c.h.s8.bf16 %v495
        %v916 = vunpack.c.h.s8.bf16 %v496
        %v917 = vunpack.c.h.s8.bf16 %v497
        %v918 = vunpack.c.h.s8.bf16 %v498
        %v919 = vunpack.c.l.s8.bf16 %v499
        %v920 = vunpack.c.l.s8.bf16 %v500
        %v921 = vunpack.c.l.s8.bf16 %v501
        %v922 = vunpack.c.l.s8.bf16 %v502
        %v923 = vunpack.c.h.s8.bf16 %v499
        %v924 = vunpack.c.h.s8.bf16 %v500
        %v925 = vunpack.c.h.s8.bf16 %v501
        %v926 = vunpack.c.h.s8.bf16 %v502
        %v927 = vunpack.c.l.s8.bf16 %v503
        %v928 = vunpack.c.l.s8.bf16 %v504
        %v929 = vunpack.c.l.s8.bf16 %v505
        %v930 = vunpack.c.l.s8.bf16 %v506
        %v931 = vunpack.c.h.s8.bf16 %v503
        %v932 = vunpack.c.h.s8.bf16 %v504
        %v933 = vunpack.c.h.s8.bf16 %v505
        %v934 = vunpack.c.h.s8.bf16 %v506
        %v935 = vunpack.c.l.s8.bf16 %v507
        %v936 = vunpack.c.l.s8.bf16 %v508
        %v937 = vunpack.c.l.s8.bf16 %v509
        %v938 = vunpack.c.l.s8.bf16 %v510
        %v939 = vunpack.c.h.s8.bf16 %v507
        %v940 = vunpack.c.h.s8.bf16 %v508
        %v941 = vunpack.c.h.s8.bf16 %v509
        %v942 = vunpack.c.h.s8.bf16 %v510
        %v943 = vunpack.c.l.s8.bf16 %v511
        %v944 = vunpack.c.l.s8.bf16 %v512
        %v945 = vunpack.c.l.s8.bf16 %v513
        %v946 = vunpack.c.l.s8.bf16 %v514
        %v947 = vunpack.c.h.s8.bf16 %v511
        %v948 = vunpack.c.h.s8.bf16 %v512
        %v949 = vunpack.c.h.s8.bf16 %v513
        %v950 = vunpack.c.h.s8.bf16 %v514
        %v951 = vunpack.c.l.s8.bf16 %v515
        %v952 = vunpack.c.l.s8.bf16 %v516
        %v953 = vunpack.c.l.s8.bf16 %v517
        %v954 = vunpack.c.l.s8.bf16 %v518
        %v955 = vunpack.c.h.s8.bf16 %v515
        %v956 = vunpack.c.h.s8.bf16 %v516
        %v957 = vunpack.c.h.s8.bf16 %v517
        %v958 = vunpack.c.h.s8.bf16 %v518
        %v959 = vunpack.c.l.s8.bf16 %v519
        %v960 = vunpack.c.l.s8.bf16 %v520
        %v961 = vunpack.c.l.s8.bf16 %v521
        %v962 = vunpack.c.l.s8.bf16 %v522
        %v963 = vunpack.c.h.s8.bf16 %v519
        %v964 = vunpack.c.h.s8.bf16 %v520
        %v965 = vunpack.c.h.s8.bf16 %v521
        %v966 = vunpack.c.h.s8.bf16 %v522
        %v967 = vunpack.c.l.s8.bf16 %v523
        %v968 = vunpack.c.l.s8.bf16 %v524
        %v969 = vunpack.c.l.s8.bf16 %v525
        %v970 = vunpack.c.l.s8.bf16 %v526
        %v971 = vunpack.c.h.s8.bf16 %v523
        %v972 = vunpack.c.h.s8.bf16 %v524
        %v973 = vunpack.c.h.s8.bf16 %v525
        %v974 = vunpack.c.h.s8.bf16 %v526
        %v975 = vunpack.c.l.s8.bf16 %v527
        %v976 = vunpack.c.l.s8.bf16 %v528
        %v977 = vunpack.c.l.s8.bf16 %v529
        %v978 = vunpack.c.l.s8.bf16 %v530
        %v979 = vunpack.c.h.s8.bf16 %v527
        %v980 = vunpack.c.h.s8.bf16 %v528
        %v981 = vunpack.c.h.s8.bf16 %v529
        %v982 = vunpack.c.h.s8.bf16 %v530
        %v983 = vunpack.c.l.s8.bf16 %v531
        %v984 = vunpack.c.l.s8.bf16 %v532
        %v985 = vunpack.c.l.s8.bf16 %v533
        %v986 = vunpack.c.l.s8.bf16 %v534
        %v987 = vunpack.c.h.s8.bf16 %v531
        %v988 = vunpack.c.h.s8.bf16 %v532
        %v989 = vunpack.c.h.s8.bf16 %v533
        %v990 = vunpack.c.h.s8.bf16 %v534
        %v991 = vunpack.c.l.s8.bf16 %v535
        %v992 = vunpack.c.l.s8.bf16 %v536
        %v993 = vunpack.c.l.s8.bf16 %v537
        %v994 = vunpack.c.l.s8.bf16 %v538
        %v995 = vunpack.c.h.s8.bf16 %v535
        %v996 = vunpack.c.h.s8.bf16 %v536
        %v997 = vunpack.c.h.s8.bf16 %v537
        %v998 = vunpack.c.h.s8.bf16 %v538
        %v999 = vunpack.c.l.s8.bf16 %v539
        %v1000 = vunpack.c.l.s8.bf16 %v540
        %v1001 = vunpack.c.l.s8.bf16 %v541
        %v1002 = vunpack.c.l.s8.bf16 %v542
        %v1003 = vunpack.c.h.s8.bf16 %v539
        %v1004 = vunpack.c.h.s8.bf16 %v540
        %v1005 = vunpack.c.h.s8.bf16 %v541
        %v1006 = vunpack.c.h.s8.bf16 %v542
        %v1007 = vunpack.c.l.s8.bf16 %v543
        %v1008 = vunpack.c.l.s8.bf16 %v544
        %v1009 = vunpack.c.l.s8.bf16 %v545
        %v1010 = vunpack.c.l.s8.bf16 %v546
        %v1011 = vunpack.c.h.s8.bf16 %v543
        %v1012 = vunpack.c.h.s8.bf16 %v544
        %v1013 = vunpack.c.h.s8.bf16 %v545
        %v1014 = vunpack.c.h.s8.bf16 %v546
        %v1015 = vunpack.c.l.s8.bf16 %v547
        %v1016 = vunpack.c.l.s8.bf16 %v548
        %v1017 = vunpack.c.l.s8.bf16 %v549
        %v1018 = vunpack.c.l.s8.bf16 %v550
        %v1019 = vunpack.c.h.s8.bf16 %v547
        %v1020 = vunpack.c.h.s8.bf16 %v548
        %v1021 = vunpack.c.h.s8.bf16 %v549
        %v1022 = vunpack.c.h.s8.bf16 %v550
        %v1023 = vunpack.c.l.s8.bf16 %v551
        %v1024 = vunpack.c.l.s8.bf16 %v552
        %v1025 = vunpack.c.l.s8.bf16 %v553
        %v1026 = vunpack.c.l.s8.bf16 %v554
        %v1027 = vunpack.c.h.s8.bf16 %v551
        %v1028 = vunpack.c.h.s8.bf16 %v552
        %v1029 = vunpack.c.h.s8.bf16 %v553
        %v1030 = vunpack.c.h.s8.bf16 %v554
        %v1031 = vunpack.c.l.s8.bf16 %v555
        %v1032 = vunpack.c.l.s8.bf16 %v556
        %v1033 = vunpack.c.l.s8.bf16 %v557
        %v1034 = vunpack.c.l.s8.bf16 %v558
        %v1035 = vunpack.c.h.s8.bf16 %v555
        %v1036 = vunpack.c.h.s8.bf16 %v556
        %v1037 = vunpack.c.h.s8.bf16 %v557
        %v1038 = vunpack.c.h.s8.bf16 %v558
        %v1039 = vunpack.c.l.s8.bf16 %v559
        %v1040 = vunpack.c.l.s8.bf16 %v560
        %v1041 = vunpack.c.l.s8.bf16 %v561
        %v1042 = vunpack.c.l.s8.bf16 %v562
        %v1043 = vunpack.c.h.s8.bf16 %v559
        %v1044 = vunpack.c.h.s8.bf16 %v560
        %v1045 = vunpack.c.h.s8.bf16 %v561
        %v1046 = vunpack.c.h.s8.bf16 %v562
        %v1047 = vunpack.c.l.s8.bf16 %v563
        %v1048 = vunpack.c.l.s8.bf16 %v564
        %v1049 = vunpack.c.l.s8.bf16 %v565
        %v1050 = vunpack.c.l.s8.bf16 %v566
        %v1051 = vunpack.c.h.s8.bf16 %v563
        %v1052 = vunpack.c.h.s8.bf16 %v564
        %v1053 = vunpack.c.h.s8.bf16 %v565
        %v1054 = vunpack.c.h.s8.bf16 %v566
        %v1055 = vunpack.c.l.s8.bf16 %v567
        %v1056 = vunpack.c.l.s8.bf16 %v568
        %v1057 = vunpack.c.l.s8.bf16 %v569
        %v1058 = vunpack.c.l.s8.bf16 %v570
        %v1059 = vunpack.c.h.s8.bf16 %v567
        %v1060 = vunpack.c.h.s8.bf16 %v568
        %v1061 = vunpack.c.h.s8.bf16 %v569
        %v1062 = vunpack.c.h.s8.bf16 %v570
        %v1063 = vunpack.c.l.s8.bf16 %v571
        %v1064 = vunpack.c.l.s8.bf16 %v572
        %v1065 = vunpack.c.l.s8.bf16 %v573
        %v1066 = vunpack.c.l.s8.bf16 %v574
        %v1067 = vunpack.c.h.s8.bf16 %v571
        %v1068 = vunpack.c.h.s8.bf16 %v572
        %v1069 = vunpack.c.h.s8.bf16 %v573
        %v1070 = vunpack.c.h.s8.bf16 %v574
        %v1071 = vunpack.c.l.s8.bf16 %v575
        %v1072 = vunpack.c.l.s8.bf16 %v576
        %v1073 = vunpack.c.l.s8.bf16 %v577
        %v1074 = vunpack.c.l.s8.bf16 %v578
        %v1075 = vunpack.c.h.s8.bf16 %v575
        %v1076 = vunpack.c.h.s8.bf16 %v576
        %v1077 = vunpack.c.h.s8.bf16 %v577
        %v1078 = vunpack.c.h.s8.bf16 %v578
        %v1079 = vunpack.c.l.s8.bf16 %v579
        %v1080 = vunpack.c.l.s8.bf16 %v580
        %v1081 = vunpack.c.l.s8.bf16 %v581
        %v1082 = vunpack.c.l.s8.bf16 %v582
        %v1083 = vunpack.c.h.s8.bf16 %v579
        %v1084 = vunpack.c.h.s8.bf16 %v580
        %v1085 = vunpack.c.h.s8.bf16 %v581
        %v1086 = vunpack.c.h.s8.bf16 %v582
        %v1087 = vunpack.c.l.s8.bf16 %v583
        %v1088 = vunpack.c.l.s8.bf16 %v584
        %v1089 = vunpack.c.l.s8.bf16 %v585
        %v1090 = vunpack.c.l.s8.bf16 %v586
        %v1091 = vunpack.c.h.s8.bf16 %v583
        %v1092 = vunpack.c.h.s8.bf16 %v584
        %v1093 = vunpack.c.h.s8.bf16 %v585
        %v1094 = vunpack.c.h.s8.bf16 %v586
        %v1095 = vunpack.c.l.s8.bf16 %v587
        %v1096 = vunpack.c.l.s8.bf16 %v588
        %v1097 = vunpack.c.l.s8.bf16 %v589
        %v1098 = vunpack.c.l.s8.bf16 %v590
        %v1099 = vunpack.c.h.s8.bf16 %v587
        %v1100 = vunpack.c.h.s8.bf16 %v588
        %v1101 = vunpack.c.h.s8.bf16 %v589
        %v1102 = vunpack.c.h.s8.bf16 %v590
        %v1103 = vunpack.c.l.s8.bf16 %v591
        %v1104 = vunpack.c.l.s8.bf16 %v592
        %v1105 = vunpack.c.l.s8.bf16 %v593
        %v1106 = vunpack.c.l.s8.bf16 %v594
        %v1107 = vunpack.c.h.s8.bf16 %v591
        %v1108 = vunpack.c.h.s8.bf16 %v592
        %v1109 = vunpack.c.h.s8.bf16 %v593
        %v1110 = vunpack.c.h.s8.bf16 %v594
        %v1111 = vunpack.c.l.s8.bf16 %v595
        %v1112 = vunpack.c.l.s8.bf16 %v596
        %v1113 = vunpack.c.l.s8.bf16 %v597
        %v1114 = vunpack.c.l.s8.bf16 %v598
        %v1115 = vunpack.c.h.s8.bf16 %v595
        %v1116 = vunpack.c.h.s8.bf16 %v596
        %v1117 = vunpack.c.h.s8.bf16 %v597
        %v1118 = vunpack.c.h.s8.bf16 %v598
        %v1119 = vunpack.c.l.s8.bf16 %v599
        %v1120 = vunpack.c.l.s8.bf16 %v600
        %v1121 = vunpack.c.l.s8.bf16 %v601
        %v1122 = vunpack.c.l.s8.bf16 %v602
        %v1123 = vunpack.c.h.s8.bf16 %v599
        %v1124 = vunpack.c.h.s8.bf16 %v600
        %v1125 = vunpack.c.h.s8.bf16 %v601
        %v1126 = vunpack.c.h.s8.bf16 %v602
        %v1127 = vunpack.c.l.s8.bf16 %v603
        %v1128 = vunpack.c.l.s8.bf16 %v604
        %v1129 = vunpack.c.l.s8.bf16 %v605
        %v1130 = vunpack.c.l.s8.bf16 %v606
        %v1131 = vunpack.c.h.s8.bf16 %v603
        %v1132 = vunpack.c.h.s8.bf16 %v604
        %v1133 = vunpack.c.h.s8.bf16 %v605
        %v1134 = vunpack.c.h.s8.bf16 %v606
        %v1135 = vunpack.c.l.s8.bf16 %v607
        %v1136 = vunpack.c.l.s8.bf16 %v608
        %v1137 = vunpack.c.l.s8.bf16 %v609
        %v1138 = vunpack.c.l.s8.bf16 %v610
        %v1139 = vunpack.c.h.s8.bf16 %v607
        %v1140 = vunpack.c.h.s8.bf16 %v608
        %v1141 = vunpack.c.h.s8.bf16 %v609
        %v1142 = vunpack.c.h.s8.bf16 %v610
        %v1143 = vunpack.c.l.s8.bf16 %v611
        %v1144 = vunpack.c.l.s8.bf16 %v612
        %v1145 = vunpack.c.l.s8.bf16 %v613
        %v1146 = vunpack.c.l.s8.bf16 %v614
        %v1147 = vunpack.c.h.s8.bf16 %v611
        %v1148 = vunpack.c.h.s8.bf16 %v612
        %v1149 = vunpack.c.h.s8.bf16 %v613
        %v1150 = vunpack.c.h.s8.bf16 %v614
        %v1151 = vunpack.c.l.s8.bf16 %v615
        %v1152 = vunpack.c.l.s8.bf16 %v616
        %v1153 = vunpack.c.l.s8.bf16 %v617
        %v1154 = vunpack.c.l.s8.bf16 %v618
        %v1155 = vunpack.c.h.s8.bf16 %v615
        %v1156 = vunpack.c.h.s8.bf16 %v616
        %v1157 = vunpack.c.h.s8.bf16 %v617
        %v1158 = vunpack.c.h.s8.bf16 %v618
        %v1159 = vunpack.c.l.s8.bf16 %v619
        %v1160 = vunpack.c.l.s8.bf16 %v620
        %v1161 = vunpack.c.l.s8.bf16 %v621
        %v1162 = vunpack.c.l.s8.bf16 %v622
        %v1163 = vunpack.c.h.s8.bf16 %v619
        %v1164 = vunpack.c.h.s8.bf16 %v620
        %v1165 = vunpack.c.h.s8.bf16 %v621
        %v1166 = vunpack.c.h.s8.bf16 %v622
        %v1167 = vunpack.c.l.s8.bf16 %v623
        %v1168 = vunpack.c.l.s8.bf16 %v624
        %v1169 = vunpack.c.l.s8.bf16 %v625
        %v1170 = vunpack.c.l.s8.bf16 %v626
        %v1171 = vunpack.c.h.s8.bf16 %v623
        %v1172 = vunpack.c.h.s8.bf16 %v624
        %v1173 = vunpack.c.h.s8.bf16 %v625
        %v1174 = vunpack.c.h.s8.bf16 %v626
        %v1175 = vunpack.c.l.s8.bf16 %v627
        %v1176 = vunpack.c.l.s8.bf16 %v628
        %v1177 = vunpack.c.l.s8.bf16 %v629
        %v1178 = vunpack.c.l.s8.bf16 %v630
        %v1179 = vunpack.c.h.s8.bf16 %v627
        %v1180 = vunpack.c.h.s8.bf16 %v628
        %v1181 = vunpack.c.h.s8.bf16 %v629
        %v1182 = vunpack.c.h.s8.bf16 %v630
        %v1183 = vunpack.c.l.s8.bf16 %v631
        %v1184 = vunpack.c.l.s8.bf16 %v632
        %v1185 = vunpack.c.l.s8.bf16 %v633
        %v1186 = vunpack.c.l.s8.bf16 %v634
        %v1187 = vunpack.c.h.s8.bf16 %v631
        %v1188 = vunpack.c.h.s8.bf16 %v632
        %v1189 = vunpack.c.h.s8.bf16 %v633
        %v1190 = vunpack.c.h.s8.bf16 %v634
        %v1191 = vunpack.c.l.s8.bf16 %v635
        %v1192 = vunpack.c.l.s8.bf16 %v636
        %v1193 = vunpack.c.l.s8.bf16 %v637
        %v1194 = vunpack.c.l.s8.bf16 %v638
        %v1195 = vunpack.c.h.s8.bf16 %v635
        %v1196 = vunpack.c.h.s8.bf16 %v636
        %v1197 = vunpack.c.h.s8.bf16 %v637
        %v1198 = vunpack.c.h.s8.bf16 %v638
        %v1199 = vunpack.c.l.s8.bf16 %v639
        %v1200 = vunpack.c.l.s8.bf16 %v640
        %v1201 = vunpack.c.l.s8.bf16 %v641
        %v1202 = vunpack.c.l.s8.bf16 %v642
        %v1203 = vunpack.c.h.s8.bf16 %v639
        %v1204 = vunpack.c.h.s8.bf16 %v640
        %v1205 = vunpack.c.h.s8.bf16 %v641
        %v1206 = vunpack.c.h.s8.bf16 %v642
        %v1207 = vunpack.c.l.s8.bf16 %v643
        %v1208 = vunpack.c.l.s8.bf16 %v644
        %v1209 = vunpack.c.l.s8.bf16 %v645
        %v1210 = vunpack.c.l.s8.bf16 %v646
        %v1211 = vunpack.c.h.s8.bf16 %v643
        %v1212 = vunpack.c.h.s8.bf16 %v644
        %v1213 = vunpack.c.h.s8.bf16 %v645
        %v1214 = vunpack.c.h.s8.bf16 %v646
        %v1215 = vunpack.c.l.s8.bf16 %v647
        %v1216 = vunpack.c.l.s8.bf16 %v648
        %v1217 = vunpack.c.l.s8.bf16 %v649
        %v1218 = vunpack.c.l.s8.bf16 %v650
        %v1219 = vunpack.c.h.s8.bf16 %v647
        %v1220 = vunpack.c.h.s8.bf16 %v648
        %v1221 = vunpack.c.h.s8.bf16 %v649
        %v1222 = vunpack.c.h.s8.bf16 %v650
        %v1223 = vunpack.c.l.s8.bf16 %v651
        %v1224 = vunpack.c.l.s8.bf16 %v652
        %v1225 = vunpack.c.l.s8.bf16 %v653
        %v1226 = vunpack.c.l.s8.bf16 %v654
        %v1227 = vunpack.c.h.s8.bf16 %v651
        %v1228 = vunpack.c.h.s8.bf16 %v652
        %v1229 = vunpack.c.h.s8.bf16 %v653
        %v1230 = vunpack.c.h.s8.bf16 %v654
        %v1231 = vunpack.c.l.s8.bf16 %v655
        %v1232 = vunpack.c.l.s8.bf16 %v656
        %v1233 = vunpack.c.l.s8.bf16 %v657
        %v1234 = vunpack.c.l.s8.bf16 %v658
        %v1235 = vunpack.c.h.s8.bf16 %v655
        %v1236 = vunpack.c.h.s8.bf16 %v656
        %v1237 = vunpack.c.h.s8.bf16 %v657
        %v1238 = vunpack.c.h.s8.bf16 %v658
        %v1239 = vunpack.c.l.s8.bf16 %v659
        %v1240 = vunpack.c.l.s8.bf16 %v660
        %v1241 = vunpack.c.l.s8.bf16 %v661
        %v1242 = vunpack.c.l.s8.bf16 %v662
        %v1243 = vunpack.c.h.s8.bf16 %v659
        %v1244 = vunpack.c.h.s8.bf16 %v660
        %v1245 = vunpack.c.h.s8.bf16 %v661
        %v1246 = vunpack.c.h.s8.bf16 %v662
        %v1247 = vunpack.c.l.s8.bf16 %v663
        %v1248 = vunpack.c.l.s8.bf16 %v664
        %v1249 = vunpack.c.l.s8.bf16 %v665
        %v1250 = vunpack.c.l.s8.bf16 %v666
        %v1251 = vunpack.c.h.s8.bf16 %v663
        %v1252 = vunpack.c.h.s8.bf16 %v664
        %v1253 = vunpack.c.h.s8.bf16 %v665
        %v1254 = vunpack.c.h.s8.bf16 %v666
        %v1255 = vunpack.c.l.s8.bf16 %v667
        %v1256 = vunpack.c.l.s8.bf16 %v668
        %v1257 = vunpack.c.l.s8.bf16 %v669
        %v1258 = vunpack.c.l.s8.bf16 %v670
        %v1259 = vunpack.c.h.s8.bf16 %v667
        %v1260 = vunpack.c.h.s8.bf16 %v668
        %v1261 = vunpack.c.h.s8.bf16 %v669
        %v1262 = vunpack.c.h.s8.bf16 %v670
        %v1263 = vunpack.c.l.s8.bf16 %v671
        %v1264 = vunpack.c.l.s8.bf16 %v672
        %v1265 = vunpack.c.l.s8.bf16 %v673
        %v1266 = vunpack.c.l.s8.bf16 %v674
        %v1267 = vunpack.c.h.s8.bf16 %v671
        %v1268 = vunpack.c.h.s8.bf16 %v672
        %v1269 = vunpack.c.h.s8.bf16 %v673
        %v1270 = vunpack.c.h.s8.bf16 %v674
        %v1271 = vunpack.c.l.s8.bf16 %v675
        %v1272 = vunpack.c.l.s8.bf16 %v676
        %v1273 = vunpack.c.l.s8.bf16 %v677
        %v1274 = vunpack.c.l.s8.bf16 %v678
        %v1275 = vunpack.c.h.s8.bf16 %v675
        %v1276 = vunpack.c.h.s8.bf16 %v676
        %v1277 = vunpack.c.h.s8.bf16 %v677
        %v1278 = vunpack.c.h.s8.bf16 %v678
        %v1279 = vunpack.c.l.s8.bf16 %v679
        %v1280 = vunpack.c.l.s8.bf16 %v680
        %v1281 = vunpack.c.l.s8.bf16 %v681
        %v1282 = vunpack.c.l.s8.bf16 %v682
        %v1283 = vunpack.c.h.s8.bf16 %v679
        %v1284 = vunpack.c.h.s8.bf16 %v680
        %v1285 = vunpack.c.h.s8.bf16 %v681
        %v1286 = vunpack.c.h.s8.bf16 %v682
        %v1287 = vunpack.c.l.s8.bf16 %v683
        %v1288 = vunpack.c.l.s8.bf16 %v684
        %v1289 = vunpack.c.l.s8.bf16 %v685
        %v1290 = vunpack.c.l.s8.bf16 %v686
        %v1291 = vunpack.c.h.s8.bf16 %v683
        %v1292 = vunpack.c.h.s8.bf16 %v684
        %v1293 = vunpack.c.h.s8.bf16 %v685
        %v1294 = vunpack.c.h.s8.bf16 %v686
        %v1295 = vunpack.c.l.s8.bf16 %v687
        %v1296 = vunpack.c.l.s8.bf16 %v688
        %v1297 = vunpack.c.l.s8.bf16 %v689
        %v1298 = vunpack.c.l.s8.bf16 %v690
        %v1299 = vunpack.c.h.s8.bf16 %v687
        %v1300 = vunpack.c.h.s8.bf16 %v688
        %v1301 = vunpack.c.h.s8.bf16 %v689
        %v1302 = vunpack.c.h.s8.bf16 %v690
        %v1303 = vunpack.c.l.s8.bf16 %v691
        %v1304 = vunpack.c.l.s8.bf16 %v692
        %v1305 = vunpack.c.l.s8.bf16 %v693
        %v1306 = vunpack.c.l.s8.bf16 %v694
        %v1307 = vunpack.c.h.s8.bf16 %v691
        %v1308 = vunpack.c.h.s8.bf16 %v692
        %v1309 = vunpack.c.h.s8.bf16 %v693
        %v1310 = vunpack.c.h.s8.bf16 %v694
        %v1311 = vunpack.c.l.s8.bf16 %v695
        %v1312 = vunpack.c.l.s8.bf16 %v696
        %v1313 = vunpack.c.l.s8.bf16 %v697
        %v1314 = vunpack.c.l.s8.bf16 %v698
        %v1315 = vunpack.c.h.s8.bf16 %v695
        %v1316 = vunpack.c.h.s8.bf16 %v696
        %v1317 = vunpack.c.h.s8.bf16 %v697
        %v1318 = vunpack.c.h.s8.bf16 %v698
        %v1319 = vunpack.c.l.s8.bf16 %v699
        %v1320 = vunpack.c.l.s8.bf16 %v700
        %v1321 = vunpack.c.l.s8.bf16 %v701
        %v1322 = vunpack.c.l.s8.bf16 %v702
        %v1323 = vunpack.c.h.s8.bf16 %v699
        %v1324 = vunpack.c.h.s8.bf16 %v700
        %v1325 = vunpack.c.h.s8.bf16 %v701
        %v1326 = vunpack.c.h.s8.bf16 %v702
        %v1327 = vunpack.c.l.s8.bf16 %v703
        %v1328 = vunpack.c.l.s8.bf16 %v704
        %v1329 = vunpack.c.l.s8.bf16 %v705
        %v1330 = vunpack.c.l.s8.bf16 %v706
        %v1331 = vunpack.c.h.s8.bf16 %v703
        %v1332 = vunpack.c.h.s8.bf16 %v704
        %v1333 = vunpack.c.h.s8.bf16 %v705
        %v1334 = vunpack.c.h.s8.bf16 %v706
        %v1335 = vunpack.c.l.s8.bf16 %v707
        %v1336 = vunpack.c.l.s8.bf16 %v708
        %v1337 = vunpack.c.l.s8.bf16 %v709
        %v1338 = vunpack.c.l.s8.bf16 %v710
        %v1339 = vunpack.c.h.s8.bf16 %v707
        %v1340 = vunpack.c.h.s8.bf16 %v708
        %v1341 = vunpack.c.h.s8.bf16 %v709
        %v1342 = vunpack.c.h.s8.bf16 %v710
        %v1343 = vunpack.c.l.s8.bf16 %v711
        %v1344 = vunpack.c.l.s8.bf16 %v712
        %v1345 = vunpack.c.l.s8.bf16 %v713
        %v1346 = vunpack.c.l.s8.bf16 %v714
        %v1347 = vunpack.c.h.s8.bf16 %v711
        %v1348 = vunpack.c.h.s8.bf16 %v712
        %v1349 = vunpack.c.h.s8.bf16 %v713
        %v1350 = vunpack.c.h.s8.bf16 %v714
        %v1351 = vunpack.c.l.s8.bf16 %v715
        %v1352 = vunpack.c.l.s8.bf16 %v716
        %v1353 = vunpack.c.l.s8.bf16 %v717
        %v1354 = vunpack.c.l.s8.bf16 %v718
        %v1355 = vunpack.c.h.s8.bf16 %v715
        %v1356 = vunpack.c.h.s8.bf16 %v716
        %v1357 = vunpack.c.h.s8.bf16 %v717
        %v1358 = vunpack.c.h.s8.bf16 %v718
        %v1359 = vunpack.c.l.s8.bf16 %v719
        %v1360 = vunpack.c.l.s8.bf16 %v720
        %v1361 = vunpack.c.l.s8.bf16 %v721
        %v1362 = vunpack.c.l.s8.bf16 %v722
        %v1363 = vunpack.c.h.s8.bf16 %v719
        %v1364 = vunpack.c.h.s8.bf16 %v720
        %v1365 = vunpack.c.h.s8.bf16 %v721
        %v1366 = vunpack.c.h.s8.bf16 %v722
        %v1367 = vunpack.c.l.s8.bf16 %v723
        %v1368 = vunpack.c.l.s8.bf16 %v724
        %v1369 = vunpack.c.l.s8.bf16 %v725
        %v1370 = vunpack.c.l.s8.bf16 %v726
        %v1371 = vunpack.c.h.s8.bf16 %v723
        %v1372 = vunpack.c.h.s8.bf16 %v724
        %v1373 = vunpack.c.h.s8.bf16 %v725
        %v1374 = vunpack.c.h.s8.bf16 %v726
        %v1375 = vunpack.c.l.s8.bf16 %v727
        %v1376 = vunpack.c.l.s8.bf16 %v728
        %v1377 = vunpack.c.l.s8.bf16 %v729
        %v1378 = vunpack.c.l.s8.bf16 %v730
        %v1379 = vunpack.c.h.s8.bf16 %v727
        %v1380 = vunpack.c.h.s8.bf16 %v728
        %v1381 = vunpack.c.h.s8.bf16 %v729
        %v1382 = vunpack.c.h.s8.bf16 %v730
        %v1383 = vunpack.c.l.s8.bf16 %v731
        %v1384 = vunpack.c.l.s8.bf16 %v732
        %v1385 = vunpack.c.l.s8.bf16 %v733
        %v1386 = vunpack.c.l.s8.bf16 %v734
        %v1387 = vunpack.c.h.s8.bf16 %v731
        %v1388 = vunpack.c.h.s8.bf16 %v732
        %v1389 = vunpack.c.h.s8.bf16 %v733
        %v1390 = vunpack.c.h.s8.bf16 %v734
        %v1391 = vunpack.c.l.s8.bf16 %v735
        %v1392 = vunpack.c.l.s8.bf16 %v736
        %v1393 = vunpack.c.l.s8.bf16 %v737
        %v1394 = vunpack.c.l.s8.bf16 %v738
        %v1395 = vunpack.c.h.s8.bf16 %v735
        %v1396 = vunpack.c.h.s8.bf16 %v736
        %v1397 = vunpack.c.h.s8.bf16 %v737
        %v1398 = vunpack.c.h.s8.bf16 %v738
        %v1399 = vunpack.c.l.s8.bf16 %v739
        %v1400 = vunpack.c.l.s8.bf16 %v740
        %v1401 = vunpack.c.l.s8.bf16 %v741
        %v1402 = vunpack.c.l.s8.bf16 %v742
        %v1403 = vunpack.c.h.s8.bf16 %v739
        %v1404 = vunpack.c.h.s8.bf16 %v740
        %v1405 = vunpack.c.h.s8.bf16 %v741
        %v1406 = vunpack.c.h.s8.bf16 %v742
        %v1407 = vunpack.c.l.s8.bf16 %v743
        %v1408 = vunpack.c.l.s8.bf16 %v744
        %v1409 = vunpack.c.l.s8.bf16 %v745
        %v1410 = vunpack.c.l.s8.bf16 %v746
        %v1411 = vunpack.c.h.s8.bf16 %v743
        %v1412 = vunpack.c.h.s8.bf16 %v744
        %v1413 = vunpack.c.h.s8.bf16 %v745
        %v1414 = vunpack.c.h.s8.bf16 %v746
        %v1415 = vunpack.c.l.s8.bf16 %v747
        %v1416 = vunpack.c.l.s8.bf16 %v748
        %v1417 = vunpack.c.l.s8.bf16 %v749
        %v1418 = vunpack.c.l.s8.bf16 %v750
        %v1419 = vunpack.c.h.s8.bf16 %v747
        %v1420 = vunpack.c.h.s8.bf16 %v748
        %v1421 = vunpack.c.h.s8.bf16 %v749
        %v1422 = vunpack.c.h.s8.bf16 %v750
        %v1423 = vunpack.c.l.s8.bf16 %v751
        %v1424 = vunpack.c.l.s8.bf16 %v752
        %v1425 = vunpack.c.l.s8.bf16 %v753
        %v1426 = vunpack.c.l.s8.bf16 %v754
        %v1427 = vunpack.c.h.s8.bf16 %v751
        %v1428 = vunpack.c.h.s8.bf16 %v752
        %v1429 = vunpack.c.h.s8.bf16 %v753
        %v1430 = vunpack.c.h.s8.bf16 %v754
        %v1431 = vunpack.c.l.s8.bf16 %v755
        %v1432 = vunpack.c.l.s8.bf16 %v756
        %v1433 = vunpack.c.l.s8.bf16 %v757
        %v1434 = vunpack.c.l.s8.bf16 %v758
        %v1435 = vunpack.c.h.s8.bf16 %v755
        %v1436 = vunpack.c.h.s8.bf16 %v756
        %v1437 = vunpack.c.h.s8.bf16 %v757
        %v1438 = vunpack.c.h.s8.bf16 %v758
        %v1439 = vunpack.c.l.s8.bf16 %v759
        %v1440 = vunpack.c.l.s8.bf16 %v760
        %v1441 = vunpack.c.l.s8.bf16 %v761
        %v1442 = vunpack.c.l.s8.bf16 %v762
        %v1443 = vunpack.c.h.s8.bf16 %v759
        %v1444 = vunpack.c.h.s8.bf16 %v760
        %v1445 = vunpack.c.h.s8.bf16 %v761
        %v1446 = vunpack.c.h.s8.bf16 %v762
        %v1447 = vunpack.c.l.s8.bf16 %v763
        %v1448 = vunpack.c.l.s8.bf16 %v764
        %v1449 = vunpack.c.l.s8.bf16 %v765
        %v1450 = vunpack.c.l.s8.bf16 %v766
        %v1451 = vunpack.c.h.s8.bf16 %v763
        %v1452 = vunpack.c.h.s8.bf16 %v764
        %v1453 = vunpack.c.h.s8.bf16 %v765
        %v1454 = vunpack.c.h.s8.bf16 %v766
        %v1455 = vunpack.c.l.s8.bf16 %v767
        %v1456 = vunpack.c.l.s8.bf16 %v768
        %v1457 = vunpack.c.l.s8.bf16 %v769
        %v1458 = vunpack.c.l.s8.bf16 %v770
        %v1459 = vunpack.c.h.s8.bf16 %v767
        %v1460 = vunpack.c.h.s8.bf16 %v768
        %v1461 = vunpack.c.h.s8.bf16 %v769
        %v1462 = vunpack.c.h.s8.bf16 %v770
        %v1463 = vunpack.c.l.s8.bf16 %v771
        %v1464 = vunpack.c.l.s8.bf16 %v772
        %v1465 = vunpack.c.l.s8.bf16 %v773
        %v1466 = vunpack.c.l.s8.bf16 %v774
        %v1467 = vunpack.c.h.s8.bf16 %v771
        %v1468 = vunpack.c.h.s8.bf16 %v772
        %v1469 = vunpack.c.h.s8.bf16 %v773
        %v1470 = vunpack.c.h.s8.bf16 %v774
        %v1471 = vunpack.c.l.s8.bf16 %v775
        %v1472 = vunpack.c.l.s8.bf16 %v776
        %v1473 = vunpack.c.l.s8.bf16 %v777
        %v1474 = vunpack.c.l.s8.bf16 %v778
        %v1475 = vunpack.c.h.s8.bf16 %v775
        %v1476 = vunpack.c.h.s8.bf16 %v776
        %v1477 = vunpack.c.h.s8.bf16 %v777
        %v1478 = vunpack.c.h.s8.bf16 %v778
        %v1479 = vunpack.c.l.s8.bf16 %v779
        %v1480 = vunpack.c.l.s8.bf16 %v780
        %v1481 = vunpack.c.l.s8.bf16 %v781
        %v1482 = vunpack.c.l.s8.bf16 %v782
        %v1483 = vunpack.c.h.s8.bf16 %v779
        %v1484 = vunpack.c.h.s8.bf16 %v780
        %v1485 = vunpack.c.h.s8.bf16 %v781
        %v1486 = vunpack.c.h.s8.bf16 %v782
        %v1487 = vunpack.c.l.s8.bf16 %v783
        %v1488 = vunpack.c.l.s8.bf16 %v784
        %v1489 = vunpack.c.l.s8.bf16 %v785
        %v1490 = vunpack.c.l.s8.bf16 %v786
        %v1491 = vunpack.c.h.s8.bf16 %v783
        %v1492 = vunpack.c.h.s8.bf16 %v784
        %v1493 = vunpack.c.h.s8.bf16 %v785
        %v1494 = vunpack.c.h.s8.bf16 %v786
        %v1495 = vunpack.c.l.s8.bf16 %v787
        %v1496 = vunpack.c.l.s8.bf16 %v788
        %v1497 = vunpack.c.l.s8.bf16 %v789
        %v1498 = vunpack.c.l.s8.bf16 %v790
        %v1499 = vunpack.c.h.s8.bf16 %v787
        %v1500 = vunpack.c.h.s8.bf16 %v788
        %v1501 = vunpack.c.h.s8.bf16 %v789
        %v1502 = vunpack.c.h.s8.bf16 %v790
        %v1503 = vunpack.c.l.s8.bf16 %v791
        %v1504 = vunpack.c.l.s8.bf16 %v792
        %v1505 = vunpack.c.l.s8.bf16 %v793
        %v1506 = vunpack.c.l.s8.bf16 %v794
        %v1507 = vunpack.c.h.s8.bf16 %v791
        %v1508 = vunpack.c.h.s8.bf16 %v792
        %v1509 = vunpack.c.h.s8.bf16 %v793
        %v1510 = vunpack.c.h.s8.bf16 %v794
        %v1511 = vunpack.c.l.s8.bf16 %v795
        %v1512 = vunpack.c.l.s8.bf16 %v796
        %v1513 = vunpack.c.l.s8.bf16 %v797
        %v1514 = vunpack.c.l.s8.bf16 %v798
        %v1515 = vunpack.c.h.s8.bf16 %v795
        %v1516 = vunpack.c.h.s8.bf16 %v796
        %v1517 = vunpack.c.h.s8.bf16 %v797
        %v1518 = vunpack.c.h.s8.bf16 %v798
        %v1519 = vunpack.c.l.s8.bf16 %v799
        %v1520 = vunpack.c.l.s8.bf16 %v800
        %v1521 = vunpack.c.l.s8.bf16 %v801
        %v1522 = vunpack.c.l.s8.bf16 %v802
        %v1523 = vunpack.c.h.s8.bf16 %v799
        %v1524 = vunpack.c.h.s8.bf16 %v800
        %v1525 = vunpack.c.h.s8.bf16 %v801
        %v1526 = vunpack.c.h.s8.bf16 %v802
        %v1527 = vunpack.c.l.s8.bf16 %v803
        %v1528 = vunpack.c.l.s8.bf16 %v804
        %v1529 = vunpack.c.l.s8.bf16 %v805
        %v1530 = vunpack.c.l.s8.bf16 %v806
        %v1531 = vunpack.c.h.s8.bf16 %v803
        %v1532 = vunpack.c.h.s8.bf16 %v804
        %v1533 = vunpack.c.h.s8.bf16 %v805
        %v1534 = vunpack.c.h.s8.bf16 %v806
        %v1535 = vunpack.c.l.s8.bf16 %v807
        %v1536 = vunpack.c.l.s8.bf16 %v808
        %v1537 = vunpack.c.l.s8.bf16 %v809
        %v1538 = vunpack.c.l.s8.bf16 %v810
        %v1539 = vunpack.c.h.s8.bf16 %v807
        %v1540 = vunpack.c.h.s8.bf16 %v808
        %v1541 = vunpack.c.h.s8.bf16 %v809
        %v1542 = vunpack.c.h.s8.bf16 %v810
        %v1543 = vunpack.c.l.s8.bf16 %v811
        %v1544 = vunpack.c.l.s8.bf16 %v812
        %v1545 = vunpack.c.l.s8.bf16 %v813
        %v1546 = vunpack.c.l.s8.bf16 %v814
        %v1547 = vunpack.c.h.s8.bf16 %v811
        %v1548 = vunpack.c.h.s8.bf16 %v812
        %v1549 = vunpack.c.h.s8.bf16 %v813
        %v1550 = vunpack.c.h.s8.bf16 %v814
        %v1551 = vunpack.c.l.s8.bf16 %v815
        %v1552 = vunpack.c.l.s8.bf16 %v816
        %v1553 = vunpack.c.l.s8.bf16 %v817
        %v1554 = vunpack.c.l.s8.bf16 %v818
        %v1555 = vunpack.c.h.s8.bf16 %v815
        %v1556 = vunpack.c.h.s8.bf16 %v816
        %v1557 = vunpack.c.h.s8.bf16 %v817
        %v1558 = vunpack.c.h.s8.bf16 %v818
        %v1559 = vunpack.c.l.s8.bf16 %v819
        %v1560 = vunpack.c.l.s8.bf16 %v820
        %v1561 = vunpack.c.l.s8.bf16 %v821
        %v1562 = vunpack.c.l.s8.bf16 %v822
        %v1563 = vunpack.c.h.s8.bf16 %v819
        %v1564 = vunpack.c.h.s8.bf16 %v820
        %v1565 = vunpack.c.h.s8.bf16 %v821
        %v1566 = vunpack.c.h.s8.bf16 %v822
        %v1567 = vunpack.c.l.s8.bf16 %v823
        %v1568 = vunpack.c.l.s8.bf16 %v824
        %v1569 = vunpack.c.l.s8.bf16 %v825
        %v1570 = vunpack.c.l.s8.bf16 %v826
        %v1571 = vunpack.c.h.s8.bf16 %v823
        %v1572 = vunpack.c.h.s8.bf16 %v824
        %v1573 = vunpack.c.h.s8.bf16 %v825
        %v1574 = vunpack.c.h.s8.bf16 %v826
        %v1575 = vunpack.c.l.s8.bf16 %v827
        %v1576 = vunpack.c.l.s8.bf16 %v828
        %v1577 = vunpack.c.l.s8.bf16 %v829
        %v1578 = vunpack.c.l.s8.bf16 %v830
        %v1579 = vunpack.c.h.s8.bf16 %v827
        %v1580 = vunpack.c.h.s8.bf16 %v828
        %v1581 = vunpack.c.h.s8.bf16 %v829
        %v1582 = vunpack.c.h.s8.bf16 %v830
        %v1583 = vunpack.c.l.s8.bf16 %v831
        %v1584 = vunpack.c.l.s8.bf16 %v832
        %v1585 = vunpack.c.l.s8.bf16 %v833
        %v1586 = vunpack.c.l.s8.bf16 %v834
        %v1587 = vunpack.c.h.s8.bf16 %v831
        %v1588 = vunpack.c.h.s8.bf16 %v832
        %v1589 = vunpack.c.h.s8.bf16 %v833
        %v1590 = vunpack.c.h.s8.bf16 %v834
        %v1591 = vunpack.c.l.s8.bf16 %v835
        %v1592 = vunpack.c.l.s8.bf16 %v836
        %v1593 = vunpack.c.l.s8.bf16 %v837
        %v1594 = vunpack.c.l.s8.bf16 %v838
        %v1595 = vunpack.c.h.s8.bf16 %v835
        %v1596 = vunpack.c.h.s8.bf16 %v836
        %v1597 = vunpack.c.h.s8.bf16 %v837
        %v1598 = vunpack.c.h.s8.bf16 %v838
        %v1599 = vunpack.c.l.s8.bf16 %v839
        %v1600 = vunpack.c.l.s8.bf16 %v840
        %v1601 = vunpack.c.l.s8.bf16 %v841
        %v1602 = vunpack.c.l.s8.bf16 %v842
        %v1603 = vunpack.c.h.s8.bf16 %v839
        %v1604 = vunpack.c.h.s8.bf16 %v840
        %v1605 = vunpack.c.h.s8.bf16 %v841
        %v1606 = vunpack.c.h.s8.bf16 %v842
        %v1607 = vunpack.c.l.s8.bf16 %v843
        %v1608 = vunpack.c.l.s8.bf16 %v844
        %v1609 = vunpack.c.l.s8.bf16 %v845
        %v1610 = vunpack.c.l.s8.bf16 %v846
        %v1611 = vunpack.c.h.s8.bf16 %v843
        %v1612 = vunpack.c.h.s8.bf16 %v844
        %v1613 = vunpack.c.h.s8.bf16 %v845
        %v1614 = vunpack.c.h.s8.bf16 %v846
        %v1615 = vunpack.c.l.s8.bf16 %v847
        %v1616 = vunpack.c.l.s8.bf16 %v848
        %v1617 = vunpack.c.l.s8.bf16 %v849
        %v1618 = vunpack.c.l.s8.bf16 %v850
        %v1619 = vunpack.c.h.s8.bf16 %v847
        %v1620 = vunpack.c.h.s8.bf16 %v848
        %v1621 = vunpack.c.h.s8.bf16 %v849
        %v1622 = vunpack.c.h.s8.bf16 %v850
        %v1623 = vunpack.c.l.s8.bf16 %v851
        %v1624 = vunpack.c.l.s8.bf16 %v852
        %v1625 = vunpack.c.l.s8.bf16 %v853
        %v1626 = vunpack.c.l.s8.bf16 %v854
        %v1627 = vunpack.c.h.s8.bf16 %v851
        %v1628 = vunpack.c.h.s8.bf16 %v852
        %v1629 = vunpack.c.h.s8.bf16 %v853
        %v1630 = vunpack.c.h.s8.bf16 %v854
        %v1631 = vunpack.c.l.s8.bf16 %v855
        %v1632 = vunpack.c.l.s8.bf16 %v856
        %v1633 = vunpack.c.l.s8.bf16 %v857
        %v1634 = vunpack.c.l.s8.bf16 %v858
        %v1635 = vunpack.c.h.s8.bf16 %v855
        %v1636 = vunpack.c.h.s8.bf16 %v856
        %v1637 = vunpack.c.h.s8.bf16 %v857
        %v1638 = vunpack.c.h.s8.bf16 %v858
        %v1639 = vunpack.c.l.s8.bf16 %v859
        %v1640 = vunpack.c.l.s8.bf16 %v860
        %v1641 = vunpack.c.l.s8.bf16 %v861
        %v1642 = vunpack.c.l.s8.bf16 %v862
        %v1643 = vunpack.c.h.s8.bf16 %v859
        %v1644 = vunpack.c.h.s8.bf16 %v860
        %v1645 = vunpack.c.h.s8.bf16 %v861
        %v1646 = vunpack.c.h.s8.bf16 %v862
        %v1647 = vunpack.c.l.s8.bf16 %v863
        %v1648 = vunpack.c.l.s8.bf16 %v864
        %v1649 = vunpack.c.l.s8.bf16 %v865
        %v1650 = vunpack.c.l.s8.bf16 %v866
        %v1651 = vunpack.c.h.s8.bf16 %v863
        %v1652 = vunpack.c.h.s8.bf16 %v864
        %v1653 = vunpack.c.h.s8.bf16 %v865
        %v1654 = vunpack.c.h.s8.bf16 %v866
        %v1655 = vunpack.c.l.s8.bf16 %v867
        %v1656 = vunpack.c.l.s8.bf16 %v868
        %v1657 = vunpack.c.l.s8.bf16 %v869
        %v1658 = vunpack.c.l.s8.bf16 %v870
        %v1659 = vunpack.c.h.s8.bf16 %v867
        %v1660 = vunpack.c.h.s8.bf16 %v868
        %v1661 = vunpack.c.h.s8.bf16 %v869
        %v1662 = vunpack.c.h.s8.bf16 %v870
        %v1663 = vunpack.c.l.s8.bf16 %v871
        %v1664 = vunpack.c.l.s8.bf16 %v872
        %v1665 = vunpack.c.l.s8.bf16 %v873
        %v1666 = vunpack.c.l.s8.bf16 %v874
        %v1667 = vunpack.c.h.s8.bf16 %v871
        %v1668 = vunpack.c.h.s8.bf16 %v872
        %v1669 = vunpack.c.h.s8.bf16 %v873
        %v1670 = vunpack.c.h.s8.bf16 %v874
        %v1671 = vunpack.c.l.s8.bf16 %v875
        %v1672 = vunpack.c.l.s8.bf16 %v876
        %v1673 = vunpack.c.l.s8.bf16 %v877
        %v1674 = vunpack.c.l.s8.bf16 %v878
        %v1675 = vunpack.c.h.s8.bf16 %v875
        %v1676 = vunpack.c.h.s8.bf16 %v876
        %v1677 = vunpack.c.h.s8.bf16 %v877
        %v1678 = vunpack.c.h.s8.bf16 %v878
        %1679 = vmatprep.subr.bf16.mxu0 %v908
        %1680 = vmatpush1.bf16.msra.mxu0 %v907
        %1681 = vmatprep.subr.bf16.mxu0 %v904
        %1682 = vmatpush1.bf16.msra.mxu0 %v903
        %1683 = vmatprep.subr.bf16.mxu0 %v900
        %1684 = vmatpush1.bf16.msra.mxu0 %v899
        %1685 = vmatprep.subr.bf16.mxu0 %v896
        %1686 = vmatpush1.bf16.msra.mxu0 %v895
        %1687 = vmatprep.subr.bf16.mxu0 %v892
        %1688 = vmatpush1.bf16.msra.mxu0 %v891
        %1689 = vmatprep.subr.bf16.mxu0 %v888
        %1690 = vmatpush1.bf16.msra.mxu0 %v887
        %1691 = vmatprep.subr.bf16.mxu0 %v884
        %1692 = vmatpush1.bf16.msra.mxu0 %v883
        %1693 = vmatprep.subr.bf16.mxu0 %v880
        %1694 = vmatpush1.bf16.msra.mxu0 %v879
        %1695 = vmatprep.subr.bf16.mxu0 %v940
        %1696 = vmatpush2.bf16.msra.mxu0 %v939
        %1697 = vmatprep.subr.bf16.mxu0 %v936
        %1698 = vmatpush2.bf16.msra.mxu0 %v935
        %1699 = vmatprep.subr.bf16.mxu0 %v932
        %1700 = vmatpush2.bf16.msra.mxu0 %v931
        %1701 = vmatprep.subr.bf16.mxu0 %v928
        %1702 = vmatpush2.bf16.msra.mxu0 %v927
        %1703 = vmatprep.subr.bf16.mxu0 %v924
        %1704 = vmatpush2.bf16.msra.mxu0 %v923
        %1705 = vmatprep.subr.bf16.mxu0 %v920
        %1706 = vmatpush2.bf16.msra.mxu0 %v919
        %1707 = vmatprep.subr.bf16.mxu0 %v916
        %1708 = vmatpush2.bf16.msra.mxu0 %v915
        %1709 = vmatprep.subr.bf16.mxu0 %v912
        %1710 = vmatpush2.bf16.msra.mxu0 %v911
        %1711 = vmatprep.mubr.bf16.mxu0 %v455
        %1712 = vmatmul.mubr.bf16.gmra.mxu0 %v454
        %v1713 = vpop.f32.mrf.mxu0
        %v1714 = vadd.f32 0.0, %v1713
        %v1715 = vpop.f32.mrf.mxu0
        %v1716 = vadd.f32 0.0, %v1715
        %v1717 = vpop.f32.mrf.mxu0
        %v1718 = vpop.f32.mrf.mxu0
        %1719 = vdwg.mxu0
        %1720 = vmatprep.subr.bf16.mxu0 %v972
        %1721 = vmatpush1.bf16.msra.mxu0 %v971
        %1722 = vmatprep.subr.bf16.mxu0 %v968
        %1723 = vmatpush1.bf16.msra.mxu0 %v967
        %1724 = vmatprep.subr.bf16.mxu0 %v964
        %1725 = vmatpush1.bf16.msra.mxu0 %v963
        %1726 = vmatprep.subr.bf16.mxu0 %v960
        %1727 = vmatpush1.bf16.msra.mxu0 %v959
        %1728 = vmatprep.subr.bf16.mxu0 %v956
        %1729 = vmatpush1.bf16.msra.mxu0 %v955
        %1730 = vmatprep.subr.bf16.mxu0 %v952
        %1731 = vmatpush1.bf16.msra.mxu0 %v951
        %1732 = vmatprep.subr.bf16.mxu0 %v948
        %1733 = vmatpush1.bf16.msra.mxu0 %v947
        %1734 = vmatprep.subr.bf16.mxu0 %v944
        %1735 = vmatpush1.bf16.msra.mxu0 %v943
        %1736 = vmatprep.subr.bf16.mxu0 %v1004
        %1737 = vmatpush2.bf16.msra.mxu0 %v1003
        %1738 = vmatprep.subr.bf16.mxu0 %v1000
        %1739 = vmatpush2.bf16.msra.mxu0 %v999
        %1740 = vmatprep.subr.bf16.mxu0 %v996
        %1741 = vmatpush2.bf16.msra.mxu0 %v995
        %1742 = vmatprep.subr.bf16.mxu0 %v992
        %1743 = vmatpush2.bf16.msra.mxu0 %v991
        %1744 = vmatprep.subr.bf16.mxu0 %v988
        %1745 = vmatpush2.bf16.msra.mxu0 %v987
        %1746 = vmatprep.subr.bf16.mxu0 %v984
        %1747 = vmatpush2.bf16.msra.mxu0 %v983
        %1748 = vmatprep.subr.bf16.mxu0 %v980
        %1749 = vmatpush2.bf16.msra.mxu0 %v979
        %1750 = vmatprep.subr.bf16.mxu0 %v976
        %1751 = vmatpush2.bf16.msra.mxu0 %v975
        %1752 = vmatprep.mubr.bf16.mxu0 %v457
        %1753 = vmatmul.mubr.bf16.gmra.mxu0 %v456
        %v1754 = vpop.f32.mrf.mxu0
        %v1755 = vadd.f32 %v1714, %v1754
        %v1756 = vpop.f32.mrf.mxu0
        %v1757 = vadd.f32 %v1716, %v1756
        %v1758 = vpop.f32.mrf.mxu0
        %v1759 = vpop.f32.mrf.mxu0
        %1760 = vdwg.mxu0
        %1761 = vmatprep.subr.bf16.mxu0 %v1036
        %1762 = vmatpush1.bf16.msra.mxu0 %v1035
        %1763 = vmatprep.subr.bf16.mxu0 %v1032
        %1764 = vmatpush1.bf16.msra.mxu0 %v1031
        %1765 = vmatprep.subr.bf16.mxu0 %v1028
        %1766 = vmatpush1.bf16.msra.mxu0 %v1027
        %1767 = vmatprep.subr.bf16.mxu0 %v1024
        %1768 = vmatpush1.bf16.msra.mxu0 %v1023
        %1769 = vmatprep.subr.bf16.mxu0 %v1020
        %1770 = vmatpush1.bf16.msra.mxu0 %v1019
        %1771 = vmatprep.subr.bf16.mxu0 %v1016
        %1772 = vmatpush1.bf16.msra.mxu0 %v1015
        %1773 = vmatprep.subr.bf16.mxu0 %v1012
        %1774 = vmatpush1.bf16.msra.mxu0 %v1011
        %1775 = vmatprep.subr.bf16.mxu0 %v1008
        %1776 = vmatpush1.bf16.msra.mxu0 %v1007
        %1777 = vmatprep.subr.bf16.mxu0 %v1068
        %1778 = vmatpush2.bf16.msra.mxu0 %v1067
        %1779 = vmatprep.subr.bf16.mxu0 %v1064
        %1780 = vmatpush2.bf16.msra.mxu0 %v1063
        %1781 = vmatprep.subr.bf16.mxu0 %v1060
        %1782 = vmatpush2.bf16.msra.mxu0 %v1059
        %1783 = vmatprep.subr.bf16.mxu0 %v1056
        %1784 = vmatpush2.bf16.msra.mxu0 %v1055
        %1785 = vmatprep.subr.bf16.mxu0 %v1052
        %1786 = vmatpush2.bf16.msra.mxu0 %v1051
        %1787 = vmatprep.subr.bf16.mxu0 %v1048
        %1788 = vmatpush2.bf16.msra.mxu0 %v1047
        %1789 = vmatprep.subr.bf16.mxu0 %v1044
        %1790 = vmatpush2.bf16.msra.mxu0 %v1043
        %1791 = vmatprep.subr.bf16.mxu0 %v1040
        %1792 = vmatpush2.bf16.msra.mxu0 %v1039
        %1793 = vmatprep.mubr.bf16.mxu0 %v459
        %1794 = vmatmul.mubr.bf16.gmra.mxu0 %v458
        %v1795 = vpop.f32.mrf.mxu0
        %v1796 = vadd.f32 %v1755, %v1795
        %v1797 = vpop.f32.mrf.mxu0
        %v1798 = vadd.f32 %v1757, %v1797
        %v1799 = vpop.f32.mrf.mxu0
        %v1800 = vpop.f32.mrf.mxu0
        %1801 = vdwg.mxu0
        %1802 = vmatprep.subr.bf16.mxu0 %v1100
        %1803 = vmatpush1.bf16.msra.mxu0 %v1099
        %1804 = vmatprep.subr.bf16.mxu0 %v1096
        %1805 = vmatpush1.bf16.msra.mxu0 %v1095
        %1806 = vmatprep.subr.bf16.mxu0 %v1092
        %1807 = vmatpush1.bf16.msra.mxu0 %v1091
        %1808 = vmatprep.subr.bf16.mxu0 %v1088
        %1809 = vmatpush1.bf16.msra.mxu0 %v1087
        %1810 = vmatprep.subr.bf16.mxu0 %v1084
        %1811 = vmatpush1.bf16.msra.mxu0 %v1083
        %1812 = vmatprep.subr.bf16.mxu0 %v1080
        %1813 = vmatpush1.bf16.msra.mxu0 %v1079
        %1814 = vmatprep.subr.bf16.mxu0 %v1076
        %1815 = vmatpush1.bf16.msra.mxu0 %v1075
        %1816 = vmatprep.subr.bf16.mxu0 %v1072
        %1817 = vmatpush1.bf16.msra.mxu0 %v1071
        %1818 = vmatprep.subr.bf16.mxu0 %v1132
        %1819 = vmatpush2.bf16.msra.mxu0 %v1131
        %1820 = vmatprep.subr.bf16.mxu0 %v1128
        %1821 = vmatpush2.bf16.msra.mxu0 %v1127
        %1822 = vmatprep.subr.bf16.mxu0 %v1124
        %1823 = vmatpush2.bf16.msra.mxu0 %v1123
        %1824 = vmatprep.subr.bf16.mxu0 %v1120
        %1825 = vmatpush2.bf16.msra.mxu0 %v1119
        %1826 = vmatprep.subr.bf16.mxu0 %v1116
        %1827 = vmatpush2.bf16.msra.mxu0 %v1115
        %1828 = vmatprep.subr.bf16.mxu0 %v1112
        %1829 = vmatpush2.bf16.msra.mxu0 %v1111
        %1830 = vmatprep.subr.bf16.mxu0 %v1108
        %1831 = vmatpush2.bf16.msra.mxu0 %v1107
        %1832 = vmatprep.subr.bf16.mxu0 %v1104
        %1833 = vmatpush2.bf16.msra.mxu0 %v1103
        %1834 = vmatprep.mubr.bf16.mxu0 %v461
        %1835 = vmatmul.mubr.bf16.gmra.mxu0 %v460
        %v1836 = vpop.f32.mrf.mxu0
        %v1837 = vadd.f32 %v1796, %v1836
        %v1838 = vpop.f32.mrf.mxu0
        %v1839 = vadd.f32 %v1798, %v1838
        %v1840 = vpop.f32.mrf.mxu0
        %v1841 = vpop.f32.mrf.mxu0
        %1842 = vdwg.mxu0
        %1843 = vmatprep.subr.bf16.mxu0 %v1164
        %1844 = vmatpush1.bf16.msra.mxu0 %v1163
        %1845 = vmatprep.subr.bf16.mxu0 %v1160
        %1846 = vmatpush1.bf16.msra.mxu0 %v1159
        %1847 = vmatprep.subr.bf16.mxu0 %v1156
        %1848 = vmatpush1.bf16.msra.mxu0 %v1155
        %1849 = vmatprep.subr.bf16.mxu0 %v1152
        %1850 = vmatpush1.bf16.msra.mxu0 %v1151
        %1851 = vmatprep.subr.bf16.mxu0 %v1148
        %1852 = vmatpush1.bf16.msra.mxu0 %v1147
        %1853 = vmatprep.subr.bf16.mxu0 %v1144
        %1854 = vmatpush1.bf16.msra.mxu0 %v1143
        %1855 = vmatprep.subr.bf16.mxu0 %v1140
        %1856 = vmatpush1.bf16.msra.mxu0 %v1139
        %1857 = vmatprep.subr.bf16.mxu0 %v1136
        %1858 = vmatpush1.bf16.msra.mxu0 %v1135
        %1859 = vmatprep.subr.bf16.mxu0 %v1196
        %1860 = vmatpush2.bf16.msra.mxu0 %v1195
        %1861 = vmatprep.subr.bf16.mxu0 %v1192
        %1862 = vmatpush2.bf16.msra.mxu0 %v1191
        %1863 = vmatprep.subr.bf16.mxu0 %v1188
        %1864 = vmatpush2.bf16.msra.mxu0 %v1187
        %1865 = vmatprep.subr.bf16.mxu0 %v1184
        %1866 = vmatpush2.bf16.msra.mxu0 %v1183
        %1867 = vmatprep.subr.bf16.mxu0 %v1180
        %1868 = vmatpush2.bf16.msra.mxu0 %v1179
        %1869 = vmatprep.subr.bf16.mxu0 %v1176
        %1870 = vmatpush2.bf16.msra.mxu0 %v1175
        %1871 = vmatprep.subr.bf16.mxu0 %v1172
        %1872 = vmatpush2.bf16.msra.mxu0 %v1171
        %1873 = vmatprep.subr.bf16.mxu0 %v1168
        %1874 = vmatpush2.bf16.msra.mxu0 %v1167
        %1875 = vmatprep.mubr.bf16.mxu0 %v463
        %1876 = vmatmul.mubr.bf16.gmra.mxu0 %v462
        %v1877 = vpop.f32.mrf.mxu0
        %v1878 = vadd.f32 %v1837, %v1877
        %v1879 = vpop.f32.mrf.mxu0
        %v1880 = vadd.f32 %v1839, %v1879
        %v1881 = vpop.f32.mrf.mxu0
        %v1882 = vpop.f32.mrf.mxu0
        %1883 = vdwg.mxu0
        %1884 = vmatprep.subr.bf16.mxu0 %v1228
        %1885 = vmatpush1.bf16.msra.mxu0 %v1227
        %1886 = vmatprep.subr.bf16.mxu0 %v1224
        %1887 = vmatpush1.bf16.msra.mxu0 %v1223
        %1888 = vmatprep.subr.bf16.mxu0 %v1220
        %1889 = vmatpush1.bf16.msra.mxu0 %v1219
        %1890 = vmatprep.subr.bf16.mxu0 %v1216
        %1891 = vmatpush1.bf16.msra.mxu0 %v1215
        %1892 = vmatprep.subr.bf16.mxu0 %v1212
        %1893 = vmatpush1.bf16.msra.mxu0 %v1211
        %1894 = vmatprep.subr.bf16.mxu0 %v1208
        %1895 = vmatpush1.bf16.msra.mxu0 %v1207
        %1896 = vmatprep.subr.bf16.mxu0 %v1204
        %1897 = vmatpush1.bf16.msra.mxu0 %v1203
        %1898 = vmatprep.subr.bf16.mxu0 %v1200
        %1899 = vmatpush1.bf16.msra.mxu0 %v1199
        %1900 = vmatprep.subr.bf16.mxu0 %v1260
        %1901 = vmatpush2.bf16.msra.mxu0 %v1259
        %1902 = vmatprep.subr.bf16.mxu0 %v1256
        %1903 = vmatpush2.bf16.msra.mxu0 %v1255
        %1904 = vmatprep.subr.bf16.mxu0 %v1252
        %1905 = vmatpush2.bf16.msra.mxu0 %v1251
        %1906 = vmatprep.subr.bf16.mxu0 %v1248
        %1907 = vmatpush2.bf16.msra.mxu0 %v1247
        %1908 = vmatprep.subr.bf16.mxu0 %v1244
        %1909 = vmatpush2.bf16.msra.mxu0 %v1243
        %1910 = vmatprep.subr.bf16.mxu0 %v1240
        %1911 = vmatpush2.bf16.msra.mxu0 %v1239
        %1912 = vmatprep.subr.bf16.mxu0 %v1236
        %1913 = vmatpush2.bf16.msra.mxu0 %v1235
        %1914 = vmatprep.subr.bf16.mxu0 %v1232
        %1915 = vmatpush2.bf16.msra.mxu0 %v1231
        %1916 = vmatprep.mubr.bf16.mxu0 %v465
        %1917 = vmatmul.mubr.bf16.gmra.mxu0 %v464
        %v1918 = vpop.f32.mrf.mxu0
        %v1919 = vadd.f32 %v1878, %v1918
        %v1920 = vpop.f32.mrf.mxu0
        %v1921 = vadd.f32 %v1880, %v1920
        %v1922 = vpop.f32.mrf.mxu0
        %v1923 = vpop.f32.mrf.mxu0
        %1924 = vdwg.mxu0
        %1925 = vmatprep.subr.bf16.mxu0 %v1292
        %1926 = vmatpush1.bf16.msra.mxu0 %v1291
        %1927 = vmatprep.subr.bf16.mxu0 %v1288
        %1928 = vmatpush1.bf16.msra.mxu0 %v1287
        %1929 = vmatprep.subr.bf16.mxu0 %v1284
        %1930 = vmatpush1.bf16.msra.mxu0 %v1283
        %1931 = vmatprep.subr.bf16.mxu0 %v1280
        %1932 = vmatpush1.bf16.msra.mxu0 %v1279
        %1933 = vmatprep.subr.bf16.mxu0 %v1276
        %1934 = vmatpush1.bf16.msra.mxu0 %v1275
        %1935 = vmatprep.subr.bf16.mxu0 %v1272
        %1936 = vmatpush1.bf16.msra.mxu0 %v1271
        %1937 = vmatprep.subr.bf16.mxu0 %v1268
        %1938 = vmatpush1.bf16.msra.mxu0 %v1267
        %1939 = vmatprep.subr.bf16.mxu0 %v1264
        %1940 = vmatpush1.bf16.msra.mxu0 %v1263
        %1941 = vmatprep.subr.bf16.mxu0 %v1324
        %1942 = vmatpush2.bf16.msra.mxu0 %v1323
        %1943 = vmatprep.subr.bf16.mxu0 %v1320
        %1944 = vmatpush2.bf16.msra.mxu0 %v1319
        %1945 = vmatprep.subr.bf16.mxu0 %v1316
        %1946 = vmatpush2.bf16.msra.mxu0 %v1315
        %1947 = vmatprep.subr.bf16.mxu0 %v1312
        %1948 = vmatpush2.bf16.msra.mxu0 %v1311
        %1949 = vmatprep.subr.bf16.mxu0 %v1308
        %1950 = vmatpush2.bf16.msra.mxu0 %v1307
        %1951 = vmatprep.subr.bf16.mxu0 %v1304
        %1952 = vmatpush2.bf16.msra.mxu0 %v1303
        %1953 = vmatprep.subr.bf16.mxu0 %v1300
        %1954 = vmatpush2.bf16.msra.mxu0 %v1299
        %1955 = vmatprep.subr.bf16.mxu0 %v1296
        %1956 = vmatpush2.bf16.msra.mxu0 %v1295
        %1957 = vmatprep.mubr.bf16.mxu0 %v467
        %1958 = vmatmul.mubr.bf16.gmra.mxu0 %v466
        %v1959 = vpop.f32.mrf.mxu0
        %v1960 = vadd.f32 %v1919, %v1959
        %v1961 = vpop.f32.mrf.mxu0
        %v1962 = vadd.f32 %v1921, %v1961
        %v1963 = vpop.f32.mrf.mxu0
        %v1964 = vpop.f32.mrf.mxu0
        %1965 = vdwg.mxu0
        %1966 = vmatprep.subr.bf16.mxu0 %v1356
        %1967 = vmatpush1.bf16.msra.mxu0 %v1355
        %1968 = vmatprep.subr.bf16.mxu0 %v1352
        %1969 = vmatpush1.bf16.msra.mxu0 %v1351
        %1970 = vmatprep.subr.bf16.mxu0 %v1348
        %1971 = vmatpush1.bf16.msra.mxu0 %v1347
        %1972 = vmatprep.subr.bf16.mxu0 %v1344
        %1973 = vmatpush1.bf16.msra.mxu0 %v1343
        %1974 = vmatprep.subr.bf16.mxu0 %v1340
        %1975 = vmatpush1.bf16.msra.mxu0 %v1339
        %1976 = vmatprep.subr.bf16.mxu0 %v1336
        %1977 = vmatpush1.bf16.msra.mxu0 %v1335
        %1978 = vmatprep.subr.bf16.mxu0 %v1332
        %1979 = vmatpush1.bf16.msra.mxu0 %v1331
        %1980 = vmatprep.subr.bf16.mxu0 %v1328
        %1981 = vmatpush1.bf16.msra.mxu0 %v1327
        %1982 = vmatprep.subr.bf16.mxu0 %v1388
        %1983 = vmatpush2.bf16.msra.mxu0 %v1387
        %1984 = vmatprep.subr.bf16.mxu0 %v1384
        %1985 = vmatpush2.bf16.msra.mxu0 %v1383
        %1986 = vmatprep.subr.bf16.mxu0 %v1380
        %1987 = vmatpush2.bf16.msra.mxu0 %v1379
        %1988 = vmatprep.subr.bf16.mxu0 %v1376
        %1989 = vmatpush2.bf16.msra.mxu0 %v1375
        %1990 = vmatprep.subr.bf16.mxu0 %v1372
        %1991 = vmatpush2.bf16.msra.mxu0 %v1371
        %1992 = vmatprep.subr.bf16.mxu0 %v1368
        %1993 = vmatpush2.bf16.msra.mxu0 %v1367
        %1994 = vmatprep.subr.bf16.mxu0 %v1364
        %1995 = vmatpush2.bf16.msra.mxu0 %v1363
        %1996 = vmatprep.subr.bf16.mxu0 %v1360
        %1997 = vmatpush2.bf16.msra.mxu0 %v1359
        %1998 = vmatprep.mubr.bf16.mxu0 %v469
        %1999 = vmatmul.mubr.bf16.gmra.mxu0 %v468
        %v2000 = vpop.f32.mrf.mxu0
        %v2001 = vadd.f32 %v1960, %v2000
        %v2002 = vpop.f32.mrf.mxu0
        %v2003 = vadd.f32 %v1962, %v2002
        %v2004 = vpop.f32.mrf.mxu0
        %v2005 = vpop.f32.mrf.mxu0
        %2006 = vdwg.mxu0
        %2007 = vmatprep.subr.bf16.mxu0 %v1420
        %2008 = vmatpush1.bf16.msra.mxu0 %v1419
        %2009 = vmatprep.subr.bf16.mxu0 %v1416
        %2010 = vmatpush1.bf16.msra.mxu0 %v1415
        %2011 = vmatprep.subr.bf16.mxu0 %v1412
        %2012 = vmatpush1.bf16.msra.mxu0 %v1411
        %2013 = vmatprep.subr.bf16.mxu0 %v1408
        %2014 = vmatpush1.bf16.msra.mxu0 %v1407
        %2015 = vmatprep.subr.bf16.mxu0 %v1404
        %2016 = vmatpush1.bf16.msra.mxu0 %v1403
        %2017 = vmatprep.subr.bf16.mxu0 %v1400
        %2018 = vmatpush1.bf16.msra.mxu0 %v1399
        %2019 = vmatprep.subr.bf16.mxu0 %v1396
        %2020 = vmatpush1.bf16.msra.mxu0 %v1395
        %2021 = vmatprep.subr.bf16.mxu0 %v1392
        %2022 = vmatpush1.bf16.msra.mxu0 %v1391
        %2023 = vmatprep.subr.bf16.mxu0 %v1452
        %2024 = vmatpush2.bf16.msra.mxu0 %v1451
        %2025 = vmatprep.subr.bf16.mxu0 %v1448
        %2026 = vmatpush2.bf16.msra.mxu0 %v1447
        %2027 = vmatprep.subr.bf16.mxu0 %v1444
        %2028 = vmatpush2.bf16.msra.mxu0 %v1443
        %2029 = vmatprep.subr.bf16.mxu0 %v1440
        %2030 = vmatpush2.bf16.msra.mxu0 %v1439
        %2031 = vmatprep.subr.bf16.mxu0 %v1436
        %2032 = vmatpush2.bf16.msra.mxu0 %v1435
        %2033 = vmatprep.subr.bf16.mxu0 %v1432
        %2034 = vmatpush2.bf16.msra.mxu0 %v1431
        %2035 = vmatprep.subr.bf16.mxu0 %v1428
        %2036 = vmatpush2.bf16.msra.mxu0 %v1427
        %2037 = vmatprep.subr.bf16.mxu0 %v1424
        %2038 = vmatpush2.bf16.msra.mxu0 %v1423
        %2039 = vmatprep.mubr.bf16.mxu0 %v471
        %2040 = vmatmul.mubr.bf16.gmra.mxu0 %v470
        %v2041 = vpop.f32.mrf.mxu0
        %v2042 = vadd.f32 %v2001, %v2041
        %v2043 = vpop.f32.mrf.mxu0
        %v2044 = vadd.f32 %v2003, %v2043
        %v2045 = vpop.f32.mrf.mxu0
        %v2046 = vpop.f32.mrf.mxu0
        %2047 = vdwg.mxu0
        %2048 = vmatprep.subr.bf16.mxu0 %v1484
        %2049 = vmatpush1.bf16.msra.mxu0 %v1483
        %2050 = vmatprep.subr.bf16.mxu0 %v1480
        %2051 = vmatpush1.bf16.msra.mxu0 %v1479
        %2052 = vmatprep.subr.bf16.mxu0 %v1476
        %2053 = vmatpush1.bf16.msra.mxu0 %v1475
        %2054 = vmatprep.subr.bf16.mxu0 %v1472
        %2055 = vmatpush1.bf16.msra.mxu0 %v1471
        %2056 = vmatprep.subr.bf16.mxu0 %v1468
        %2057 = vmatpush1.bf16.msra.mxu0 %v1467
        %2058 = vmatprep.subr.bf16.mxu0 %v1464
        %2059 = vmatpush1.bf16.msra.mxu0 %v1463
        %2060 = vmatprep.subr.bf16.mxu0 %v1460
        %2061 = vmatpush1.bf16.msra.mxu0 %v1459
        %2062 = vmatprep.subr.bf16.mxu0 %v1456
        %2063 = vmatpush1.bf16.msra.mxu0 %v1455
        %2064 = vmatprep.subr.bf16.mxu0 %v1516
        %2065 = vmatpush2.bf16.msra.mxu0 %v1515
        %2066 = vmatprep.subr.bf16.mxu0 %v1512
        %2067 = vmatpush2.bf16.msra.mxu0 %v1511
        %2068 = vmatprep.subr.bf16.mxu0 %v1508
        %2069 = vmatpush2.bf16.msra.mxu0 %v1507
        %2070 = vmatprep.subr.bf16.mxu0 %v1504
        %2071 = vmatpush2.bf16.msra.mxu0 %v1503
        %2072 = vmatprep.subr.bf16.mxu0 %v1500
        %2073 = vmatpush2.bf16.msra.mxu0 %v1499
        %2074 = vmatprep.subr.bf16.mxu0 %v1496
        %2075 = vmatpush2.bf16.msra.mxu0 %v1495
        %2076 = vmatprep.subr.bf16.mxu0 %v1492
        %2077 = vmatpush2.bf16.msra.mxu0 %v1491
        %2078 = vmatprep.subr.bf16.mxu0 %v1488
        %2079 = vmatpush2.bf16.msra.mxu0 %v1487
        %2080 = vmatprep.mubr.bf16.mxu0 %v473
        %2081 = vmatmul.mubr.bf16.gmra.mxu0 %v472
        %v2082 = vpop.f32.mrf.mxu0
        %v2083 = vadd.f32 %v2042, %v2082
        %v2084 = vpop.f32.mrf.mxu0
        %v2085 = vadd.f32 %v2044, %v2084
        %v2086 = vpop.f32.mrf.mxu0
        %v2087 = vpop.f32.mrf.mxu0
        %2088 = vdwg.mxu0
        %2089 = vmatprep.subr.bf16.mxu0 %v1548
        %2090 = vmatpush1.bf16.msra.mxu0 %v1547
        %2091 = vmatprep.subr.bf16.mxu0 %v1544
        %2092 = vmatpush1.bf16.msra.mxu0 %v1543
        %2093 = vmatprep.subr.bf16.mxu0 %v1540
        %2094 = vmatpush1.bf16.msra.mxu0 %v1539
        %2095 = vmatprep.subr.bf16.mxu0 %v1536
        %2096 = vmatpush1.bf16.msra.mxu0 %v1535
        %2097 = vmatprep.subr.bf16.mxu0 %v1532
        %2098 = vmatpush1.bf16.msra.mxu0 %v1531
        %2099 = vmatprep.subr.bf16.mxu0 %v1528
        %2100 = vmatpush1.bf16.msra.mxu0 %v1527
        %2101 = vmatprep.subr.bf16.mxu0 %v1524
        %2102 = vmatpush1.bf16.msra.mxu0 %v1523
        %2103 = vmatprep.subr.bf16.mxu0 %v1520
        %2104 = vmatpush1.bf16.msra.mxu0 %v1519
        %2105 = vmatprep.subr.bf16.mxu0 %v1580
        %2106 = vmatpush2.bf16.msra.mxu0 %v1579
        %2107 = vmatprep.subr.bf16.mxu0 %v1576
        %2108 = vmatpush2.bf16.msra.mxu0 %v1575
        %2109 = vmatprep.subr.bf16.mxu0 %v1572
        %2110 = vmatpush2.bf16.msra.mxu0 %v1571
        %2111 = vmatprep.subr.bf16.mxu0 %v1568
        %2112 = vmatpush2.bf16.msra.mxu0 %v1567
        %2113 = vmatprep.subr.bf16.mxu0 %v1564
        %2114 = vmatpush2.bf16.msra.mxu0 %v1563
        %2115 = vmatprep.subr.bf16.mxu0 %v1560
        %2116 = vmatpush2.bf16.msra.mxu0 %v1559
        %2117 = vmatprep.subr.bf16.mxu0 %v1556
        %2118 = vmatpush2.bf16.msra.mxu0 %v1555
        %2119 = vmatprep.subr.bf16.mxu0 %v1552
        %2120 = vmatpush2.bf16.msra.mxu0 %v1551
        %2121 = vmatprep.mubr.bf16.mxu0 %v475
        %2122 = vmatmul.mubr.bf16.gmra.mxu0 %v474
        %v2123 = vpop.f32.mrf.mxu0
        %v2124 = vadd.f32 %v2083, %v2123
        %v2125 = vpop.f32.mrf.mxu0
        %v2126 = vadd.f32 %v2085, %v2125
        %v2127 = vpop.f32.mrf.mxu0
        %v2128 = vpop.f32.mrf.mxu0
        %2129 = vdwg.mxu0
        %2130 = vmatprep.subr.bf16.mxu0 %v1612
        %2131 = vmatpush1.bf16.msra.mxu0 %v1611
        %2132 = vmatprep.subr.bf16.mxu0 %v1608
        %2133 = vmatpush1.bf16.msra.mxu0 %v1607
        %2134 = vmatprep.subr.bf16.mxu0 %v1604
        %2135 = vmatpush1.bf16.msra.mxu0 %v1603
        %2136 = vmatprep.subr.bf16.mxu0 %v1600
        %2137 = vmatpush1.bf16.msra.mxu0 %v1599
        %2138 = vmatprep.subr.bf16.mxu0 %v1596
        %2139 = vmatpush1.bf16.msra.mxu0 %v1595
        %2140 = vmatprep.subr.bf16.mxu0 %v1592
        %2141 = vmatpush1.bf16.msra.mxu0 %v1591
        %2142 = vmatprep.subr.bf16.mxu0 %v1588
        %2143 = vmatpush1.bf16.msra.mxu0 %v1587
        %2144 = vmatprep.subr.bf16.mxu0 %v1584
        %2145 = vmatpush1.bf16.msra.mxu0 %v1583
        %2146 = vmatprep.subr.bf16.mxu0 %v1644
        %2147 = vmatpush2.bf16.msra.mxu0 %v1643
        %2148 = vmatprep.subr.bf16.mxu0 %v1640
        %2149 = vmatpush2.bf16.msra.mxu0 %v1639
        %2150 = vmatprep.subr.bf16.mxu0 %v1636
        %2151 = vmatpush2.bf16.msra.mxu0 %v1635
        %2152 = vmatprep.subr.bf16.mxu0 %v1632
        %2153 = vmatpush2.bf16.msra.mxu0 %v1631
        %2154 = vmatprep.subr.bf16.mxu0 %v1628
        %2155 = vmatpush2.bf16.msra.mxu0 %v1627
        %2156 = vmatprep.subr.bf16.mxu0 %v1624
        %2157 = vmatpush2.bf16.msra.mxu0 %v1623
        %2158 = vmatprep.subr.bf16.mxu0 %v1620
        %2159 = vmatpush2.bf16.msra.mxu0 %v1619
        %2160 = vmatprep.subr.bf16.mxu0 %v1616
        %2161 = vmatpush2.bf16.msra.mxu0 %v1615
        %2162 = vmatprep.mubr.bf16.mxu0 %v477
        %2163 = vmatmul.mubr.bf16.gmra.mxu0 %v476
        %v2164 = vpop.f32.mrf.mxu0
        %v2165 = vadd.f32 %v2124, %v2164
        %v2166 = vpop.f32.mrf.mxu0
        %v2167 = vadd.f32 %v2126, %v2166
        %v2168 = vpop.f32.mrf.mxu0
        %v2169 = vpop.f32.mrf.mxu0
        %2170 = vdwg.mxu0
        %2171 = vmatprep.subr.bf16.mxu0 %v1676
        %2172 = vmatpush1.bf16.msra.mxu0 %v1675
        %2173 = vmatprep.subr.bf16.mxu0 %v1672
        %2174 = vmatpush1.bf16.msra.mxu0 %v1671
        %2175 = vmatprep.subr.bf16.mxu0 %v1668
        %2176 = vmatpush1.bf16.msra.mxu0 %v1667
        %2177 = vmatprep.subr.bf16.mxu0 %v1664
        %2178 = vmatpush1.bf16.msra.mxu0 %v1663
        %2179 = vmatprep.subr.bf16.mxu0 %v1660
        %2180 = vmatpush1.bf16.msra.mxu0 %v1659
        %2181 = vmatprep.subr.bf16.mxu0 %v1656
        %2182 = vmatpush1.bf16.msra.mxu0 %v1655
        %2183 = vmatprep.subr.bf16.mxu0 %v1652
        %2184 = vmatpush1.bf16.msra.mxu0 %v1651
        %2185 = vmatprep.subr.bf16.mxu0 %v1648
        %2186 = vmatpush1.bf16.msra.mxu0 %v1647
        %2187 = vmatprep.subr.bf16.mxu0 0
        %2188 = vmatpush2.bf16.msra.mxu0 0
        %2189 = vmatprep.subr.bf16.mxu0 0
        %2190 = vmatpush2.bf16.msra.mxu0 0
        %2191 = vmatprep.subr.bf16.mxu0 0
        %2192 = vmatpush2.bf16.msra.mxu0 0
        %2193 = vmatprep.subr.bf16.mxu0 0
        %2194 = vmatpush2.bf16.msra.mxu0 0
        %2195 = vmatprep.subr.bf16.mxu0 0
        %2196 = vmatpush2.bf16.msra.mxu0 0
        %2197 = vmatprep.subr.bf16.mxu0 0
        %2198 = vmatpush2.bf16.msra.mxu0 0
        %2199 = vmatprep.subr.bf16.mxu0 0
        %2200 = vmatpush2.bf16.msra.mxu0 0
        %2201 = vmatprep.subr.bf16.mxu0 0
        %2202 = vmatpush2.bf16.msra.mxu0 0
        %2203 = vmatprep.mubr.bf16.mxu0 0
        %2204 = vmatmul.mubr.bf16.gmra.mxu0 %v478
        %v2205 = vpop.f32.mrf.mxu0
        %v2206 = vadd.f32 %v2165, %v2205
        %v2207 = vpop.f32.mrf.mxu0
        %v2208 = vadd.f32 %v2167, %v2207
        %v2209 = vpop.f32.mrf.mxu0
        %v2210 = vpop.f32.mrf.mxu0
        %2211 = vdwg.mxu0
        %2212 = vmatprep.subr.bf16.mxu0 %v910
        %2213 = vmatpush1.bf16.msra.mxu0 %v909
        %2214 = vmatprep.subr.bf16.mxu0 %v906
        %2215 = vmatpush1.bf16.msra.mxu0 %v905
        %2216 = vmatprep.subr.bf16.mxu0 %v902
        %2217 = vmatpush1.bf16.msra.mxu0 %v901
        %2218 = vmatprep.subr.bf16.mxu0 %v898
        %2219 = vmatpush1.bf16.msra.mxu0 %v897
        %2220 = vmatprep.subr.bf16.mxu0 %v894
        %2221 = vmatpush1.bf16.msra.mxu0 %v893
        %2222 = vmatprep.subr.bf16.mxu0 %v890
        %2223 = vmatpush1.bf16.msra.mxu0 %v889
        %2224 = vmatprep.subr.bf16.mxu0 %v886
        %2225 = vmatpush1.bf16.msra.mxu0 %v885
        %2226 = vmatprep.subr.bf16.mxu0 %v882
        %2227 = vmatpush1.bf16.msra.mxu0 %v881
        %2228 = vmatprep.subr.bf16.mxu0 %v942
        %2229 = vmatpush2.bf16.msra.mxu0 %v941
        %2230 = vmatprep.subr.bf16.mxu0 %v938
        %2231 = vmatpush2.bf16.msra.mxu0 %v937
        %2232 = vmatprep.subr.bf16.mxu0 %v934
        %2233 = vmatpush2.bf16.msra.mxu0 %v933
        %2234 = vmatprep.subr.bf16.mxu0 %v930
        %2235 = vmatpush2.bf16.msra.mxu0 %v929
        %2236 = vmatprep.subr.bf16.mxu0 %v926
        %2237 = vmatpush2.bf16.msra.mxu0 %v925
        %2238 = vmatprep.subr.bf16.mxu0 %v922
        %2239 = vmatpush2.bf16.msra.mxu0 %v921
        %2240 = vmatprep.subr.bf16.mxu0 %v918
        %2241 = vmatpush2.bf16.msra.mxu0 %v917
        %2242 = vmatprep.subr.bf16.mxu0 %v914
        %2243 = vmatpush2.bf16.msra.mxu0 %v913
        %2244 = vmatprep.mubr.bf16.mxu0 %v455
        %2245 = vmatmul.mubr.bf16.gmra.mxu0 %v454
        %v2246 = vpop.f32.mrf.mxu0
        %v2247 = vadd.f32 0.0, %v2246
        %v2248 = vpop.f32.mrf.mxu0
        %v2249 = vadd.f32 0.0, %v2248
        %v2250 = vpop.f32.mrf.mxu0
        %v2251 = vpop.f32.mrf.mxu0
        %2252 = vdwg.mxu0
        %2253 = vmatprep.subr.bf16.mxu0 %v974
        %2254 = vmatpush1.bf16.msra.mxu0 %v973
        %2255 = vmatprep.subr.bf16.mxu0 %v970
        %2256 = vmatpush1.bf16.msra.mxu0 %v969
        %2257 = vmatprep.subr.bf16.mxu0 %v966
        %2258 = vmatpush1.bf16.msra.mxu0 %v965
        %2259 = vmatprep.subr.bf16.mxu0 %v962
        %2260 = vmatpush1.bf16.msra.mxu0 %v961
        %2261 = vmatprep.subr.bf16.mxu0 %v958
        %2262 = vmatpush1.bf16.msra.mxu0 %v957
        %2263 = vmatprep.subr.bf16.mxu0 %v954
        %2264 = vmatpush1.bf16.msra.mxu0 %v953
        %2265 = vmatprep.subr.bf16.mxu0 %v950
        %2266 = vmatpush1.bf16.msra.mxu0 %v949
        %2267 = vmatprep.subr.bf16.mxu0 %v946
        %2268 = vmatpush1.bf16.msra.mxu0 %v945
        %2269 = vmatprep.subr.bf16.mxu0 %v1006
        %2270 = vmatpush2.bf16.msra.mxu0 %v1005
        %2271 = vmatprep.subr.bf16.mxu0 %v1002
        %2272 = vmatpush2.bf16.msra.mxu0 %v1001
        %2273 = vmatprep.subr.bf16.mxu0 %v998
        %2274 = vmatpush2.bf16.msra.mxu0 %v997
        %2275 = vmatprep.subr.bf16.mxu0 %v994
        %2276 = vmatpush2.bf16.msra.mxu0 %v993
        %2277 = vmatprep.subr.bf16.mxu0 %v990
        %2278 = vmatpush2.bf16.msra.mxu0 %v989
        %2279 = vmatprep.subr.bf16.mxu0 %v986
        %2280 = vmatpush2.bf16.msra.mxu0 %v985
        %2281 = vmatprep.subr.bf16.mxu0 %v982
        %2282 = vmatpush2.bf16.msra.mxu0 %v981
        %2283 = vmatprep.subr.bf16.mxu0 %v978
        %2284 = vmatpush2.bf16.msra.mxu0 %v977
        %2285 = vmatprep.mubr.bf16.mxu0 %v457
        %2286 = vmatmul.mubr.bf16.gmra.mxu0 %v456
        %v2287 = vpop.f32.mrf.mxu0
        %v2288 = vadd.f32 %v2247, %v2287
        %v2289 = vpop.f32.mrf.mxu0
        %v2290 = vadd.f32 %v2249, %v2289
        %v2291 = vpop.f32.mrf.mxu0
        %v2292 = vpop.f32.mrf.mxu0
        %2293 = vdwg.mxu0
        %2294 = vmatprep.subr.bf16.mxu0 %v1038
        %2295 = vmatpush1.bf16.msra.mxu0 %v1037
        %2296 = vmatprep.subr.bf16.mxu0 %v1034
        %2297 = vmatpush1.bf16.msra.mxu0 %v1033
        %2298 = vmatprep.subr.bf16.mxu0 %v1030
        %2299 = vmatpush1.bf16.msra.mxu0 %v1029
        %2300 = vmatprep.subr.bf16.mxu0 %v1026
        %2301 = vmatpush1.bf16.msra.mxu0 %v1025
        %2302 = vmatprep.subr.bf16.mxu0 %v1022
        %2303 = vmatpush1.bf16.msra.mxu0 %v1021
        %2304 = vmatprep.subr.bf16.mxu0 %v1018
        %2305 = vmatpush1.bf16.msra.mxu0 %v1017
        %2306 = vmatprep.subr.bf16.mxu0 %v1014
        %2307 = vmatpush1.bf16.msra.mxu0 %v1013
        %2308 = vmatprep.subr.bf16.mxu0 %v1010
        %2309 = vmatpush1.bf16.msra.mxu0 %v1009
        %2310 = vmatprep.subr.bf16.mxu0 %v1070
        %2311 = vmatpush2.bf16.msra.mxu0 %v1069
        %2312 = vmatprep.subr.bf16.mxu0 %v1066
        %2313 = vmatpush2.bf16.msra.mxu0 %v1065
        %2314 = vmatprep.subr.bf16.mxu0 %v1062
        %2315 = vmatpush2.bf16.msra.mxu0 %v1061
        %2316 = vmatprep.subr.bf16.mxu0 %v1058
        %2317 = vmatpush2.bf16.msra.mxu0 %v1057
        %2318 = vmatprep.subr.bf16.mxu0 %v1054
        %2319 = vmatpush2.bf16.msra.mxu0 %v1053
        %2320 = vmatprep.subr.bf16.mxu0 %v1050
        %2321 = vmatpush2.bf16.msra.mxu0 %v1049
        %2322 = vmatprep.subr.bf16.mxu0 %v1046
        %2323 = vmatpush2.bf16.msra.mxu0 %v1045
        %2324 = vmatprep.subr.bf16.mxu0 %v1042
        %2325 = vmatpush2.bf16.msra.mxu0 %v1041
        %2326 = vmatprep.mubr.bf16.mxu0 %v459
        %2327 = vmatmul.mubr.bf16.gmra.mxu0 %v458
        %v2328 = vpop.f32.mrf.mxu0
        %v2329 = vadd.f32 %v2288, %v2328
        %v2330 = vpop.f32.mrf.mxu0
        %v2331 = vadd.f32 %v2290, %v2330
        %v2332 = vpop.f32.mrf.mxu0
        %v2333 = vpop.f32.mrf.mxu0
        %2334 = vdwg.mxu0
        %2335 = vmatprep.subr.bf16.mxu0 %v1102
        %2336 = vmatpush1.bf16.msra.mxu0 %v1101
        %2337 = vmatprep.subr.bf16.mxu0 %v1098
        %2338 = vmatpush1.bf16.msra.mxu0 %v1097
        %2339 = vmatprep.subr.bf16.mxu0 %v1094
        %2340 = vmatpush1.bf16.msra.mxu0 %v1093
        %2341 = vmatprep.subr.bf16.mxu0 %v1090
        %2342 = vmatpush1.bf16.msra.mxu0 %v1089
        %2343 = vmatprep.subr.bf16.mxu0 %v1086
        %2344 = vmatpush1.bf16.msra.mxu0 %v1085
        %2345 = vmatprep.subr.bf16.mxu0 %v1082
        %2346 = vmatpush1.bf16.msra.mxu0 %v1081
        %2347 = vmatprep.subr.bf16.mxu0 %v1078
        %2348 = vmatpush1.bf16.msra.mxu0 %v1077
        %2349 = vmatprep.subr.bf16.mxu0 %v1074
        %2350 = vmatpush1.bf16.msra.mxu0 %v1073
        %2351 = vmatprep.subr.bf16.mxu0 %v1134
        %2352 = vmatpush2.bf16.msra.mxu0 %v1133
        %2353 = vmatprep.subr.bf16.mxu0 %v1130
        %2354 = vmatpush2.bf16.msra.mxu0 %v1129
        %2355 = vmatprep.subr.bf16.mxu0 %v1126
        %2356 = vmatpush2.bf16.msra.mxu0 %v1125
        %2357 = vmatprep.subr.bf16.mxu0 %v1122
        %2358 = vmatpush2.bf16.msra.mxu0 %v1121
        %2359 = vmatprep.subr.bf16.mxu0 %v1118
        %2360 = vmatpush2.bf16.msra.mxu0 %v1117
        %2361 = vmatprep.subr.bf16.mxu0 %v1114
        %2362 = vmatpush2.bf16.msra.mxu0 %v1113
        %2363 = vmatprep.subr.bf16.mxu0 %v1110
        %2364 = vmatpush2.bf16.msra.mxu0 %v1109
        %2365 = vmatprep.subr.bf16.mxu0 %v1106
        %2366 = vmatpush2.bf16.msra.mxu0 %v1105
        %2367 = vmatprep.mubr.bf16.mxu0 %v461
        %2368 = vmatmul.mubr.bf16.gmra.mxu0 %v460
        %v2369 = vpop.f32.mrf.mxu0
        %v2370 = vadd.f32 %v2329, %v2369
        %v2371 = vpop.f32.mrf.mxu0
        %v2372 = vadd.f32 %v2331, %v2371
        %v2373 = vpop.f32.mrf.mxu0
        %v2374 = vpop.f32.mrf.mxu0
        %2375 = vdwg.mxu0
        %2376 = vmatprep.subr.bf16.mxu0 %v1166
        %2377 = vmatpush1.bf16.msra.mxu0 %v1165
        %2378 = vmatprep.subr.bf16.mxu0 %v1162
        %2379 = vmatpush1.bf16.msra.mxu0 %v1161
        %2380 = vmatprep.subr.bf16.mxu0 %v1158
        %2381 = vmatpush1.bf16.msra.mxu0 %v1157
        %2382 = vmatprep.subr.bf16.mxu0 %v1154
        %2383 = vmatpush1.bf16.msra.mxu0 %v1153
        %2384 = vmatprep.subr.bf16.mxu0 %v1150
        %2385 = vmatpush1.bf16.msra.mxu0 %v1149
        %2386 = vmatprep.subr.bf16.mxu0 %v1146
        %2387 = vmatpush1.bf16.msra.mxu0 %v1145
        %2388 = vmatprep.subr.bf16.mxu0 %v1142
        %2389 = vmatpush1.bf16.msra.mxu0 %v1141
        %2390 = vmatprep.subr.bf16.mxu0 %v1138
        %2391 = vmatpush1.bf16.msra.mxu0 %v1137
        %2392 = vmatprep.subr.bf16.mxu0 %v1198
        %2393 = vmatpush2.bf16.msra.mxu0 %v1197
        %2394 = vmatprep.subr.bf16.mxu0 %v1194
        %2395 = vmatpush2.bf16.msra.mxu0 %v1193
        %2396 = vmatprep.subr.bf16.mxu0 %v1190
        %2397 = vmatpush2.bf16.msra.mxu0 %v1189
        %2398 = vmatprep.subr.bf16.mxu0 %v1186
        %2399 = vmatpush2.bf16.msra.mxu0 %v1185
        %2400 = vmatprep.subr.bf16.mxu0 %v1182
        %2401 = vmatpush2.bf16.msra.mxu0 %v1181
        %2402 = vmatprep.subr.bf16.mxu0 %v1178
        %2403 = vmatpush2.bf16.msra.mxu0 %v1177
        %2404 = vmatprep.subr.bf16.mxu0 %v1174
        %2405 = vmatpush2.bf16.msra.mxu0 %v1173
        %2406 = vmatprep.subr.bf16.mxu0 %v1170
        %2407 = vmatpush2.bf16.msra.mxu0 %v1169
        %2408 = vmatprep.mubr.bf16.mxu0 %v463
        %2409 = vmatmul.mubr.bf16.gmra.mxu0 %v462
        %v2410 = vpop.f32.mrf.mxu0
        %v2411 = vadd.f32 %v2370, %v2410
        %v2412 = vpop.f32.mrf.mxu0
        %v2413 = vadd.f32 %v2372, %v2412
        %v2414 = vpop.f32.mrf.mxu0
        %v2415 = vpop.f32.mrf.mxu0
        %2416 = vdwg.mxu0
        %2417 = vmatprep.subr.bf16.mxu0 %v1230
        %2418 = vmatpush1.bf16.msra.mxu0 %v1229
        %2419 = vmatprep.subr.bf16.mxu0 %v1226
        %2420 = vmatpush1.bf16.msra.mxu0 %v1225
        %2421 = vmatprep.subr.bf16.mxu0 %v1222
        %2422 = vmatpush1.bf16.msra.mxu0 %v1221
        %2423 = vmatprep.subr.bf16.mxu0 %v1218
        %2424 = vmatpush1.bf16.msra.mxu0 %v1217
        %2425 = vmatprep.subr.bf16.mxu0 %v1214
        %2426 = vmatpush1.bf16.msra.mxu0 %v1213
        %2427 = vmatprep.subr.bf16.mxu0 %v1210
        %2428 = vmatpush1.bf16.msra.mxu0 %v1209
        %2429 = vmatprep.subr.bf16.mxu0 %v1206
        %2430 = vmatpush1.bf16.msra.mxu0 %v1205
        %2431 = vmatprep.subr.bf16.mxu0 %v1202
        %2432 = vmatpush1.bf16.msra.mxu0 %v1201
        %2433 = vmatprep.subr.bf16.mxu0 %v1262
        %2434 = vmatpush2.bf16.msra.mxu0 %v1261
        %2435 = vmatprep.subr.bf16.mxu0 %v1258
        %2436 = vmatpush2.bf16.msra.mxu0 %v1257
        %2437 = vmatprep.subr.bf16.mxu0 %v1254
        %2438 = vmatpush2.bf16.msra.mxu0 %v1253
        %2439 = vmatprep.subr.bf16.mxu0 %v1250
        %2440 = vmatpush2.bf16.msra.mxu0 %v1249
        %2441 = vmatprep.subr.bf16.mxu0 %v1246
        %2442 = vmatpush2.bf16.msra.mxu0 %v1245
        %2443 = vmatprep.subr.bf16.mxu0 %v1242
        %2444 = vmatpush2.bf16.msra.mxu0 %v1241
        %2445 = vmatprep.subr.bf16.mxu0 %v1238
        %2446 = vmatpush2.bf16.msra.mxu0 %v1237
        %2447 = vmatprep.subr.bf16.mxu0 %v1234
        %2448 = vmatpush2.bf16.msra.mxu0 %v1233
        %2449 = vmatprep.mubr.bf16.mxu0 %v465
        %2450 = vmatmul.mubr.bf16.gmra.mxu0 %v464
        %v2451 = vpop.f32.mrf.mxu0
        %v2452 = vadd.f32 %v2411, %v2451
        %v2453 = vpop.f32.mrf.mxu0
        %v2454 = vadd.f32 %v2413, %v2453
        %v2455 = vpop.f32.mrf.mxu0
        %v2456 = vpop.f32.mrf.mxu0
        %2457 = vdwg.mxu0
        %2458 = vmatprep.subr.bf16.mxu0 %v1294
        %2459 = vmatpush1.bf16.msra.mxu0 %v1293
        %2460 = vmatprep.subr.bf16.mxu0 %v1290
        %2461 = vmatpush1.bf16.msra.mxu0 %v1289
        %2462 = vmatprep.subr.bf16.mxu0 %v1286
        %2463 = vmatpush1.bf16.msra.mxu0 %v1285
        %2464 = vmatprep.subr.bf16.mxu0 %v1282
        %2465 = vmatpush1.bf16.msra.mxu0 %v1281
        %2466 = vmatprep.subr.bf16.mxu0 %v1278
        %2467 = vmatpush1.bf16.msra.mxu0 %v1277
        %2468 = vmatprep.subr.bf16.mxu0 %v1274
        %2469 = vmatpush1.bf16.msra.mxu0 %v1273
        %2470 = vmatprep.subr.bf16.mxu0 %v1270
        %2471 = vmatpush1.bf16.msra.mxu0 %v1269
        %2472 = vmatprep.subr.bf16.mxu0 %v1266
        %2473 = vmatpush1.bf16.msra.mxu0 %v1265
        %2474 = vmatprep.subr.bf16.mxu0 %v1326
        %2475 = vmatpush2.bf16.msra.mxu0 %v1325
        %2476 = vmatprep.subr.bf16.mxu0 %v1322
        %2477 = vmatpush2.bf16.msra.mxu0 %v1321
        %2478 = vmatprep.subr.bf16.mxu0 %v1318
        %2479 = vmatpush2.bf16.msra.mxu0 %v1317
        %2480 = vmatprep.subr.bf16.mxu0 %v1314
        %2481 = vmatpush2.bf16.msra.mxu0 %v1313
        %2482 = vmatprep.subr.bf16.mxu0 %v1310
        %2483 = vmatpush2.bf16.msra.mxu0 %v1309
        %2484 = vmatprep.subr.bf16.mxu0 %v1306
        %2485 = vmatpush2.bf16.msra.mxu0 %v1305
        %2486 = vmatprep.subr.bf16.mxu0 %v1302
        %2487 = vmatpush2.bf16.msra.mxu0 %v1301
        %2488 = vmatprep.subr.bf16.mxu0 %v1298
        %2489 = vmatpush2.bf16.msra.mxu0 %v1297
        %2490 = vmatprep.mubr.bf16.mxu0 %v467
        %2491 = vmatmul.mubr.bf16.gmra.mxu0 %v466
        %v2492 = vpop.f32.mrf.mxu0
        %v2493 = vadd.f32 %v2452, %v2492
        %v2494 = vpop.f32.mrf.mxu0
        %v2495 = vadd.f32 %v2454, %v2494
        %v2496 = vpop.f32.mrf.mxu0
        %v2497 = vpop.f32.mrf.mxu0
        %2498 = vdwg.mxu0
        %2499 = vmatprep.subr.bf16.mxu0 %v1358
        %2500 = vmatpush1.bf16.msra.mxu0 %v1357
        %2501 = vmatprep.subr.bf16.mxu0 %v1354
        %2502 = vmatpush1.bf16.msra.mxu0 %v1353
        %2503 = vmatprep.subr.bf16.mxu0 %v1350
        %2504 = vmatpush1.bf16.msra.mxu0 %v1349
        %2505 = vmatprep.subr.bf16.mxu0 %v1346
        %2506 = vmatpush1.bf16.msra.mxu0 %v1345
        %2507 = vmatprep.subr.bf16.mxu0 %v1342
        %2508 = vmatpush1.bf16.msra.mxu0 %v1341
        %2509 = vmatprep.subr.bf16.mxu0 %v1338
        %2510 = vmatpush1.bf16.msra.mxu0 %v1337
        %2511 = vmatprep.subr.bf16.mxu0 %v1334
        %2512 = vmatpush1.bf16.msra.mxu0 %v1333
        %2513 = vmatprep.subr.bf16.mxu0 %v1330
        %2514 = vmatpush1.bf16.msra.mxu0 %v1329
        %2515 = vmatprep.subr.bf16.mxu0 %v1390
        %2516 = vmatpush2.bf16.msra.mxu0 %v1389
        %2517 = vmatprep.subr.bf16.mxu0 %v1386
        %2518 = vmatpush2.bf16.msra.mxu0 %v1385
        %2519 = vmatprep.subr.bf16.mxu0 %v1382
        %2520 = vmatpush2.bf16.msra.mxu0 %v1381
        %2521 = vmatprep.subr.bf16.mxu0 %v1378
        %2522 = vmatpush2.bf16.msra.mxu0 %v1377
        %2523 = vmatprep.subr.bf16.mxu0 %v1374
        %2524 = vmatpush2.bf16.msra.mxu0 %v1373
        %2525 = vmatprep.subr.bf16.mxu0 %v1370
        %2526 = vmatpush2.bf16.msra.mxu0 %v1369
        %2527 = vmatprep.subr.bf16.mxu0 %v1366
        %2528 = vmatpush2.bf16.msra.mxu0 %v1365
        %2529 = vmatprep.subr.bf16.mxu0 %v1362
        %2530 = vmatpush2.bf16.msra.mxu0 %v1361
        %2531 = vmatprep.mubr.bf16.mxu0 %v469
        %2532 = vmatmul.mubr.bf16.gmra.mxu0 %v468
        %v2533 = vpop.f32.mrf.mxu0
        %v2534 = vadd.f32 %v2493, %v2533
        %v2535 = vpop.f32.mrf.mxu0
        %v2536 = vadd.f32 %v2495, %v2535
        %v2537 = vpop.f32.mrf.mxu0
        %v2538 = vpop.f32.mrf.mxu0
        %2539 = vdwg.mxu0
        %2540 = vmatprep.subr.bf16.mxu0 %v1422
        %2541 = vmatpush1.bf16.msra.mxu0 %v1421
        %2542 = vmatprep.subr.bf16.mxu0 %v1418
        %2543 = vmatpush1.bf16.msra.mxu0 %v1417
        %2544 = vmatprep.subr.bf16.mxu0 %v1414
        %2545 = vmatpush1.bf16.msra.mxu0 %v1413
        %2546 = vmatprep.subr.bf16.mxu0 %v1410
        %2547 = vmatpush1.bf16.msra.mxu0 %v1409
        %2548 = vmatprep.subr.bf16.mxu0 %v1406
        %2549 = vmatpush1.bf16.msra.mxu0 %v1405
        %2550 = vmatprep.subr.bf16.mxu0 %v1402
        %2551 = vmatpush1.bf16.msra.mxu0 %v1401
        %2552 = vmatprep.subr.bf16.mxu0 %v1398
        %2553 = vmatpush1.bf16.msra.mxu0 %v1397
        %2554 = vmatprep.subr.bf16.mxu0 %v1394
        %2555 = vmatpush1.bf16.msra.mxu0 %v1393
        %2556 = vmatprep.subr.bf16.mxu0 %v1454
        %2557 = vmatpush2.bf16.msra.mxu0 %v1453
        %2558 = vmatprep.subr.bf16.mxu0 %v1450
        %2559 = vmatpush2.bf16.msra.mxu0 %v1449
        %2560 = vmatprep.subr.bf16.mxu0 %v1446
        %2561 = vmatpush2.bf16.msra.mxu0 %v1445
        %2562 = vmatprep.subr.bf16.mxu0 %v1442
        %2563 = vmatpush2.bf16.msra.mxu0 %v1441
        %2564 = vmatprep.subr.bf16.mxu0 %v1438
        %2565 = vmatpush2.bf16.msra.mxu0 %v1437
        %2566 = vmatprep.subr.bf16.mxu0 %v1434
        %2567 = vmatpush2.bf16.msra.mxu0 %v1433
        %2568 = vmatprep.subr.bf16.mxu0 %v1430
        %2569 = vmatpush2.bf16.msra.mxu0 %v1429
        %2570 = vmatprep.subr.bf16.mxu0 %v1426
        %2571 = vmatpush2.bf16.msra.mxu0 %v1425
        %2572 = vmatprep.mubr.bf16.mxu0 %v471
        %2573 = vmatmul.mubr.bf16.gmra.mxu0 %v470
        %v2574 = vpop.f32.mrf.mxu0
        %v2575 = vadd.f32 %v2534, %v2574
        %v2576 = vpop.f32.mrf.mxu0
        %v2577 = vadd.f32 %v2536, %v2576
        %v2578 = vpop.f32.mrf.mxu0
        %v2579 = vpop.f32.mrf.mxu0
        %2580 = vdwg.mxu0
        %2581 = vmatprep.subr.bf16.mxu0 %v1486
        %2582 = vmatpush1.bf16.msra.mxu0 %v1485
        %2583 = vmatprep.subr.bf16.mxu0 %v1482
        %2584 = vmatpush1.bf16.msra.mxu0 %v1481
        %2585 = vmatprep.subr.bf16.mxu0 %v1478
        %2586 = vmatpush1.bf16.msra.mxu0 %v1477
        %2587 = vmatprep.subr.bf16.mxu0 %v1474
        %2588 = vmatpush1.bf16.msra.mxu0 %v1473
        %2589 = vmatprep.subr.bf16.mxu0 %v1470
        %2590 = vmatpush1.bf16.msra.mxu0 %v1469
        %2591 = vmatprep.subr.bf16.mxu0 %v1466
        %2592 = vmatpush1.bf16.msra.mxu0 %v1465
        %2593 = vmatprep.subr.bf16.mxu0 %v1462
        %2594 = vmatpush1.bf16.msra.mxu0 %v1461
        %2595 = vmatprep.subr.bf16.mxu0 %v1458
        %2596 = vmatpush1.bf16.msra.mxu0 %v1457
        %2597 = vmatprep.subr.bf16.mxu0 %v1518
        %2598 = vmatpush2.bf16.msra.mxu0 %v1517
        %2599 = vmatprep.subr.bf16.mxu0 %v1514
        %2600 = vmatpush2.bf16.msra.mxu0 %v1513
        %2601 = vmatprep.subr.bf16.mxu0 %v1510
        %2602 = vmatpush2.bf16.msra.mxu0 %v1509
        %2603 = vmatprep.subr.bf16.mxu0 %v1506
        %2604 = vmatpush2.bf16.msra.mxu0 %v1505
        %2605 = vmatprep.subr.bf16.mxu0 %v1502
        %2606 = vmatpush2.bf16.msra.mxu0 %v1501
        %2607 = vmatprep.subr.bf16.mxu0 %v1498
        %2608 = vmatpush2.bf16.msra.mxu0 %v1497
        %2609 = vmatprep.subr.bf16.mxu0 %v1494
        %2610 = vmatpush2.bf16.msra.mxu0 %v1493
        %2611 = vmatprep.subr.bf16.mxu0 %v1490
        %2612 = vmatpush2.bf16.msra.mxu0 %v1489
        %2613 = vmatprep.mubr.bf16.mxu0 %v473
        %2614 = vmatmul.mubr.bf16.gmra.mxu0 %v472
        %v2615 = vpop.f32.mrf.mxu0
        %v2616 = vadd.f32 %v2575, %v2615
        %v2617 = vpop.f32.mrf.mxu0
        %v2618 = vadd.f32 %v2577, %v2617
        %v2619 = vpop.f32.mrf.mxu0
        %v2620 = vpop.f32.mrf.mxu0
        %2621 = vdwg.mxu0
        %2622 = vmatprep.subr.bf16.mxu0 %v1550
        %2623 = vmatpush1.bf16.msra.mxu0 %v1549
        %2624 = vmatprep.subr.bf16.mxu0 %v1546
        %2625 = vmatpush1.bf16.msra.mxu0 %v1545
        %2626 = vmatprep.subr.bf16.mxu0 %v1542
        %2627 = vmatpush1.bf16.msra.mxu0 %v1541
        %2628 = vmatprep.subr.bf16.mxu0 %v1538
        %2629 = vmatpush1.bf16.msra.mxu0 %v1537
        %2630 = vmatprep.subr.bf16.mxu0 %v1534
        %2631 = vmatpush1.bf16.msra.mxu0 %v1533
        %2632 = vmatprep.subr.bf16.mxu0 %v1530
        %2633 = vmatpush1.bf16.msra.mxu0 %v1529
        %2634 = vmatprep.subr.bf16.mxu0 %v1526
        %2635 = vmatpush1.bf16.msra.mxu0 %v1525
        %2636 = vmatprep.subr.bf16.mxu0 %v1522
        %2637 = vmatpush1.bf16.msra.mxu0 %v1521
        %2638 = vmatprep.subr.bf16.mxu0 %v1582
        %2639 = vmatpush2.bf16.msra.mxu0 %v1581
        %2640 = vmatprep.subr.bf16.mxu0 %v1578
        %2641 = vmatpush2.bf16.msra.mxu0 %v1577
        %2642 = vmatprep.subr.bf16.mxu0 %v1574
        %2643 = vmatpush2.bf16.msra.mxu0 %v1573
        %2644 = vmatprep.subr.bf16.mxu0 %v1570
        %2645 = vmatpush2.bf16.msra.mxu0 %v1569
        %2646 = vmatprep.subr.bf16.mxu0 %v1566
        %2647 = vmatpush2.bf16.msra.mxu0 %v1565
        %2648 = vmatprep.subr.bf16.mxu0 %v1562
        %2649 = vmatpush2.bf16.msra.mxu0 %v1561
        %2650 = vmatprep.subr.bf16.mxu0 %v1558
        %2651 = vmatpush2.bf16.msra.mxu0 %v1557
        %2652 = vmatprep.subr.bf16.mxu0 %v1554
        %2653 = vmatpush2.bf16.msra.mxu0 %v1553
        %2654 = vmatprep.mubr.bf16.mxu0 %v475
        %2655 = vmatmul.mubr.bf16.gmra.mxu0 %v474
        %v2656 = vpop.f32.mrf.mxu0
        %v2657 = vadd.f32 %v2616, %v2656
        %v2658 = vpop.f32.mrf.mxu0
        %v2659 = vadd.f32 %v2618, %v2658
        %v2660 = vpop.f32.mrf.mxu0
        %v2661 = vpop.f32.mrf.mxu0
        %2662 = vdwg.mxu0
        %2663 = vmatprep.subr.bf16.mxu0 %v1614
        %2664 = vmatpush1.bf16.msra.mxu0 %v1613
        %2665 = vmatprep.subr.bf16.mxu0 %v1610
        %2666 = vmatpush1.bf16.msra.mxu0 %v1609
        %2667 = vmatprep.subr.bf16.mxu0 %v1606
        %2668 = vmatpush1.bf16.msra.mxu0 %v1605
        %2669 = vmatprep.subr.bf16.mxu0 %v1602
        %2670 = vmatpush1.bf16.msra.mxu0 %v1601
        %2671 = vmatprep.subr.bf16.mxu0 %v1598
        %2672 = vmatpush1.bf16.msra.mxu0 %v1597
        %2673 = vmatprep.subr.bf16.mxu0 %v1594
        %2674 = vmatpush1.bf16.msra.mxu0 %v1593
        %2675 = vmatprep.subr.bf16.mxu0 %v1590
        %2676 = vmatpush1.bf16.msra.mxu0 %v1589
        %2677 = vmatprep.subr.bf16.mxu0 %v1586
        %2678 = vmatpush1.bf16.msra.mxu0 %v1585
        %2679 = vmatprep.subr.bf16.mxu0 %v1646
        %2680 = vmatpush2.bf16.msra.mxu0 %v1645
        %2681 = vmatprep.subr.bf16.mxu0 %v1642
        %2682 = vmatpush2.bf16.msra.mxu0 %v1641
        %2683 = vmatprep.subr.bf16.mxu0 %v1638
        %2684 = vmatpush2.bf16.msra.mxu0 %v1637
        %2685 = vmatprep.subr.bf16.mxu0 %v1634
        %2686 = vmatpush2.bf16.msra.mxu0 %v1633
        %2687 = vmatprep.subr.bf16.mxu0 %v1630
        %2688 = vmatpush2.bf16.msra.mxu0 %v1629
        %2689 = vmatprep.subr.bf16.mxu0 %v1626
        %2690 = vmatpush2.bf16.msra.mxu0 %v1625
        %2691 = vmatprep.subr.bf16.mxu0 %v1622
        %2692 = vmatpush2.bf16.msra.mxu0 %v1621
        %2693 = vmatprep.subr.bf16.mxu0 %v1618
        %2694 = vmatpush2.bf16.msra.mxu0 %v1617
        %2695 = vmatprep.mubr.bf16.mxu0 %v477
        %2696 = vmatmul.mubr.bf16.gmra.mxu0 %v476
        %v2697 = vpop.f32.mrf.mxu0
        %v2698 = vadd.f32 %v2657, %v2697
        %v2699 = vpop.f32.mrf.mxu0
        %v2700 = vadd.f32 %v2659, %v2699
        %v2701 = vpop.f32.mrf.mxu0
        %v2702 = vpop.f32.mrf.mxu0
        %2703 = vdwg.mxu0
        %2704 = vmatprep.subr.bf16.mxu0 %v1678
        %2705 = vmatpush1.bf16.msra.mxu0 %v1677
        %2706 = vmatprep.subr.bf16.mxu0 %v1674
        %2707 = vmatpush1.bf16.msra.mxu0 %v1673
        %2708 = vmatprep.subr.bf16.mxu0 %v1670
        %2709 = vmatpush1.bf16.msra.mxu0 %v1669
        %2710 = vmatprep.subr.bf16.mxu0 %v1666
        %2711 = vmatpush1.bf16.msra.mxu0 %v1665
        %2712 = vmatprep.subr.bf16.mxu0 %v1662
        %2713 = vmatpush1.bf16.msra.mxu0 %v1661
        %2714 = vmatprep.subr.bf16.mxu0 %v1658
        %2715 = vmatpush1.bf16.msra.mxu0 %v1657
        %2716 = vmatprep.subr.bf16.mxu0 %v1654
        %2717 = vmatpush1.bf16.msra.mxu0 %v1653
        %2718 = vmatprep.subr.bf16.mxu0 %v1650
        %2719 = vmatpush1.bf16.msra.mxu0 %v1649
        %2720 = vmatprep.subr.bf16.mxu0 0
        %2721 = vmatpush2.bf16.msra.mxu0 0
        %2722 = vmatprep.subr.bf16.mxu0 0
        %2723 = vmatpush2.bf16.msra.mxu0 0
        %2724 = vmatprep.subr.bf16.mxu0 0
        %2725 = vmatpush2.bf16.msra.mxu0 0
        %2726 = vmatprep.subr.bf16.mxu0 0
        %2727 = vmatpush2.bf16.msra.mxu0 0
        %2728 = vmatprep.subr.bf16.mxu0 0
        %2729 = vmatpush2.bf16.msra.mxu0 0
        %2730 = vmatprep.subr.bf16.mxu0 0
        %2731 = vmatpush2.bf16.msra.mxu0 0
        %2732 = vmatprep.subr.bf16.mxu0 0
        %2733 = vmatpush2.bf16.msra.mxu0 0
        %2734 = vmatprep.subr.bf16.mxu0 0
        %2735 = vmatpush2.bf16.msra.mxu0 0
        %2736 = vmatprep.mubr.bf16.mxu0 0
        %2737 = vmatmul.mubr.bf16.gmra.mxu0 %v478
        %v2738 = vpop.f32.mrf.mxu0
        %v2739 = vadd.f32 %v2698, %v2738
        %v2740 = vpop.f32.mrf.mxu0
        %v2741 = vadd.f32 %v2700, %v2740
        %v2742 = vpop.f32.mrf.mxu0
        %v2743 = vpop.f32.mrf.mxu0
        %2744 = vdwg.mxu0
        %v2745 = vld [vmem:[%s258] sm:$0xf]
        %v2747 = vlaneseq
        %v2748 = vshrl.u32 %v2747, 7
        %v2749 = vsub.s32 0, %v2748
        %v2750 = vrot.slane %v2745, %v2749
        %v2751 = vlaneseq
        %v2752 = vshrl.u32 %v2751, 7
        %v2753 = vsub.s32 1, %v2752
        %v2754 = vrot.slane %v2745, %v2753
        %v2755 = vlaneseq
        %v2756 = vshrl.u32 %v2755, 7
        %v2757 = vsub.s32 2, %v2756
        %v2758 = vrot.slane %v2745, %v2757
        %v2759 = vlaneseq
        %v2760 = vshrl.u32 %v2759, 7
        %v2761 = vsub.s32 3, %v2760
        %v2762 = vrot.slane %v2745, %v2761
        %v2767 = vmul.f32 %v2206, %v2750
        %v2768 = vmul.f32 %v2208, %v2754
        %v2769 = vmul.f32 %v2739, %v2758
        %v2770 = vmul.f32 %v2741, %v2762
        %v2771 = vld [vmem:[%s267] sm:$0xf]
        %v2773 = vlaneseq
        %v2774 = vshrl.u32 %v2773, 7
        %v2775 = vsub.s32 0, %v2774
        %v2776 = vrot.slane %v2771, %v2775
        %v2777 = vlaneseq
        %v2778 = vshrl.u32 %v2777, 7
        %v2779 = vsub.s32 1, %v2778
        %v2780 = vrot.slane %v2771, %v2779
        %v2781 = vlaneseq
        %v2782 = vshrl.u32 %v2781, 7
        %v2783 = vsub.s32 2, %v2782
        %v2784 = vrot.slane %v2771, %v2783
        %v2785 = vlaneseq
        %v2786 = vshrl.u32 %v2785, 7
        %v2787 = vsub.s32 3, %v2786
        %v2788 = vrot.slane %v2771, %v2787
        %v2793 = vsub.f32 %v2767, %v2776
        %v2794 = vsub.f32 %v2768, %v2780
        %v2795 = vsub.f32 %v2769, %v2784
        %v2796 = vsub.f32 %v2770, %v2788
        %v2797 = vsub.f32 0.0, %v2793
        %v2798 = vsub.f32 0.0, %v2794
        %v2799 = vsub.f32 0.0, %v2795
        %v2800 = vsub.f32 0.0, %v2796
        %v2801 = vmul.f32 %v2797, 1.442695
        %v2802 = vpow.pop %v2801
        %v2803 = vmul.f32 %v2798, 1.442695
        %v2804 = vpow.pop %v2803
        %v2805 = vmul.f32 %v2799, 1.442695
        %v2806 = vpow.pop %v2805
        %v2807 = vmul.f32 %v2800, 1.442695
        %v2808 = vpow.pop %v2807
        %v2809 = vadd.f32 %v2802, 1.0
        %v2810 = vadd.f32 %v2804, 1.0
        %v2811 = vadd.f32 %v2806, 1.0
        %v2812 = vadd.f32 %v2808, 1.0
        %v2813 = vrcp.pop %v2809
        %v2814 = vrcp.pop %v2810
        %v2815 = vrcp.pop %v2811
        %v2816 = vrcp.pop %v2812
        %v2821 = vcombine.low %v2813, %v2814
        %v2822 = vcombine.low %v2815, %v2816
        %v2824 = vunpack.c.l.s4 1983009808
        %v2825 = vunpack.c.0.s8 %v2824
        %v2826 = vlaneseq
        %v2827 = vshrl.u32 %v2826, 7
        %v2828 = vsub.s32 %v2825, %v2827
        %v2829 = vrot.slane %v2821, %v2828
        %v2831 = vunpack.c.l.s4 1983009808
        %v2832 = vunpack.c.0.s8 %v2831
        %v2833 = vlaneseq
        %v2834 = vshrl.u32 %v2833, 7
        %v2835 = vsub.s32 %v2832, %v2834
        %v2836 = vrot.slane %v2822, %v2835
        %v2837 = vcombine.low %v2829, %v2836
        %2839 = vst [vmem:[%s301] sm:$0xff] %v2837
        %s2840 = sand.u32 %s132, 1
        %s2841 = scalar_lea.sflag [#allocation4], %s2840
        %s2842 = sand.u32 %s132, 1
        %s2843 = smul.addr %s2842, 8
        %s2844 = scalar_lea.vmem [#allocation10], %s2843
        // Predicated region
        $region53: #{tpu_custom_call.1} parent=35 // pred_check
          %p2845 = pneg %p142
        $region54: #{tpu_custom_call.1} parent=35 // pred_check_branch
          %2847 = sbr.rel (%p2845) target = $region56
        $region55: #{tpu_custom_call.1} parent=35 // pred_region
          %s2848 = smul.u32 4, %s25
          %s2850 = ssub.s32 128, 128
          %2851 = vsyncadd %s2841, %s2850
          %s2852 = smul.addr %s2848, 32
          %s2853 = scalar_lea.hbm %s4, %s2852
          %s2855 = sshll.u32 %s2844, 4
          %s2856 = int_to_ptr.vmem [resolvable:$true] %s2855
          %2858 = dma.vmem_to_hbm [thread:$0]  %s2856, 128, %s2853, %s2841
        $region56: #{tpu_custom_call.1} parent=35 // pred_fallthru
          _
      $region36: #{tpu_custom_call.1} parent=5 // pred_fallthru
        _
      %p2859 = scmp.le.s32.totalorder 2, %s20
      // Predicated region
      $region57: #{tpu_custom_call.1} parent=5 // pred_check
        %p2860 = pneg %p2859
      $region58: #{tpu_custom_call.1} parent=5 // pred_check_branch
        %2862 = sbr.rel (%p2860) target = $region60
      $region59: #{tpu_custom_call.1} parent=5 // pred_region
        %s2863 = ssub.s32 %s20, 2
        // Predicated region
        $region61: #{tpu_custom_call.1} parent=59 // pred_check
          %p2864 = pneg %p148
        $region62: #{tpu_custom_call.1} parent=59 // pred_check_branch
          %2866 = sbr.rel (%p2864) target = $region64
        $region63: #{tpu_custom_call.1} parent=59 // pred_region
          %s2867 = sand.u32 %s133, 1
          %s2868 = scalar_lea.sflag [#allocation4], %s2867
          %s2869 = sand.u32 %s133, 1
          %s2870 = smul.addr %s2869, 8
          %s2871 = scalar_lea.vmem [#allocation10], %s2870
          %2872 = dma.done %s2868, 128
        $region64: #{tpu_custom_call.1} parent=59 // pred_fallthru
          _
      $region60: #{tpu_custom_call.1} parent=5 // pred_fallthru
        _
    $region6: #{tpu_custom_call.1} parent=1 // loop_footer
      %s24 = sadd.s32 1, %s20
    $region7: #{tpu_custom_call.1} parent=1 // loop_footer_branch
      %19 = sbr.rel target = $region3
    $region8: #{tpu_custom_call.1} parent=1 // loop_exit
      _
    %2873 = vsyncpa [#allocation3], 1
    %s2874 = scalar_lea.sflag [#allocation3], 1
    %2875 = vsyncpa %s2874, 1
    %2876 = vsyncpa [#allocation6], 1
    %s2877 = scalar_lea.sflag [#allocation6], 1
    %2878 = vsyncpa %s2877, 1
    %2879 = vsyncpa [#allocation9], 1
    %s2880 = scalar_lea.sflag [#allocation9], 1
    %2881 = vsyncpa %s2880, 1
    %2882 = vsyncpa [#allocation4], 1
    %s2883 = scalar_lea.sflag [#allocation4], 1
    %2884 = vsyncpa %s2883, 1

</llo_original>
